<compile_context>
chip_gen: v7x
topology: tpu7x:2x2x1
jax: 0.10.0
libtpu: 0.0.40
codegen_flags: <defaults>
</compile_context>

<pallas_src>
import functools
import math

import jax
import jax.numpy as jnp
from jax.experimental import pallas as pl
from jax.experimental.pallas import tpu as pltpu


# ----------------------------------------------------------------------------
# In-kernel helpers (operate on traced VMEM values / weight refs)
# ----------------------------------------------------------------------------
def _timeblock(x, w_ref, b_ref):
    """Fused TimeBlock: relu(conv1 + sigmoid(conv2) + conv3).

    x:     (B*N, T_in*Cin)  f32 activation; row = (batch, node), lane = (t, c)
    w_ref: (3, T_in*Cin, T_out*Cout) bf16 banded temporal-conv weights
           (one band matrix per gate, stacked on the leading axis)
    b_ref: (3, 1, T_out*Cout) f32 biases (tiled over output time positions)
    returns (B*N, T_out*Cout) f32
    """
    xb = x.astype(jnp.bfloat16)
    c1 = jnp.dot(xb, w_ref[0], preferred_element_type=jnp.float32) + b_ref[0]
    c2 = jnp.dot(xb, w_ref[1], preferred_element_type=jnp.float32) + b_ref[1]
    c3 = jnp.dot(xb, w_ref[2], preferred_element_type=jnp.float32) + b_ref[2]
    # Gate combine kept in f32 (safe on v5e; bf16 combine is a v6e/v7x option).
    return jnp.maximum(c1 + jax.nn.sigmoid(c2) + c3, 0.0)


def _stgcn_block(x, a_kron, wt1_ref, bt1_ref, theta_ref, wt2_ref, bt2_ref,
                 gamma_ref, beta_ref, *, n_nodes, batch):
    """One STGCNBlock: temporal1 -> A_hat gconv + Theta -> temporal2 -> BN."""
    t1 = _timeblock(x, wt1_ref, bt1_ref)                        # (B*N, T1*C)

    # graph conv: kron(I_B, A_hat) contracts the (batch, node) row axis;
    # batch/time/channels stay folded in the lane dimension (no transposes)
    lfs = jnp.dot(a_kron, t1.astype(jnp.bfloat16),
                  preferred_element_type=jnp.float32)           # (B*N, T1*C)
    t2 = jnp.maximum(
        jnp.dot(lfs.astype(jnp.bfloat16), theta_ref[...],
                preferred_element_type=jnp.float32), 0.0)       # (B*N, T1*S)

    t3 = _timeblock(t2, wt2_ref, bt2_ref)                       # (B*N, T2*C)

    # BatchNorm2d(num_nodes): training-mode batch statistics per node over
    # (B, T2, C), biased variance, eps=1e-5.  One pass: lane-axis sum and
    # sum-of-squares per row, then a sublane fold over the batch rows of each
    # node (rows are ordered b*N + n; slice offsets are multiples of 8).
    lanes = t3.shape[1]
    s1 = jnp.sum(t3, axis=1, keepdims=True)                     # (B*N, 1)
    s2 = jnp.sum(t3 * t3, axis=1, keepdims=True)                # (B*N, 1)
    ns1 = s1[0:n_nodes]
    ns2 = s2[0:n_nodes]
    for b in range(1, batch):
        ns1 = ns1 + s1[b * n_nodes:(b + 1) * n_nodes]
        ns2 = ns2 + s2[b * n_nodes:(b + 1) * n_nodes]
    inv_cnt = 1.0 / float(batch * lanes)
    mean = ns1 * inv_cnt                                        # (N, 1)
    var = ns2 * inv_cnt - mean * mean                           # biased var
    inv_std = jax.lax.rsqrt(var + 1e-5)
    mean_full = jnp.concatenate([mean] * batch, axis=0)         # (B*N, 1)
    inv_full = jnp.concatenate([inv_std] * batch, axis=0)       # (B*N, 1)
    xhat = (t3 - mean_full) * inv_full
    return xhat * gamma_ref[...] + beta_ref[...]


def _stgcn_forward_kernel(
        n_nodes, batch,
        x_ref, a_ref,
        w1a_ref, b1a_ref, th1_ref, w1b_ref, b1b_ref, g1_ref, be1_ref,
        w2a_ref, b2a_ref, th2_ref, w2b_ref, b2b_ref, g2_ref, be2_ref,
        wl_ref, bl_ref, fw_ref, fb_ref,
        o_ref):
    a = a_ref[...]                                              # bf16, pre-kron'd
    h1 = _stgcn_block(x_ref[...], a, w1a_ref, b1a_ref, th1_ref,
                      w1b_ref, b1b_ref, g1_ref, be1_ref,
                      n_nodes=n_nodes, batch=batch)             # (B*N, 8*C)
    h2 = _stgcn_block(h1, a, w2a_ref, b2a_ref, th2_ref,
                      w2b_ref, b2b_ref, g2_ref, be2_ref,
                      n_nodes=n_nodes, batch=batch)             # (B*N, 4*C)
    out3 = _timeblock(h2, wl_ref, bl_ref)                       # (B*N, 2*C)
    # final Linear folded into the same kernel (bf16 matmul, f32 bias add)
    o_ref[...] = (jnp.dot(out3.astype(jnp.bfloat16), fw_ref[...],
                          preferred_element_type=jnp.float32) + fb_ref[...])


# ----------------------------------------------------------------------------
# Wrapper: one pallas_call for the whole forward, everything VMEM-resident
# ----------------------------------------------------------------------------
def stgcn_forward(params, X, a_hat, h):
    """X: (B, T_in, N) -> (out (B, h, N), None); mirrors STGCN.forward."""
    B, T_in, N = X.shape
    p1, p2, ph = params["block1"], params["block2"], params["head"]
    P = ph["fully_b"].shape[1]          # must be 1 for the squeeze(-1) below

    # X.permute(0,2,1).unsqueeze(-1) -> row-batched, node-major (B*N, T_in) slab
    x_wide = jnp.transpose(X, (0, 2, 1)).reshape(B * N, T_in)
    # pre-kron'd, pre-cast adjacency: (B*N, B*N) bf16 block-diagonal
    a_kron = jnp.kron(jnp.eye(B, dtype=a_hat.dtype), a_hat).astype(jnp.bfloat16)

    vmem = pl.BlockSpec(memory_space=pltpu.MemorySpace.VMEM)
    n_inputs = 20
    out_wide = pl.pallas_call(
        functools.partial(_stgcn_forward_kernel, N, B),
        out_shape=jax.ShapeDtypeStruct((B * N, P), jnp.float32),
        in_specs=[vmem] * n_inputs,
        out_specs=vmem,
    )(x_wide, a_kron,
      p1["wt1"], p1["bt1"], p1["theta_k"], p1["wt2"], p1["bt2"],
      p1["bn_gamma"], p1["bn_beta"],
      p2["wt1"], p2["bt1"], p2["theta_k"], p2["wt2"], p2["bt2"],
      p2["bn_gamma"], p2["bn_beta"],
      ph["wlt"], ph["blt"], ph["fully_w"], ph["fully_b"])

    out = out_wide.reshape(B, N)                          # squeeze(-1) -> (B, N)
    out = jnp.broadcast_to(out[:, None, :], (B, h, N))    # unsqueeze(1).expand
    return out, None


# ----------------------------------------------------------------------------
# Parameter construction: raw conv weights -> banded / kron-packed matrices
# (all batch-independent now)
# ----------------------------------------------------------------------------
def init_timeblock_raw(key, cin, cout):
    ks = jax.random.split(key, 6)

    def wb(kw, kb):
        w = jax.random.normal(kw, (3, cin, cout), jnp.float32) * 0.1
        b = jax.random.normal(kb, (cout,), jnp.float32) * 0.1
        return w, b

    return wb(ks[0], ks[1]), wb(ks[2], ks[3]), wb(ks[4], ks[5])


def band_from_conv(w, t_in):
    """(3, cin, cout) temporal taps -> dense banded (t_in*cin, (t_in-2)*cout)."""
    _, cin, cout = w.shape
    t_out = t_in - 2
    rows = jnp.arange(t_in)[:, None]
    cols = jnp.arange(t_out)[None, :]
    band = jnp.zeros((t_in, cin, t_out, cout), jnp.float32)
    for k in range(3):
        sel = (rows == cols + k).astype(jnp.float32)          # tap placement
        band = band + sel[:, None, :, None] * w[k][None, :, None, :]
    return band.reshape(t_in * cin, t_out * cout)


def pack_timeblock(tb_raw, t_in):
    """Pack a TimeBlock into a (3, T_in*Cin, T_out*Cout) bf16 weight stack."""
    (w1, b1), (w2, b2), (w3, b3) = tb_raw
    t_out = t_in - 2
    bands = jnp.stack([band_from_conv(w, t_in) for w in (w1, w2, w3)], axis=0)
    biases = jnp.stack([jnp.tile(b, t_out).reshape(1, -1)
                        for b in (b1, b2, b3)], axis=0)
    return bands.astype(jnp.bfloat16), biases.astype(jnp.float32)


def init_stgcn_block_params(key, cin, spatial, cout, num_nodes, t_in, batch):
    k1, k2, k3 = jax.random.split(key, 3)
    stdv = 1.0 / math.sqrt(spatial)
    theta = jax.random.uniform(k2, (cout, spatial), jnp.float32,
                               minval=-stdv, maxval=stdv)
    t_mid = t_in - 2
    wt1, bt1 = pack_timeblock(init_timeblock_raw(k1, cin, cout), t_in)
    wt2, bt2 = pack_timeblock(init_timeblock_raw(k3, spatial, cout), t_mid)
    theta_k = jnp.kron(jnp.eye(t_mid, dtype=jnp.float32),
                       theta).astype(jnp.bfloat16)            # (T_mid*C, T_mid*S)
    # BatchNorm affine params (PyTorch defaults gamma=1, beta=0), pre-tiled to
    # the (B*N, 1) row layout.
    gamma = jnp.tile(jnp.ones((num_nodes, 1), jnp.float32), (batch, 1))
    beta = jnp.tile(jnp.zeros((num_nodes, 1), jnp.float32), (batch, 1))
    return dict(wt1=wt1, bt1=bt1, theta_k=theta_k, wt2=wt2, bt2=bt2,
                bn_gamma=gamma, bn_beta=beta)


def init_head_params(key, hidden, t_in, p_out):
    k1, k2, k3 = jax.random.split(key, 3)
    wlt, blt = pack_timeblock(init_timeblock_raw(k1, hidden, hidden), t_in)
    f_in = (t_in - 2) * hidden
    fw = jax.random.normal(k2, (f_in, p_out), jnp.float32) * 0.1
    fb = jax.random.normal(k3, (p_out,), jnp.float32) * 0.1
    return dict(wlt=wlt, blt=blt,
                fully_w=fw.astype(jnp.bfloat16),
                fully_b=fb.reshape(1, -1).astype(jnp.float32))


def make_norm_adj(key, n):
    # stands in for normalize_adj2(orig_adj): D^{-1/2} (A + I) D^{-1/2}
    a = (jax.random.uniform(key, (n, n)) < 0.3).astype(jnp.float32)
    a = jnp.maximum(a, a.T) + jnp.eye(n, dtype=jnp.float32)
    dinv = 1.0 / jnp.sqrt(a.sum(axis=1))
    return a * dinv[:, None] * dinv[None, :]


# ----------------------------------------------------------------------------
if __name__ == "__main__":
    # small, forward-consistent sizes
    B, N, T_in = 2, 16, 12          # batch, num_nodes, num_timesteps_input
    n_hidden, spatial = 32, 16
    P = 1                           # num_timesteps_output (squeeze(-1) needs 1)
    h = 3                           # TODO(synk): self.h comes from args.horizon outside the given __init__; fixed to 3 here.

    key = jax.random.PRNGKey(0)
    kb1, kb2, kh, ka, kx = jax.random.split(key, 5)

    params = dict(
        block1=init_stgcn_block_params(kb1, 1, spatial, n_hidden, N, T_in, B),
        block2=init_stgcn_block_params(kb2, n_hidden, spatial, n_hidden, N,
                                       T_in - 4, B),
        head=init_head_params(kh, n_hidden, T_in - 8, P),
    )
    a_hat = make_norm_adj(ka, N)
    X = jax.random.normal(kx, (B, T_in, N), jnp.float32)

    fwd = jax.jit(functools.partial(stgcn_forward, h=h))
    out, _ = fwd(params, X, a_hat)
    out = jax.block_until_ready(out)
    assert out.shape == (B, h, N), out.shape
    assert bool(jnp.all(jnp.isfinite(out)))
    print("KERNEL_OK")
</pallas_src>

<mosaic_0001>
module attributes {stable_mosaic.version = 11 : i64} {
  func.func @_stgcn_forward_kernel(%arg0: memref<32x12xf32, #tpu.memory_space<vmem>>, %arg1: memref<32x32xbf16, #tpu.memory_space<vmem>>, %arg2: memref<3x12x320xbf16, #tpu.memory_space<vmem>>, %arg3: memref<3x1x320xf32, #tpu.memory_space<vmem>>, %arg4: memref<320x160xbf16, #tpu.memory_space<vmem>>, %arg5: memref<3x160x256xbf16, #tpu.memory_space<vmem>>, %arg6: memref<3x1x256xf32, #tpu.memory_space<vmem>>, %arg7: memref<32x1xf32, #tpu.memory_space<vmem>>, %arg8: memref<32x1xf32, #tpu.memory_space<vmem>>, %arg9: memref<3x256x192xbf16, #tpu.memory_space<vmem>>, %arg10: memref<3x1x192xf32, #tpu.memory_space<vmem>>, %arg11: memref<192x96xbf16, #tpu.memory_space<vmem>>, %arg12: memref<3x96x128xbf16, #tpu.memory_space<vmem>>, %arg13: memref<3x1x128xf32, #tpu.memory_space<vmem>>, %arg14: memref<32x1xf32, #tpu.memory_space<vmem>>, %arg15: memref<32x1xf32, #tpu.memory_space<vmem>>, %arg16: memref<3x128x64xbf16, #tpu.memory_space<vmem>>, %arg17: memref<3x1x64xf32, #tpu.memory_space<vmem>>, %arg18: memref<64x1xbf16, #tpu.memory_space<vmem>>, %arg19: memref<1x1xf32, #tpu.memory_space<vmem>>, %arg20: memref<32x1xf32, #tpu.memory_space<vmem>>) attributes {dimension_semantics = [], scalar_prefetch = 0 : i64, scratch_operands = 0 : i64, tpu.core_type = #tpu.core_type<tc>} {
    %c0 = arith.constant 0 : index
    %c0_0 = arith.constant 0 : index
    %0 = vector.load %arg1[%c0, %c0_0] : memref<32x32xbf16, #tpu.memory_space<vmem>>, vector<32x32xbf16>
    %c0_1 = arith.constant 0 : index
    %c0_2 = arith.constant 0 : index
    %1 = vector.load %arg0[%c0_1, %c0_2] : memref<32x12xf32, #tpu.memory_space<vmem>>, vector<32x12xf32>
    %2 = arith.truncf %1 : vector<32x12xf32> to vector<32x12xbf16>
    %c0_3 = arith.constant 0 : index
    %c0_4 = arith.constant 0 : index
    %c0_5 = arith.constant 0 : index
    %3 = vector.load %arg2[%c0_3, %c0_4, %c0_5] : memref<3x12x320xbf16, #tpu.memory_space<vmem>>, vector<1x12x320xbf16>
    %4 = vector.shape_cast %3 : vector<1x12x320xbf16> to vector<12x320xbf16>
    %cst = arith.constant dense<0.000000e+00> : vector<32x320xf32>
    %5 = tpu.matmul %2, %4, %cst {dimension_numbers = #tpu.dot_dimension_numbers<[1], [0], [0], [1], [0, 0, 1, 1], [], []>} : vector<32x12xbf16>, vector<12x320xbf16>, vector<32x320xf32> -> vector<32x320xf32>
    %c0_6 = arith.constant 0 : index
    %c0_7 = arith.constant 0 : index
    %c0_8 = arith.constant 0 : index
    %6 = vector.load %arg3[%c0_6, %c0_7, %c0_8] : memref<3x1x320xf32, #tpu.memory_space<vmem>>, vector<1x1x320xf32>
    %7 = vector.shape_cast %6 : vector<1x1x320xf32> to vector<1x320xf32>
    %8 = vector.broadcast %7 : vector<1x320xf32> to vector<32x320xf32>
    %9 = arith.addf %5, %8 : vector<32x320xf32>
    %c1 = arith.constant 1 : index
    %c0_9 = arith.constant 0 : index
    %c0_10 = arith.constant 0 : index
    %10 = vector.load %arg2[%c1, %c0_9, %c0_10] : memref<3x12x320xbf16, #tpu.memory_space<vmem>>, vector<1x12x320xbf16>
    %11 = vector.shape_cast %10 : vector<1x12x320xbf16> to vector<12x320xbf16>
    %cst_11 = arith.constant dense<0.000000e+00> : vector<32x320xf32>
    %12 = tpu.matmul %2, %11, %cst_11 {dimension_numbers = #tpu.dot_dimension_numbers<[1], [0], [0], [1], [0, 0, 1, 1], [], []>} : vector<32x12xbf16>, vector<12x320xbf16>, vector<32x320xf32> -> vector<32x320xf32>
    %c1_12 = arith.constant 1 : index
    %c0_13 = arith.constant 0 : index
    %c0_14 = arith.constant 0 : index
    %13 = vector.load %arg3[%c1_12, %c0_13, %c0_14] : memref<3x1x320xf32, #tpu.memory_space<vmem>>, vector<1x1x320xf32>
    %14 = vector.shape_cast %13 : vector<1x1x320xf32> to vector<1x320xf32>
    %15 = vector.broadcast %14 : vector<1x320xf32> to vector<32x320xf32>
    %16 = arith.addf %12, %15 : vector<32x320xf32>
    %c2 = arith.constant 2 : index
    %c0_15 = arith.constant 0 : index
    %c0_16 = arith.constant 0 : index
    %17 = vector.load %arg2[%c2, %c0_15, %c0_16] : memref<3x12x320xbf16, #tpu.memory_space<vmem>>, vector<1x12x320xbf16>
    %18 = vector.shape_cast %17 : vector<1x12x320xbf16> to vector<12x320xbf16>
    %cst_17 = arith.constant dense<0.000000e+00> : vector<32x320xf32>
    %19 = tpu.matmul %2, %18, %cst_17 {dimension_numbers = #tpu.dot_dimension_numbers<[1], [0], [0], [1], [0, 0, 1, 1], [], []>} : vector<32x12xbf16>, vector<12x320xbf16>, vector<32x320xf32> -> vector<32x320xf32>
    %c2_18 = arith.constant 2 : index
    %c0_19 = arith.constant 0 : index
    %c0_20 = arith.constant 0 : index
    %20 = vector.load %arg3[%c2_18, %c0_19, %c0_20] : memref<3x1x320xf32, #tpu.memory_space<vmem>>, vector<1x1x320xf32>
    %21 = vector.shape_cast %20 : vector<1x1x320xf32> to vector<1x320xf32>
    %22 = vector.broadcast %21 : vector<1x320xf32> to vector<32x320xf32>
    %23 = arith.addf %19, %22 : vector<32x320xf32>
    %24 = arith.negf %16 : vector<32x320xf32>
    %25 = math.exp %24 : vector<32x320xf32>
    %cst_21 = arith.constant 1.000000e+00 : f32
    %26 = vector.broadcast %cst_21 : f32 to vector<32x320xf32>
    %27 = arith.addf %26, %25 : vector<32x320xf32>
    %28 = arith.divf %26, %27 : vector<32x320xf32>
    %29 = arith.addf %9, %28 : vector<32x320xf32>
    %30 = arith.addf %29, %23 : vector<32x320xf32>
    %cst_22 = arith.constant 0.000000e+00 : f32
    %31 = vector.broadcast %cst_22 : f32 to vector<32x320xf32>
    %32 = arith.maximumf %30, %31 : vector<32x320xf32>
    %33 = arith.truncf %32 : vector<32x320xf32> to vector<32x320xbf16>
    %cst_23 = arith.constant dense<0.000000e+00> : vector<32x320xf32>
    %34 = tpu.matmul %0, %33, %cst_23 {dimension_numbers = #tpu.dot_dimension_numbers<[1], [0], [0], [1], [0, 0, 1, 1], [], []>} : vector<32x32xbf16>, vector<32x320xbf16>, vector<32x320xf32> -> vector<32x320xf32>
    %35 = arith.truncf %34 : vector<32x320xf32> to vector<32x320xbf16>
    %c0_24 = arith.constant 0 : index
    %c0_25 = arith.constant 0 : index
    %36 = vector.load %arg4[%c0_24, %c0_25] : memref<320x160xbf16, #tpu.memory_space<vmem>>, vector<320x160xbf16>
    %cst_26 = arith.constant dense<0.000000e+00> : vector<32x160xf32>
    %37 = tpu.matmul %35, %36, %cst_26 {dimension_numbers = #tpu.dot_dimension_numbers<[1], [0], [0], [1], [0, 0, 1, 1], [], []>} : vector<32x320xbf16>, vector<320x160xbf16>, vector<32x160xf32> -> vector<32x160xf32>
    %cst_27 = arith.constant 0.000000e+00 : f32
    %38 = vector.broadcast %cst_27 : f32 to vector<32x160xf32>
    %39 = arith.maximumf %37, %38 : vector<32x160xf32>
    %40 = arith.truncf %39 : vector<32x160xf32> to vector<32x160xbf16>
    %c0_28 = arith.constant 0 : index
    %c0_29 = arith.constant 0 : index
    %c0_30 = arith.constant 0 : index
    %41 = vector.load %arg5[%c0_28, %c0_29, %c0_30] : memref<3x160x256xbf16, #tpu.memory_space<vmem>>, vector<1x160x256xbf16>
    %42 = vector.shape_cast %41 : vector<1x160x256xbf16> to vector<160x256xbf16>
    %cst_31 = arith.constant dense<0.000000e+00> : vector<32x256xf32>
    %43 = tpu.matmul %40, %42, %cst_31 {dimension_numbers = #tpu.dot_dimension_numbers<[1], [0], [0], [1], [0, 0, 1, 1], [], []>} : vector<32x160xbf16>, vector<160x256xbf16>, vector<32x256xf32> -> vector<32x256xf32>
    %c0_32 = arith.constant 0 : index
    %c0_33 = arith.constant 0 : index
    %c0_34 = arith.constant 0 : index
    %44 = vector.load %arg6[%c0_32, %c0_33, %c0_34] : memref<3x1x256xf32, #tpu.memory_space<vmem>>, vector<1x1x256xf32>
    %45 = vector.shape_cast %44 : vector<1x1x256xf32> to vector<1x256xf32>
    %46 = vector.broadcast %45 : vector<1x256xf32> to vector<32x256xf32>
    %47 = arith.addf %43, %46 : vector<32x256xf32>
    %c1_35 = arith.constant 1 : index
    %c0_36 = arith.constant 0 : index
    %c0_37 = arith.constant 0 : index
    %48 = vector.load %arg5[%c1_35, %c0_36, %c0_37] : memref<3x160x256xbf16, #tpu.memory_space<vmem>>, vector<1x160x256xbf16>
    %49 = vector.shape_cast %48 : vector<1x160x256xbf16> to vector<160x256xbf16>
    %cst_38 = arith.constant dense<0.000000e+00> : vector<32x256xf32>
    %50 = tpu.matmul %40, %49, %cst_38 {dimension_numbers = #tpu.dot_dimension_numbers<[1], [0], [0], [1], [0, 0, 1, 1], [], []>} : vector<32x160xbf16>, vector<160x256xbf16>, vector<32x256xf32> -> vector<32x256xf32>
    %c1_39 = arith.constant 1 : index
    %c0_40 = arith.constant 0 : index
    %c0_41 = arith.constant 0 : index
    %51 = vector.load %arg6[%c1_39, %c0_40, %c0_41] : memref<3x1x256xf32, #tpu.memory_space<vmem>>, vector<1x1x256xf32>
    %52 = vector.shape_cast %51 : vector<1x1x256xf32> to vector<1x256xf32>
    %53 = vector.broadcast %52 : vector<1x256xf32> to vector<32x256xf32>
    %54 = arith.addf %50, %53 : vector<32x256xf32>
    %c2_42 = arith.constant 2 : index
    %c0_43 = arith.constant 0 : index
    %c0_44 = arith.constant 0 : index
    %55 = vector.load %arg5[%c2_42, %c0_43, %c0_44] : memref<3x160x256xbf16, #tpu.memory_space<vmem>>, vector<1x160x256xbf16>
    %56 = vector.shape_cast %55 : vector<1x160x256xbf16> to vector<160x256xbf16>
    %cst_45 = arith.constant dense<0.000000e+00> : vector<32x256xf32>
    %57 = tpu.matmul %40, %56, %cst_45 {dimension_numbers = #tpu.dot_dimension_numbers<[1], [0], [0], [1], [0, 0, 1, 1], [], []>} : vector<32x160xbf16>, vector<160x256xbf16>, vector<32x256xf32> -> vector<32x256xf32>
    %c2_46 = arith.constant 2 : index
    %c0_47 = arith.constant 0 : index
    %c0_48 = arith.constant 0 : index
    %58 = vector.load %arg6[%c2_46, %c0_47, %c0_48] : memref<3x1x256xf32, #tpu.memory_space<vmem>>, vector<1x1x256xf32>
    %59 = vector.shape_cast %58 : vector<1x1x256xf32> to vector<1x256xf32>
    %60 = vector.broadcast %59 : vector<1x256xf32> to vector<32x256xf32>
    %61 = arith.addf %57, %60 : vector<32x256xf32>
    %62 = arith.negf %54 : vector<32x256xf32>
    %63 = math.exp %62 : vector<32x256xf32>
    %cst_49 = arith.constant 1.000000e+00 : f32
    %64 = vector.broadcast %cst_49 : f32 to vector<32x256xf32>
    %65 = arith.addf %64, %63 : vector<32x256xf32>
    %66 = arith.divf %64, %65 : vector<32x256xf32>
    %67 = arith.addf %47, %66 : vector<32x256xf32>
    %68 = arith.addf %67, %61 : vector<32x256xf32>
    %cst_50 = arith.constant 0.000000e+00 : f32
    %69 = vector.broadcast %cst_50 : f32 to vector<32x256xf32>
    %70 = arith.maximumf %68, %69 : vector<32x256xf32>
    %cst_51 = arith.constant dense<0.000000e+00> : vector<32xf32>
    %71 = vector.multi_reduction <add>, %70, %cst_51 [1] : vector<32x256xf32> to vector<32xf32>
    %72 = vector.shape_cast %71 : vector<32xf32> to vector<32x1xf32>
    %73 = arith.mulf %70, %70 : vector<32x256xf32>
    %cst_52 = arith.constant dense<0.000000e+00> : vector<32xf32>
    %74 = vector.multi_reduction <add>, %73, %cst_52 [1] : vector<32x256xf32> to vector<32xf32>
    %75 = vector.shape_cast %74 : vector<32xf32> to vector<32x1xf32>
    %76 = vector.extract_strided_slice %72 {offsets = [0, 0], sizes = [16, 1], strides = [1, 1]} : vector<32x1xf32> to vector<16x1xf32>
    %77 = vector.extract_strided_slice %75 {offsets = [0, 0], sizes = [16, 1], strides = [1, 1]} : vector<32x1xf32> to vector<16x1xf32>
    %78 = vector.extract_strided_slice %72 {offsets = [16, 0], sizes = [16, 1], strides = [1, 1]} : vector<32x1xf32> to vector<16x1xf32>
    %79 = arith.addf %76, %78 : vector<16x1xf32>
    %80 = vector.extract_strided_slice %75 {offsets = [16, 0], sizes = [16, 1], strides = [1, 1]} : vector<32x1xf32> to vector<16x1xf32>
    %81 = arith.addf %77, %80 : vector<16x1xf32>
    %cst_53 = arith.constant 0.001953125 : f32
    %82 = vector.broadcast %cst_53 : f32 to vector<16x1xf32>
    %83 = arith.mulf %79, %82 : vector<16x1xf32>
    %cst_54 = arith.constant 0.001953125 : f32
    %84 = vector.broadcast %cst_54 : f32 to vector<16x1xf32>
    %85 = arith.mulf %81, %84 : vector<16x1xf32>
    %86 = arith.mulf %83, %83 : vector<16x1xf32>
    %87 = arith.subf %85, %86 : vector<16x1xf32>
    %cst_55 = arith.constant 9.99999974E-6 : f32
    %88 = vector.broadcast %cst_55 : f32 to vector<16x1xf32>
    %89 = arith.addf %87, %88 : vector<16x1xf32>
    %90 = math.rsqrt %89 : vector<16x1xf32>
    %91 = tpu.concatenate %83, %83 in 0 : vector<16x1xf32>, vector<16x1xf32> -> vector<32x1xf32>
    %92 = tpu.concatenate %90, %90 in 0 : vector<16x1xf32>, vector<16x1xf32> -> vector<32x1xf32>
    %93 = vector.broadcast %91 : vector<32x1xf32> to vector<32x256xf32>
    %94 = arith.subf %70, %93 : vector<32x256xf32>
    %95 = vector.broadcast %92 : vector<32x1xf32> to vector<32x256xf32>
    %96 = arith.mulf %94, %95 : vector<32x256xf32>
    %c0_56 = arith.constant 0 : index
    %c0_57 = arith.constant 0 : index
    %97 = vector.load %arg7[%c0_56, %c0_57] : memref<32x1xf32, #tpu.memory_space<vmem>>, vector<32x1xf32>
    %98 = vector.broadcast %97 : vector<32x1xf32> to vector<32x256xf32>
    %99 = arith.mulf %96, %98 : vector<32x256xf32>
    %c0_58 = arith.constant 0 : index
    %c0_59 = arith.constant 0 : index
    %100 = vector.load %arg8[%c0_58, %c0_59] : memref<32x1xf32, #tpu.memory_space<vmem>>, vector<32x1xf32>
    %101 = vector.broadcast %100 : vector<32x1xf32> to vector<32x256xf32>
    %102 = arith.addf %99, %101 : vector<32x256xf32>
    %103 = arith.truncf %102 : vector<32x256xf32> to vector<32x256xbf16>
    %c0_60 = arith.constant 0 : index
    %c0_61 = arith.constant 0 : index
    %c0_62 = arith.constant 0 : index
    %104 = vector.load %arg9[%c0_60, %c0_61, %c0_62] : memref<3x256x192xbf16, #tpu.memory_space<vmem>>, vector<1x256x192xbf16>
    %105 = vector.shape_cast %104 : vector<1x256x192xbf16> to vector<256x192xbf16>
    %cst_63 = arith.constant dense<0.000000e+00> : vector<32x192xf32>
    %106 = tpu.matmul %103, %105, %cst_63 {dimension_numbers = #tpu.dot_dimension_numbers<[1], [0], [0], [1], [0, 0, 1, 1], [], []>} : vector<32x256xbf16>, vector<256x192xbf16>, vector<32x192xf32> -> vector<32x192xf32>
    %c0_64 = arith.constant 0 : index
    %c0_65 = arith.constant 0 : index
    %c0_66 = arith.constant 0 : index
    %107 = vector.load %arg10[%c0_64, %c0_65, %c0_66] : memref<3x1x192xf32, #tpu.memory_space<vmem>>, vector<1x1x192xf32>
    %108 = vector.shape_cast %107 : vector<1x1x192xf32> to vector<1x192xf32>
    %109 = vector.broadcast %108 : vector<1x192xf32> to vector<32x192xf32>
    %110 = arith.addf %106, %109 : vector<32x192xf32>
    %c1_67 = arith.constant 1 : index
    %c0_68 = arith.constant 0 : index
    %c0_69 = arith.constant 0 : index
    %111 = vector.load %arg9[%c1_67, %c0_68, %c0_69] : memref<3x256x192xbf16, #tpu.memory_space<vmem>>, vector<1x256x192xbf16>
    %112 = vector.shape_cast %111 : vector<1x256x192xbf16> to vector<256x192xbf16>
    %cst_70 = arith.constant dense<0.000000e+00> : vector<32x192xf32>
    %113 = tpu.matmul %103, %112, %cst_70 {dimension_numbers = #tpu.dot_dimension_numbers<[1], [0], [0], [1], [0, 0, 1, 1], [], []>} : vector<32x256xbf16>, vector<256x192xbf16>, vector<32x192xf32> -> vector<32x192xf32>
    %c1_71 = arith.constant 1 : index
    %c0_72 = arith.constant 0 : index
    %c0_73 = arith.constant 0 : index
    %114 = vector.load %arg10[%c1_71, %c0_72, %c0_73] : memref<3x1x192xf32, #tpu.memory_space<vmem>>, vector<1x1x192xf32>
    %115 = vector.shape_cast %114 : vector<1x1x192xf32> to vector<1x192xf32>
    %116 = vector.broadcast %115 : vector<1x192xf32> to vector<32x192xf32>
    %117 = arith.addf %113, %116 : vector<32x192xf32>
    %c2_74 = arith.constant 2 : index
    %c0_75 = arith.constant 0 : index
    %c0_76 = arith.constant 0 : index
    %118 = vector.load %arg9[%c2_74, %c0_75, %c0_76] : memref<3x256x192xbf16, #tpu.memory_space<vmem>>, vector<1x256x192xbf16>
    %119 = vector.shape_cast %118 : vector<1x256x192xbf16> to vector<256x192xbf16>
    %cst_77 = arith.constant dense<0.000000e+00> : vector<32x192xf32>
    %120 = tpu.matmul %103, %119, %cst_77 {dimension_numbers = #tpu.dot_dimension_numbers<[1], [0], [0], [1], [0, 0, 1, 1], [], []>} : vector<32x256xbf16>, vector<256x192xbf16>, vector<32x192xf32> -> vector<32x192xf32>
    %c2_78 = arith.constant 2 : index
    %c0_79 = arith.constant 0 : index
    %c0_80 = arith.constant 0 : index
    %121 = vector.load %arg10[%c2_78, %c0_79, %c0_80] : memref<3x1x192xf32, #tpu.memory_space<vmem>>, vector<1x1x192xf32>
    %122 = vector.shape_cast %121 : vector<1x1x192xf32> to vector<1x192xf32>
    %123 = vector.broadcast %122 : vector<1x192xf32> to vector<32x192xf32>
    %124 = arith.addf %120, %123 : vector<32x192xf32>
    %125 = arith.negf %117 : vector<32x192xf32>
    %126 = math.exp %125 : vector<32x192xf32>
    %cst_81 = arith.constant 1.000000e+00 : f32
    %127 = vector.broadcast %cst_81 : f32 to vector<32x192xf32>
    %128 = arith.addf %127, %126 : vector<32x192xf32>
    %129 = arith.divf %127, %128 : vector<32x192xf32>
    %130 = arith.addf %110, %129 : vector<32x192xf32>
    %131 = arith.addf %130, %124 : vector<32x192xf32>
    %cst_82 = arith.constant 0.000000e+00 : f32
    %132 = vector.broadcast %cst_82 : f32 to vector<32x192xf32>
    %133 = arith.maximumf %131, %132 : vector<32x192xf32>
    %134 = arith.truncf %133 : vector<32x192xf32> to vector<32x192xbf16>
    %cst_83 = arith.constant dense<0.000000e+00> : vector<32x192xf32>
    %135 = tpu.matmul %0, %134, %cst_83 {dimension_numbers = #tpu.dot_dimension_numbers<[1], [0], [0], [1], [0, 0, 1, 1], [], []>} : vector<32x32xbf16>, vector<32x192xbf16>, vector<32x192xf32> -> vector<32x192xf32>
    %136 = arith.truncf %135 : vector<32x192xf32> to vector<32x192xbf16>
    %c0_84 = arith.constant 0 : index
    %c0_85 = arith.constant 0 : index
    %137 = vector.load %arg11[%c0_84, %c0_85] : memref<192x96xbf16, #tpu.memory_space<vmem>>, vector<192x96xbf16>
    %cst_86 = arith.constant dense<0.000000e+00> : vector<32x96xf32>
    %138 = tpu.matmul %136, %137, %cst_86 {dimension_numbers = #tpu.dot_dimension_numbers<[1], [0], [0], [1], [0, 0, 1, 1], [], []>} : vector<32x192xbf16>, vector<192x96xbf16>, vector<32x96xf32> -> vector<32x96xf32>
    %cst_87 = arith.constant 0.000000e+00 : f32
    %139 = vector.broadcast %cst_87 : f32 to vector<32x96xf32>
    %140 = arith.maximumf %138, %139 : vector<32x96xf32>
    %141 = arith.truncf %140 : vector<32x96xf32> to vector<32x96xbf16>
    %c0_88 = arith.constant 0 : index
    %c0_89 = arith.constant 0 : index
    %c0_90 = arith.constant 0 : index
    %142 = vector.load %arg12[%c0_88, %c0_89, %c0_90] : memref<3x96x128xbf16, #tpu.memory_space<vmem>>, vector<1x96x128xbf16>
    %143 = vector.shape_cast %142 : vector<1x96x128xbf16> to vector<96x128xbf16>
    %cst_91 = arith.constant dense<0.000000e+00> : vector<32x128xf32>
    %144 = tpu.matmul %141, %143, %cst_91 {dimension_numbers = #tpu.dot_dimension_numbers<[1], [0], [0], [1], [0, 0, 1, 1], [], []>} : vector<32x96xbf16>, vector<96x128xbf16>, vector<32x128xf32> -> vector<32x128xf32>
    %c0_92 = arith.constant 0 : index
    %c0_93 = arith.constant 0 : index
    %c0_94 = arith.constant 0 : index
    %145 = vector.load %arg13[%c0_92, %c0_93, %c0_94] : memref<3x1x128xf32, #tpu.memory_space<vmem>>, vector<1x1x128xf32>
    %146 = vector.shape_cast %145 : vector<1x1x128xf32> to vector<1x128xf32>
    %147 = vector.broadcast %146 : vector<1x128xf32> to vector<32x128xf32>
    %148 = arith.addf %144, %147 : vector<32x128xf32>
    %c1_95 = arith.constant 1 : index
    %c0_96 = arith.constant 0 : index
    %c0_97 = arith.constant 0 : index
    %149 = vector.load %arg12[%c1_95, %c0_96, %c0_97] : memref<3x96x128xbf16, #tpu.memory_space<vmem>>, vector<1x96x128xbf16>
    %150 = vector.shape_cast %149 : vector<1x96x128xbf16> to vector<96x128xbf16>
    %cst_98 = arith.constant dense<0.000000e+00> : vector<32x128xf32>
    %151 = tpu.matmul %141, %150, %cst_98 {dimension_numbers = #tpu.dot_dimension_numbers<[1], [0], [0], [1], [0, 0, 1, 1], [], []>} : vector<32x96xbf16>, vector<96x128xbf16>, vector<32x128xf32> -> vector<32x128xf32>
    %c1_99 = arith.constant 1 : index
    %c0_100 = arith.constant 0 : index
    %c0_101 = arith.constant 0 : index
    %152 = vector.load %arg13[%c1_99, %c0_100, %c0_101] : memref<3x1x128xf32, #tpu.memory_space<vmem>>, vector<1x1x128xf32>
    %153 = vector.shape_cast %152 : vector<1x1x128xf32> to vector<1x128xf32>
    %154 = vector.broadcast %153 : vector<1x128xf32> to vector<32x128xf32>
    %155 = arith.addf %151, %154 : vector<32x128xf32>
    %c2_102 = arith.constant 2 : index
    %c0_103 = arith.constant 0 : index
    %c0_104 = arith.constant 0 : index
    %156 = vector.load %arg12[%c2_102, %c0_103, %c0_104] : memref<3x96x128xbf16, #tpu.memory_space<vmem>>, vector<1x96x128xbf16>
    %157 = vector.shape_cast %156 : vector<1x96x128xbf16> to vector<96x128xbf16>
    %cst_105 = arith.constant dense<0.000000e+00> : vector<32x128xf32>
    %158 = tpu.matmul %141, %157, %cst_105 {dimension_numbers = #tpu.dot_dimension_numbers<[1], [0], [0], [1], [0, 0, 1, 1], [], []>} : vector<32x96xbf16>, vector<96x128xbf16>, vector<32x128xf32> -> vector<32x128xf32>
    %c2_106 = arith.constant 2 : index
    %c0_107 = arith.constant 0 : index
    %c0_108 = arith.constant 0 : index
    %159 = vector.load %arg13[%c2_106, %c0_107, %c0_108] : memref<3x1x128xf32, #tpu.memory_space<vmem>>, vector<1x1x128xf32>
    %160 = vector.shape_cast %159 : vector<1x1x128xf32> to vector<1x128xf32>
    %161 = vector.broadcast %160 : vector<1x128xf32> to vector<32x128xf32>
    %162 = arith.addf %158, %161 : vector<32x128xf32>
    %163 = arith.negf %155 : vector<32x128xf32>
    %164 = math.exp %163 : vector<32x128xf32>
    %cst_109 = arith.constant 1.000000e+00 : f32
    %165 = vector.broadcast %cst_109 : f32 to vector<32x128xf32>
    %166 = arith.addf %165, %164 : vector<32x128xf32>
    %167 = arith.divf %165, %166 : vector<32x128xf32>
    %168 = arith.addf %148, %167 : vector<32x128xf32>
    %169 = arith.addf %168, %162 : vector<32x128xf32>
    %cst_110 = arith.constant 0.000000e+00 : f32
    %170 = vector.broadcast %cst_110 : f32 to vector<32x128xf32>
    %171 = arith.maximumf %169, %170 : vector<32x128xf32>
    %cst_111 = arith.constant dense<0.000000e+00> : vector<32xf32>
    %172 = vector.multi_reduction <add>, %171, %cst_111 [1] : vector<32x128xf32> to vector<32xf32>
    %173 = vector.shape_cast %172 : vector<32xf32> to vector<32x1xf32>
    %174 = arith.mulf %171, %171 : vector<32x128xf32>
    %cst_112 = arith.constant dense<0.000000e+00> : vector<32xf32>
    %175 = vector.multi_reduction <add>, %174, %cst_112 [1] : vector<32x128xf32> to vector<32xf32>
    %176 = vector.shape_cast %175 : vector<32xf32> to vector<32x1xf32>
    %177 = vector.extract_strided_slice %173 {offsets = [0, 0], sizes = [16, 1], strides = [1, 1]} : vector<32x1xf32> to vector<16x1xf32>
    %178 = vector.extract_strided_slice %176 {offsets = [0, 0], sizes = [16, 1], strides = [1, 1]} : vector<32x1xf32> to vector<16x1xf32>
    %179 = vector.extract_strided_slice %173 {offsets = [16, 0], sizes = [16, 1], strides = [1, 1]} : vector<32x1xf32> to vector<16x1xf32>
    %180 = arith.addf %177, %179 : vector<16x1xf32>
    %181 = vector.extract_strided_slice %176 {offsets = [16, 0], sizes = [16, 1], strides = [1, 1]} : vector<32x1xf32> to vector<16x1xf32>
    %182 = arith.addf %178, %181 : vector<16x1xf32>
    %cst_113 = arith.constant 3.906250e-03 : f32
    %183 = vector.broadcast %cst_113 : f32 to vector<16x1xf32>
    %184 = arith.mulf %180, %183 : vector<16x1xf32>
    %cst_114 = arith.constant 3.906250e-03 : f32
    %185 = vector.broadcast %cst_114 : f32 to vector<16x1xf32>
    %186 = arith.mulf %182, %185 : vector<16x1xf32>
    %187 = arith.mulf %184, %184 : vector<16x1xf32>
    %188 = arith.subf %186, %187 : vector<16x1xf32>
    %cst_115 = arith.constant 9.99999974E-6 : f32
    %189 = vector.broadcast %cst_115 : f32 to vector<16x1xf32>
    %190 = arith.addf %188, %189 : vector<16x1xf32>
    %191 = math.rsqrt %190 : vector<16x1xf32>
    %192 = tpu.concatenate %184, %184 in 0 : vector<16x1xf32>, vector<16x1xf32> -> vector<32x1xf32>
    %193 = tpu.concatenate %191, %191 in 0 : vector<16x1xf32>, vector<16x1xf32> -> vector<32x1xf32>
    %194 = vector.broadcast %192 : vector<32x1xf32> to vector<32x128xf32>
    %195 = arith.subf %171, %194 : vector<32x128xf32>
    %196 = vector.broadcast %193 : vector<32x1xf32> to vector<32x128xf32>
    %197 = arith.mulf %195, %196 : vector<32x128xf32>
    %c0_116 = arith.constant 0 : index
    %c0_117 = arith.constant 0 : index
    %198 = vector.load %arg14[%c0_116, %c0_117] : memref<32x1xf32, #tpu.memory_space<vmem>>, vector<32x1xf32>
    %199 = vector.broadcast %198 : vector<32x1xf32> to vector<32x128xf32>
    %200 = arith.mulf %197, %199 : vector<32x128xf32>
    %c0_118 = arith.constant 0 : index
    %c0_119 = arith.constant 0 : index
    %201 = vector.load %arg15[%c0_118, %c0_119] : memref<32x1xf32, #tpu.memory_space<vmem>>, vector<32x1xf32>
    %202 = vector.broadcast %201 : vector<32x1xf32> to vector<32x128xf32>
    %203 = arith.addf %200, %202 : vector<32x128xf32>
    %204 = arith.truncf %203 : vector<32x128xf32> to vector<32x128xbf16>
    %c0_120 = arith.constant 0 : index
    %c0_121 = arith.constant 0 : index
    %c0_122 = arith.constant 0 : index
    %205 = vector.load %arg16[%c0_120, %c0_121, %c0_122] : memref<3x128x64xbf16, #tpu.memory_space<vmem>>, vector<1x128x64xbf16>
    %206 = vector.shape_cast %205 : vector<1x128x64xbf16> to vector<128x64xbf16>
    %cst_123 = arith.constant dense<0.000000e+00> : vector<32x64xf32>
    %207 = tpu.matmul %204, %206, %cst_123 {dimension_numbers = #tpu.dot_dimension_numbers<[1], [0], [0], [1], [0, 0, 1, 1], [], []>} : vector<32x128xbf16>, vector<128x64xbf16>, vector<32x64xf32> -> vector<32x64xf32>
    %c0_124 = arith.constant 0 : index
    %c0_125 = arith.constant 0 : index
    %c0_126 = arith.constant 0 : index
    %208 = vector.load %arg17[%c0_124, %c0_125, %c0_126] : memref<3x1x64xf32, #tpu.memory_space<vmem>>, vector<1x1x64xf32>
    %209 = vector.shape_cast %208 : vector<1x1x64xf32> to vector<1x64xf32>
    %210 = vector.broadcast %209 : vector<1x64xf32> to vector<32x64xf32>
    %211 = arith.addf %207, %210 : vector<32x64xf32>
    %c1_127 = arith.constant 1 : index
    %c0_128 = arith.constant 0 : index
    %c0_129 = arith.constant 0 : index
    %212 = vector.load %arg16[%c1_127, %c0_128, %c0_129] : memref<3x128x64xbf16, #tpu.memory_space<vmem>>, vector<1x128x64xbf16>
    %213 = vector.shape_cast %212 : vector<1x128x64xbf16> to vector<128x64xbf16>
    %cst_130 = arith.constant dense<0.000000e+00> : vector<32x64xf32>
    %214 = tpu.matmul %204, %213, %cst_130 {dimension_numbers = #tpu.dot_dimension_numbers<[1], [0], [0], [1], [0, 0, 1, 1], [], []>} : vector<32x128xbf16>, vector<128x64xbf16>, vector<32x64xf32> -> vector<32x64xf32>
    %c1_131 = arith.constant 1 : index
    %c0_132 = arith.constant 0 : index
    %c0_133 = arith.constant 0 : index
    %215 = vector.load %arg17[%c1_131, %c0_132, %c0_133] : memref<3x1x64xf32, #tpu.memory_space<vmem>>, vector<1x1x64xf32>
    %216 = vector.shape_cast %215 : vector<1x1x64xf32> to vector<1x64xf32>
    %217 = vector.broadcast %216 : vector<1x64xf32> to vector<32x64xf32>
    %218 = arith.addf %214, %217 : vector<32x64xf32>
    %c2_134 = arith.constant 2 : index
    %c0_135 = arith.constant 0 : index
    %c0_136 = arith.constant 0 : index
    %219 = vector.load %arg16[%c2_134, %c0_135, %c0_136] : memref<3x128x64xbf16, #tpu.memory_space<vmem>>, vector<1x128x64xbf16>
    %220 = vector.shape_cast %219 : vector<1x128x64xbf16> to vector<128x64xbf16>
    %cst_137 = arith.constant dense<0.000000e+00> : vector<32x64xf32>
    %221 = tpu.matmul %204, %220, %cst_137 {dimension_numbers = #tpu.dot_dimension_numbers<[1], [0], [0], [1], [0, 0, 1, 1], [], []>} : vector<32x128xbf16>, vector<128x64xbf16>, vector<32x64xf32> -> vector<32x64xf32>
    %c2_138 = arith.constant 2 : index
    %c0_139 = arith.constant 0 : index
    %c0_140 = arith.constant 0 : index
    %222 = vector.load %arg17[%c2_138, %c0_139, %c0_140] : memref<3x1x64xf32, #tpu.memory_space<vmem>>, vector<1x1x64xf32>
    %223 = vector.shape_cast %222 : vector<1x1x64xf32> to vector<1x64xf32>
    %224 = vector.broadcast %223 : vector<1x64xf32> to vector<32x64xf32>
    %225 = arith.addf %221, %224 : vector<32x64xf32>
    %226 = arith.negf %218 : vector<32x64xf32>
    %227 = math.exp %226 : vector<32x64xf32>
    %cst_141 = arith.constant 1.000000e+00 : f32
    %228 = vector.broadcast %cst_141 : f32 to vector<32x64xf32>
    %229 = arith.addf %228, %227 : vector<32x64xf32>
    %230 = arith.divf %228, %229 : vector<32x64xf32>
    %231 = arith.addf %211, %230 : vector<32x64xf32>
    %232 = arith.addf %231, %225 : vector<32x64xf32>
    %cst_142 = arith.constant 0.000000e+00 : f32
    %233 = vector.broadcast %cst_142 : f32 to vector<32x64xf32>
    %234 = arith.maximumf %232, %233 : vector<32x64xf32>
    %235 = arith.truncf %234 : vector<32x64xf32> to vector<32x64xbf16>
    %c0_143 = arith.constant 0 : index
    %c0_144 = arith.constant 0 : index
    %236 = vector.load %arg18[%c0_143, %c0_144] : memref<64x1xbf16, #tpu.memory_space<vmem>>, vector<64x1xbf16>
    %cst_145 = arith.constant dense<0.000000e+00> : vector<32x1xf32>
    %237 = tpu.matmul %235, %236, %cst_145 {dimension_numbers = #tpu.dot_dimension_numbers<[1], [0], [0], [1], [0, 0, 1, 1], [], []>} : vector<32x64xbf16>, vector<64x1xbf16>, vector<32x1xf32> -> vector<32x1xf32>
    %c0_146 = arith.constant 0 : index
    %c0_147 = arith.constant 0 : index
    %238 = vector.load %arg19[%c0_146, %c0_147] : memref<1x1xf32, #tpu.memory_space<vmem>>, vector<1x1xf32>
    %239 = vector.broadcast %238 : vector<1x1xf32> to vector<32x1xf32>
    %240 = arith.addf %237, %239 : vector<32x1xf32>
    %c0_148 = arith.constant 0 : index
    %c0_149 = arith.constant 0 : index
    %241 = vector.load %arg20[%c0_148, %c0_149] : memref<32x1xf32, #tpu.memory_space<vmem>>, vector<32x1xf32>
    tpu.vector_store %arg20[%c0_148, %c0_149], %240 {strides = array<i32>} : memref<32x1xf32, #tpu.memory_space<vmem>>, vector<32x1xf32>,
    return
  }
}

</mosaic_0001>

<llo_original>
// kernel: stgcn_forward.1
$region0: #{stgcn_forward.1}
  #allocation0 [shape = 'u32[]', space=smem, size = 0x4, offset = 0x4, fixed_abs, tag = 'smem constant byte address 0x4 - core index']
  #allocation1 [shape = 'u32[144,128]{1,0:T(1,128)}', space=vmem, size = 0x12000, scoped, tag = 'internal scratch']
  #allocation2 [shape = 'f32[1,1]{1,0:T(1,128)S(1)}', space=vmem, size = 0x200, scoped, tag = 'scoped memory for stgcn_forward.1']
  %s0 = inlined_call_operand.vmem [shape: f32[32,12], index: 0, kind: input, shape index: {}]
  %s1 = inlined_call_operand.vmem [shape: bf16[32,32], index: 1, kind: input, shape index: {}]
  %s2 = inlined_call_operand.vmem [shape: bf16[3,12,320], index: 2, kind: input, shape index: {}]
  %s3 = inlined_call_operand.vmem [shape: f32[3,1,320], index: 3, kind: input, shape index: {}]
  %s4 = inlined_call_operand.vmem [shape: bf16[320,160], index: 4, kind: input, shape index: {}]
  %s5 = inlined_call_operand.vmem [shape: bf16[3,160,256], index: 5, kind: input, shape index: {}]
  %s6 = inlined_call_operand.vmem [shape: f32[3,1,256], index: 6, kind: input, shape index: {}]
  %s7 = inlined_call_operand.vmem [shape: f32[32,1], index: 7, kind: input, shape index: {}]
  %s8 = inlined_call_operand.vmem [shape: f32[32,1], index: 8, kind: input, shape index: {}]
  %s9 = inlined_call_operand.vmem [shape: bf16[3,256,192], index: 9, kind: input, shape index: {}]
  %s10 = inlined_call_operand.vmem [shape: f32[3,1,192], index: 10, kind: input, shape index: {}]
  %s11 = inlined_call_operand.vmem [shape: bf16[192,96], index: 11, kind: input, shape index: {}]
  %s12 = inlined_call_operand.vmem [shape: bf16[3,96,128], index: 12, kind: input, shape index: {}]
  %s13 = inlined_call_operand.vmem [shape: f32[3,1,128], index: 13, kind: input, shape index: {}]
  %s14 = inlined_call_operand.vmem [shape: f32[32,1], index: 14, kind: input, shape index: {}]
  %s15 = inlined_call_operand.vmem [shape: f32[32,1], index: 15, kind: input, shape index: {}]
  %s16 = inlined_call_operand.vmem [shape: bf16[3,128,64], index: 16, kind: input, shape index: {}]
  %s17 = inlined_call_operand.vmem [shape: f32[3,1,64], index: 17, kind: input, shape index: {}]
  %s18 = inlined_call_operand.vmem [shape: bf16[64,1], index: 18, kind: input, shape index: {}]
  %s19 = inlined_call_operand.<no memory space> [shape: f32[1,1], index: 19, kind: input, shape index: {}]
  %s20 = inlined_call_operand.vmem [shape: f32[32,1], index: 20, kind: output, shape index: {}]
  %s21 = sld [smem:[#allocation0]]
  $region90: #{stgcn_forward.1} parent=0
    _
  %s23 = ssub.s32 1, %s21
  %s24 = scalar_select 0, %s23, %s21
  %v25 = vstv %s19
  %26 = vst [vmem:[#allocation2] sm:$0x1] %v25
  // Predicated region
  $region2: #{stgcn_forward.1} parent=0 // pred_check
    _
  $region3: #{stgcn_forward.1} parent=0 // pred_check_branch
    %28 = sbr.rel (0) target = $region5
  $region4: #{stgcn_forward.1} parent=0 // pred_region
    _
  $region5: #{stgcn_forward.1} parent=0 // pred_fallthru
    _
  // Predicated region
  $region6: #{stgcn_forward.1} parent=0 // pred_check
    _
  $region7: #{stgcn_forward.1} parent=0 // pred_check_branch
    %30 = sbr.rel (0) target = $region9
  $region8: #{stgcn_forward.1} parent=0 // pred_region
    _
  $region9: #{stgcn_forward.1} parent=0 // pred_fallthru
    _
  // Predicated region
  $region10: #{stgcn_forward.1} parent=0 // pred_check
    _
  $region11: #{stgcn_forward.1} parent=0 // pred_check_branch
    %32 = sbr.rel (0) target = $region13
  $region12: #{stgcn_forward.1} parent=0 // pred_region
    _
  $region13: #{stgcn_forward.1} parent=0 // pred_fallthru
    _
  // Predicated region
  $region14: #{stgcn_forward.1} parent=0 // pred_check
    _
  $region15: #{stgcn_forward.1} parent=0 // pred_check_branch
    %34 = sbr.rel (0) target = $region17
  $region16: #{stgcn_forward.1} parent=0 // pred_region
    _
  $region17: #{stgcn_forward.1} parent=0 // pred_fallthru
    _
  // Predicated region
  $region18: #{stgcn_forward.1} parent=0 // pred_check
    _
  $region19: #{stgcn_forward.1} parent=0 // pred_check_branch
    %36 = sbr.rel (0) target = $region21
  $region20: #{stgcn_forward.1} parent=0 // pred_region
    _
  $region21: #{stgcn_forward.1} parent=0 // pred_fallthru
    _
  // Predicated region
  $region22: #{stgcn_forward.1} parent=0 // pred_check
    _
  $region23: #{stgcn_forward.1} parent=0 // pred_check_branch
    %38 = sbr.rel (0) target = $region25
  $region24: #{stgcn_forward.1} parent=0 // pred_region
    _
  $region25: #{stgcn_forward.1} parent=0 // pred_fallthru
    _
  // Predicated region
  $region26: #{stgcn_forward.1} parent=0 // pred_check
    _
  $region27: #{stgcn_forward.1} parent=0 // pred_check_branch
    %40 = sbr.rel (0) target = $region29
  $region28: #{stgcn_forward.1} parent=0 // pred_region
    _
  $region29: #{stgcn_forward.1} parent=0 // pred_fallthru
    _
  // Predicated region
  $region30: #{stgcn_forward.1} parent=0 // pred_check
    _
  $region31: #{stgcn_forward.1} parent=0 // pred_check_branch
    %42 = sbr.rel (0) target = $region33
  $region32: #{stgcn_forward.1} parent=0 // pred_region
    _
  $region33: #{stgcn_forward.1} parent=0 // pred_fallthru
    _
  // Predicated region
  $region34: #{stgcn_forward.1} parent=0 // pred_check
    _
  $region35: #{stgcn_forward.1} parent=0 // pred_check_branch
    %44 = sbr.rel (0) target = $region37
  $region36: #{stgcn_forward.1} parent=0 // pred_region
    _
  $region37: #{stgcn_forward.1} parent=0 // pred_fallthru
    _
  // Predicated region
  $region38: #{stgcn_forward.1} parent=0 // pred_check
    _
  $region39: #{stgcn_forward.1} parent=0 // pred_check_branch
    %46 = sbr.rel (0) target = $region41
  $region40: #{stgcn_forward.1} parent=0 // pred_region
    _
  $region41: #{stgcn_forward.1} parent=0 // pred_fallthru
    _
  // Predicated region
  $region42: #{stgcn_forward.1} parent=0 // pred_check
    _
  $region43: #{stgcn_forward.1} parent=0 // pred_check_branch
    %48 = sbr.rel (0) target = $region45
  $region44: #{stgcn_forward.1} parent=0 // pred_region
    _
  $region45: #{stgcn_forward.1} parent=0 // pred_fallthru
    _
  // Predicated region
  $region46: #{stgcn_forward.1} parent=0 // pred_check
    _
  $region47: #{stgcn_forward.1} parent=0 // pred_check_branch
    %50 = sbr.rel (0) target = $region49
  $region48: #{stgcn_forward.1} parent=0 // pred_region
    _
  $region49: #{stgcn_forward.1} parent=0 // pred_fallthru
    _
  // Predicated region
  $region50: #{stgcn_forward.1} parent=0 // pred_check
    _
  $region51: #{stgcn_forward.1} parent=0 // pred_check_branch
    %52 = sbr.rel (0) target = $region53
  $region52: #{stgcn_forward.1} parent=0 // pred_region
    _
  $region53: #{stgcn_forward.1} parent=0 // pred_fallthru
    _
  // Predicated region
  $region54: #{stgcn_forward.1} parent=0 // pred_check
    _
  $region55: #{stgcn_forward.1} parent=0 // pred_check_branch
    %54 = sbr.rel (0) target = $region57
  $region56: #{stgcn_forward.1} parent=0 // pred_region
    _
  $region57: #{stgcn_forward.1} parent=0 // pred_fallthru
    _
  // Predicated region
  $region58: #{stgcn_forward.1} parent=0 // pred_check
    _
  $region59: #{stgcn_forward.1} parent=0 // pred_check_branch
    %56 = sbr.rel (0) target = $region61
  $region60: #{stgcn_forward.1} parent=0 // pred_region
    _
  $region61: #{stgcn_forward.1} parent=0 // pred_fallthru
    _
  // Predicated region
  $region62: #{stgcn_forward.1} parent=0 // pred_check
    _
  $region63: #{stgcn_forward.1} parent=0 // pred_check_branch
    %58 = sbr.rel (0) target = $region65
  $region64: #{stgcn_forward.1} parent=0 // pred_region
    _
  $region65: #{stgcn_forward.1} parent=0 // pred_fallthru
    _
  // Predicated region
  $region66: #{stgcn_forward.1} parent=0 // pred_check
    _
  $region67: #{stgcn_forward.1} parent=0 // pred_check_branch
    %60 = sbr.rel (0) target = $region69
  $region68: #{stgcn_forward.1} parent=0 // pred_region
    _
  $region69: #{stgcn_forward.1} parent=0 // pred_fallthru
    _
  // Predicated region
  $region70: #{stgcn_forward.1} parent=0 // pred_check
    _
  $region71: #{stgcn_forward.1} parent=0 // pred_check_branch
    %62 = sbr.rel (0) target = $region73
  $region72: #{stgcn_forward.1} parent=0 // pred_region
    _
  $region73: #{stgcn_forward.1} parent=0 // pred_fallthru
    _
  // Predicated region
  $region74: #{stgcn_forward.1} parent=0 // pred_check
    _
  $region75: #{stgcn_forward.1} parent=0 // pred_check_branch
    %64 = sbr.rel (0) target = $region77
  $region76: #{stgcn_forward.1} parent=0 // pred_region
    _
  $region77: #{stgcn_forward.1} parent=0 // pred_fallthru
    _
  // Predicated region
  $region78: #{stgcn_forward.1} parent=0 // pred_check
    _
  $region79: #{stgcn_forward.1} parent=0 // pred_check_branch
    %66 = sbr.rel (0) target = $region81
  $region80: #{stgcn_forward.1} parent=0 // pred_region
    _
  $region81: #{stgcn_forward.1} parent=0 // pred_fallthru
    _
  %v68 = vld [vmem:[%s1] sm:$0xf]
  %v69 = vld [vmem:[%s1 + $0x4] sm:$0xf]
  %v70 = vld [vmem:[%s1 + $0x8] sm:$0xf]
  %v71 = vld [vmem:[%s1 + $0xc] sm:$0xf]
  %v72 = vld [vmem:[%s0] sm:$0xff]
  %v73 = vld [vmem:[%s0 + $0x8] sm:$0xff]
  %v74 = vld [vmem:[%s0 + $0x10] sm:$0xff]
  %v75 = vld [vmem:[%s0 + $0x18] sm:$0xff]
  %v76 = vpack.c.bf16 %v73, %v72
  %v77 = vpack.c.bf16 %v75, %v74
  %v78 = vld [vmem:[%s2] sm:$0xff]
  %v79 = vld [vmem:[%s2 + $0x8] sm:$0xf]
  %v80 = vld [vmem:[%s2 + $0xc] sm:$0x33]
  %v81 = vld [vmem:[%s2 + $0x14] sm:$0x3]
  %v82 = vld [vmem:[%s3] sm:$0x7]
  %v84 = vlaneseq
  %v85 = vshrl.u32 %v84, 7
  %v86 = vsub.s32 0, %v85
  %v87 = vrot.slane %v82, %v86
  %v88 = vlaneseq
  %v89 = vshrl.u32 %v88, 7
  %v90 = vsub.s32 1, %v89
  %v91 = vrot.slane %v82, %v90
  %v92 = vlaneseq
  %v93 = vshrl.u32 %v92, 7
  %v94 = vsub.s32 2, %v93
  %v95 = vrot.slane %v82, %v94
  %v103 = vunpack.c.l.b16 %v78
  %v104 = vunpack.c.h.b16 %v78
  %v105 = vunpack.c.l.b16 %v79
  %v106 = vunpack.c.l.b16 %v80
  %v107 = vunpack.c.h.b16 %v80
  %v108 = vunpack.c.l.b16 %v81
  %v109 = vpack.c.b16 %v106, %v103
  %v110 = vpack.c.b16 %v107, %v104
  %v111 = vpack.c.b16 %v108, %v105
  %vm112 = vcmask 97280
  %v114 = vsel %vm112, %v76, 0
  %v117 = vsel %vm112, %v77, 0
  %vm119 = vcmask 1045504
  %v121 = vsel %vm119, %v109, 0
  %v124 = vsel %vm119, %v110, 0
  %v127 = vsel %vm119, %v111, 0
  %129 = vmatprep.subr.bf16.mxu0 %v124
  %130 = vmatpush1.bf16.msra.mxu0 %v121
  %131 = vmatprep.subr.bf16.mxu0 0
  %132 = vmatpush1.bf16.msra.mxu0 0
  %133 = vmatprep.subr.bf16.mxu0 0
  %134 = vmatpush1.bf16.msra.mxu0 0
  %135 = vmatprep.subr.bf16.mxu0 0
  %136 = vmatpush1.bf16.msra.mxu0 0
  %137 = vmatprep.subr.bf16.mxu0 0
  %138 = vmatpush1.bf16.msra.mxu0 0
  %139 = vmatprep.subr.bf16.mxu0 0
  %140 = vmatpush1.bf16.msra.mxu0 0
  %141 = vmatprep.subr.bf16.mxu0 0
  %142 = vmatpush1.bf16.msra.mxu0 0
  %143 = vmatprep.subr.bf16.mxu0 0
  %144 = vmatpush1.bf16.msra.mxu0 0
  %145 = vmatprep.subr.bf16.mxu0 0
  %146 = vmatpush1.bf16.msra.mxu0 0
  %147 = vmatprep.subr.bf16.mxu0 0
  %148 = vmatpush1.bf16.msra.mxu0 0
  %149 = vmatprep.subr.bf16.mxu0 0
  %150 = vmatpush1.bf16.msra.mxu0 0
  %151 = vmatprep.subr.bf16.mxu0 0
  %152 = vmatpush1.bf16.msra.mxu0 0
  %153 = vmatprep.subr.bf16.mxu0 0
  %154 = vmatpush1.bf16.msra.mxu0 0
  %155 = vmatprep.subr.bf16.mxu0 0
  %156 = vmatpush1.bf16.msra.mxu0 0
  %157 = vmatprep.subr.bf16.mxu0 0
  %158 = vmatpush1.bf16.msra.mxu0 0
  %159 = vmatprep.subr.bf16.mxu0 0
  %160 = vmatpush1.bf16.msra.mxu0 0
  %161 = vmatprep.mubr.bf16.mxu0 0
  %162 = vmatmul.mubr.bf16.gmra.mrb[0].mxu0 %v114
  %v163 = vpop.f32.mrb[0].mxu0
  %v164 = vadd.f32 %v87, %v163
  %v165 = vpop.f32.mrb[0].mxu0
  %v166 = vadd.f32 %v91, %v165
  %v167 = vpop.f32.mrb[0].mxu0
  %v168 = vadd.f32 %v87, %v167
  %v169 = vpop.f32.mrb[0].mxu0
  %v170 = vadd.f32 %v91, %v169
  %171 = vmatprep.mubr.bf16.mxu0 0
  %172 = vmatmul.mubr.bf16.gmra.mrb[0].mxu0 %v117
  %v173 = vpop.f32.mrb[0].mxu0
  %v174 = vadd.f32 %v87, %v173
  %v175 = vpop.f32.mrb[0].mxu0
  %v176 = vadd.f32 %v91, %v175
  %v177 = vpop.f32.mrb[0].mxu0
  %v178 = vadd.f32 %v87, %v177
  %v179 = vpop.f32.mrb[0].mxu0
  %v180 = vadd.f32 %v91, %v179
  %181 = vdwg.mxu0
  %182 = vmatprep.subr.bf16.mxu0 0
  %183 = vmatpush1.bf16.msra.mxu0 %v127
  %184 = vmatprep.subr.bf16.mxu0 0
  %185 = vmatpush1.bf16.msra.mxu0 0
  %186 = vmatprep.subr.bf16.mxu0 0
  %187 = vmatpush1.bf16.msra.mxu0 0
  %188 = vmatprep.subr.bf16.mxu0 0
  %189 = vmatpush1.bf16.msra.mxu0 0
  %190 = vmatprep.subr.bf16.mxu0 0
  %191 = vmatpush1.bf16.msra.mxu0 0
  %192 = vmatprep.subr.bf16.mxu0 0
  %193 = vmatpush1.bf16.msra.mxu0 0
  %194 = vmatprep.subr.bf16.mxu0 0
  %195 = vmatpush1.bf16.msra.mxu0 0
  %196 = vmatprep.subr.bf16.mxu0 0
  %197 = vmatpush1.bf16.msra.mxu0 0
  %198 = vmatprep.subr.bf16.mxu0 0
  %199 = vmatpush1.bf16.msra.mxu0 0
  %200 = vmatprep.subr.bf16.mxu0 0
  %201 = vmatpush1.bf16.msra.mxu0 0
  %202 = vmatprep.subr.bf16.mxu0 0
  %203 = vmatpush1.bf16.msra.mxu0 0
  %204 = vmatprep.subr.bf16.mxu0 0
  %205 = vmatpush1.bf16.msra.mxu0 0
  %206 = vmatprep.subr.bf16.mxu0 0
  %207 = vmatpush1.bf16.msra.mxu0 0
  %208 = vmatprep.subr.bf16.mxu0 0
  %209 = vmatpush1.bf16.msra.mxu0 0
  %210 = vmatprep.subr.bf16.mxu0 0
  %211 = vmatpush1.bf16.msra.mxu0 0
  %212 = vmatprep.subr.bf16.mxu0 0
  %213 = vmatpush1.bf16.msra.mxu0 0
  %214 = vmatprep.mubr.bf16.mxu0 0
  %215 = vmatmul.mubr.bf16.gmra.mrb[0].mxu0 %v114
  %v216 = vpop.f32.mrb[0].mxu0
  %v217 = vadd.f32 %v95, %v216
  %v218 = vpop.f32.mrb[0].mxu0
  %v219 = vpop.f32.mrb[0].mxu0
  %v220 = vadd.f32 %v95, %v219
  %v221 = vpop.f32.mrb[0].mxu0
  %222 = vmatprep.mubr.bf16.mxu0 0
  %223 = vmatmul.mubr.bf16.gmra.mrb[0].mxu0 %v117
  %v224 = vpop.f32.mrb[0].mxu0
  %v225 = vadd.f32 %v95, %v224
  %v226 = vpop.f32.mrb[0].mxu0
  %v227 = vpop.f32.mrb[0].mxu0
  %v228 = vadd.f32 %v95, %v227
  %v229 = vpop.f32.mrb[0].mxu0
  %230 = vdwg.mxu0
  %s231 = scalar_lea.vmem %s2, 24
  %v232 = vld [vmem:[%s231] sm:$0xff]
  %v233 = vld [vmem:[%s231 + $0x8] sm:$0xf]
  %v234 = vld [vmem:[%s231 + $0xc] sm:$0x33]
  %v235 = vld [vmem:[%s231 + $0x14] sm:$0x3]
  %s236 = scalar_lea.vmem %s3, 3
  %v237 = vld [vmem:[%s236] sm:$0x7]
  %v239 = vlaneseq
  %v240 = vshrl.u32 %v239, 7
  %v241 = vsub.s32 0, %v240
  %v242 = vrot.slane %v237, %v241
  %v243 = vlaneseq
  %v244 = vshrl.u32 %v243, 7
  %v245 = vsub.s32 1, %v244
  %v246 = vrot.slane %v237, %v245
  %v247 = vlaneseq
  %v248 = vshrl.u32 %v247, 7
  %v249 = vsub.s32 2, %v248
  %v250 = vrot.slane %v237, %v249
  %v258 = vunpack.c.l.b16 %v232
  %v259 = vunpack.c.h.b16 %v232
  %v260 = vunpack.c.l.b16 %v233
  %v261 = vunpack.c.l.b16 %v234
  %v262 = vunpack.c.h.b16 %v234
  %v263 = vunpack.c.l.b16 %v235
  %v264 = vpack.c.b16 %v261, %v258
  %v265 = vpack.c.b16 %v262, %v259
  %v266 = vpack.c.b16 %v263, %v260
  %v268 = vsel %vm119, %v264, 0
  %v271 = vsel %vm119, %v265, 0
  %v274 = vsel %vm119, %v266, 0
  %276 = vmatprep.subr.bf16.mxu0 %v271
  %277 = vmatpush1.bf16.msra.mxu0 %v268
  %278 = vmatprep.subr.bf16.mxu0 0
  %279 = vmatpush1.bf16.msra.mxu0 0
  %280 = vmatprep.subr.bf16.mxu0 0
  %281 = vmatpush1.bf16.msra.mxu0 0
  %282 = vmatprep.subr.bf16.mxu0 0
  %283 = vmatpush1.bf16.msra.mxu0 0
  %284 = vmatprep.subr.bf16.mxu0 0
  %285 = vmatpush1.bf16.msra.mxu0 0
  %286 = vmatprep.subr.bf16.mxu0 0
  %287 = vmatpush1.bf16.msra.mxu0 0
  %288 = vmatprep.subr.bf16.mxu0 0
  %289 = vmatpush1.bf16.msra.mxu0 0
  %290 = vmatprep.subr.bf16.mxu0 0
  %291 = vmatpush1.bf16.msra.mxu0 0
  %292 = vmatprep.subr.bf16.mxu0 0
  %293 = vmatpush1.bf16.msra.mxu0 0
  %294 = vmatprep.subr.bf16.mxu0 0
  %295 = vmatpush1.bf16.msra.mxu0 0
  %296 = vmatprep.subr.bf16.mxu0 0
  %297 = vmatpush1.bf16.msra.mxu0 0
  %298 = vmatprep.subr.bf16.mxu0 0
  %299 = vmatpush1.bf16.msra.mxu0 0
  %300 = vmatprep.subr.bf16.mxu0 0
  %301 = vmatpush1.bf16.msra.mxu0 0
  %302 = vmatprep.subr.bf16.mxu0 0
  %303 = vmatpush1.bf16.msra.mxu0 0
  %304 = vmatprep.subr.bf16.mxu0 0
  %305 = vmatpush1.bf16.msra.mxu0 0
  %306 = vmatprep.subr.bf16.mxu0 0
  %307 = vmatpush1.bf16.msra.mxu0 0
  %308 = vmatprep.mubr.bf16.mxu0 0
  %309 = vmatmul.mubr.bf16.gmra.mrb[0].mxu0 %v114
  %v310 = vpop.f32.mrb[0].mxu0
  %v311 = vadd.f32 %v242, %v310
  %v312 = vpop.f32.mrb[0].mxu0
  %v313 = vadd.f32 %v246, %v312
  %v314 = vpop.f32.mrb[0].mxu0
  %v315 = vadd.f32 %v242, %v314
  %v316 = vpop.f32.mrb[0].mxu0
  %v317 = vadd.f32 %v246, %v316
  %318 = vmatprep.mubr.bf16.mxu0 0
  %319 = vmatmul.mubr.bf16.gmra.mrb[0].mxu0 %v117
  %v320 = vpop.f32.mrb[0].mxu0
  %v321 = vadd.f32 %v242, %v320
  %v322 = vpop.f32.mrb[0].mxu0
  %v323 = vadd.f32 %v246, %v322
  %v324 = vpop.f32.mrb[0].mxu0
  %v325 = vadd.f32 %v242, %v324
  %v326 = vpop.f32.mrb[0].mxu0
  %v327 = vadd.f32 %v246, %v326
  %328 = vdwg.mxu0
  %329 = vmatprep.subr.bf16.mxu0 0
  %330 = vmatpush1.bf16.msra.mxu0 %v274
  %331 = vmatprep.subr.bf16.mxu0 0
  %332 = vmatpush1.bf16.msra.mxu0 0
  %333 = vmatprep.subr.bf16.mxu0 0
  %334 = vmatpush1.bf16.msra.mxu0 0
  %335 = vmatprep.subr.bf16.mxu0 0
  %336 = vmatpush1.bf16.msra.mxu0 0
  %337 = vmatprep.subr.bf16.mxu0 0
  %338 = vmatpush1.bf16.msra.mxu0 0
  %339 = vmatprep.subr.bf16.mxu0 0
  %340 = vmatpush1.bf16.msra.mxu0 0
  %341 = vmatprep.subr.bf16.mxu0 0
  %342 = vmatpush1.bf16.msra.mxu0 0
  %343 = vmatprep.subr.bf16.mxu0 0
  %344 = vmatpush1.bf16.msra.mxu0 0
  %345 = vmatprep.subr.bf16.mxu0 0
  %346 = vmatpush1.bf16.msra.mxu0 0
  %347 = vmatprep.subr.bf16.mxu0 0
  %348 = vmatpush1.bf16.msra.mxu0 0
  %349 = vmatprep.subr.bf16.mxu0 0
  %350 = vmatpush1.bf16.msra.mxu0 0
  %351 = vmatprep.subr.bf16.mxu0 0
  %352 = vmatpush1.bf16.msra.mxu0 0
  %353 = vmatprep.subr.bf16.mxu0 0
  %354 = vmatpush1.bf16.msra.mxu0 0
  %355 = vmatprep.subr.bf16.mxu0 0
  %356 = vmatpush1.bf16.msra.mxu0 0
  %357 = vmatprep.subr.bf16.mxu0 0
  %358 = vmatpush1.bf16.msra.mxu0 0
  %359 = vmatprep.subr.bf16.mxu0 0
  %360 = vmatpush1.bf16.msra.mxu0 0
  %361 = vmatprep.mubr.bf16.mxu0 0
  %362 = vmatmul.mubr.bf16.gmra.mrb[0].mxu0 %v114
  %v363 = vpop.f32.mrb[0].mxu0
  %v364 = vadd.f32 %v250, %v363
  %v365 = vpop.f32.mrb[0].mxu0
  %v366 = vpop.f32.mrb[0].mxu0
  %v367 = vadd.f32 %v250, %v366
  %v368 = vpop.f32.mrb[0].mxu0
  %369 = vmatprep.mubr.bf16.mxu0 0
  %370 = vmatmul.mubr.bf16.gmra.mrb[0].mxu0 %v117
  %v371 = vpop.f32.mrb[0].mxu0
  %v372 = vadd.f32 %v250, %v371
  %v373 = vpop.f32.mrb[0].mxu0
  %v374 = vpop.f32.mrb[0].mxu0
  %v375 = vadd.f32 %v250, %v374
  %v376 = vpop.f32.mrb[0].mxu0
  %377 = vdwg.mxu0
  %s378 = scalar_lea.vmem %s2, 48
  %v379 = vld [vmem:[%s378] sm:$0xff]
  %v380 = vld [vmem:[%s378 + $0x8] sm:$0xf]
  %v381 = vld [vmem:[%s378 + $0xc] sm:$0x33]
  %v382 = vld [vmem:[%s378 + $0x14] sm:$0x3]
  %s383 = scalar_lea.vmem %s3, 6
  %v384 = vld [vmem:[%s383] sm:$0x7]
  %v386 = vlaneseq
  %v387 = vshrl.u32 %v386, 7
  %v388 = vsub.s32 0, %v387
  %v389 = vrot.slane %v384, %v388
  %v390 = vlaneseq
  %v391 = vshrl.u32 %v390, 7
  %v392 = vsub.s32 1, %v391
  %v393 = vrot.slane %v384, %v392
  %v394 = vlaneseq
  %v395 = vshrl.u32 %v394, 7
  %v396 = vsub.s32 2, %v395
  %v397 = vrot.slane %v384, %v396
  %v405 = vunpack.c.l.b16 %v379
  %v406 = vunpack.c.h.b16 %v379
  %v407 = vunpack.c.l.b16 %v380
  %v408 = vunpack.c.l.b16 %v381
  %v409 = vunpack.c.h.b16 %v381
  %v410 = vunpack.c.l.b16 %v382
  %v411 = vpack.c.b16 %v408, %v405
  %v412 = vpack.c.b16 %v409, %v406
  %v413 = vpack.c.b16 %v410, %v407
  %v415 = vsel %vm119, %v411, 0
  %v418 = vsel %vm119, %v412, 0
  %v421 = vsel %vm119, %v413, 0
  %423 = vmatprep.subr.bf16.mxu0 %v418
  %424 = vmatpush1.bf16.msra.mxu0 %v415
  %425 = vmatprep.subr.bf16.mxu0 0
  %426 = vmatpush1.bf16.msra.mxu0 0
  %427 = vmatprep.subr.bf16.mxu0 0
  %428 = vmatpush1.bf16.msra.mxu0 0
  %429 = vmatprep.subr.bf16.mxu0 0
  %430 = vmatpush1.bf16.msra.mxu0 0
  %431 = vmatprep.subr.bf16.mxu0 0
  %432 = vmatpush1.bf16.msra.mxu0 0
  %433 = vmatprep.subr.bf16.mxu0 0
  %434 = vmatpush1.bf16.msra.mxu0 0
  %435 = vmatprep.subr.bf16.mxu0 0
  %436 = vmatpush1.bf16.msra.mxu0 0
  %437 = vmatprep.subr.bf16.mxu0 0
  %438 = vmatpush1.bf16.msra.mxu0 0
  %439 = vmatprep.subr.bf16.mxu0 0
  %440 = vmatpush1.bf16.msra.mxu0 0
  %441 = vmatprep.subr.bf16.mxu0 0
  %442 = vmatpush1.bf16.msra.mxu0 0
  %443 = vmatprep.subr.bf16.mxu0 0
  %444 = vmatpush1.bf16.msra.mxu0 0
  %445 = vmatprep.subr.bf16.mxu0 0
  %446 = vmatpush1.bf16.msra.mxu0 0
  %447 = vmatprep.subr.bf16.mxu0 0
  %448 = vmatpush1.bf16.msra.mxu0 0
  %449 = vmatprep.subr.bf16.mxu0 0
  %450 = vmatpush1.bf16.msra.mxu0 0
  %451 = vmatprep.subr.bf16.mxu0 0
  %452 = vmatpush1.bf16.msra.mxu0 0
  %453 = vmatprep.subr.bf16.mxu0 0
  %454 = vmatpush1.bf16.msra.mxu0 0
  %455 = vmatprep.mubr.bf16.mxu0 0
  %456 = vmatmul.mubr.bf16.gmra.mrb[0].mxu0 %v114
  %v457 = vpop.f32.mrb[0].mxu0
  %v458 = vadd.f32 %v389, %v457
  %v459 = vpop.f32.mrb[0].mxu0
  %v460 = vadd.f32 %v393, %v459
  %v461 = vpop.f32.mrb[0].mxu0
  %v462 = vadd.f32 %v389, %v461
  %v463 = vpop.f32.mrb[0].mxu0
  %v464 = vadd.f32 %v393, %v463
  %465 = vmatprep.mubr.bf16.mxu0 0
  %466 = vmatmul.mubr.bf16.gmra.mrb[0].mxu0 %v117
  %v467 = vpop.f32.mrb[0].mxu0
  %v468 = vadd.f32 %v389, %v467
  %v469 = vpop.f32.mrb[0].mxu0
  %v470 = vadd.f32 %v393, %v469
  %v471 = vpop.f32.mrb[0].mxu0
  %v472 = vadd.f32 %v389, %v471
  %v473 = vpop.f32.mrb[0].mxu0
  %v474 = vadd.f32 %v393, %v473
  %475 = vdwg.mxu0
  %476 = vmatprep.subr.bf16.mxu0 0
  %477 = vmatpush1.bf16.msra.mxu0 %v421
  %478 = vmatprep.subr.bf16.mxu0 0
  %479 = vmatpush1.bf16.msra.mxu0 0
  %480 = vmatprep.subr.bf16.mxu0 0
  %481 = vmatpush1.bf16.msra.mxu0 0
  %482 = vmatprep.subr.bf16.mxu0 0
  %483 = vmatpush1.bf16.msra.mxu0 0
  %484 = vmatprep.subr.bf16.mxu0 0
  %485 = vmatpush1.bf16.msra.mxu0 0
  %486 = vmatprep.subr.bf16.mxu0 0
  %487 = vmatpush1.bf16.msra.mxu0 0
  %488 = vmatprep.subr.bf16.mxu0 0
  %489 = vmatpush1.bf16.msra.mxu0 0
  %490 = vmatprep.subr.bf16.mxu0 0
  %491 = vmatpush1.bf16.msra.mxu0 0
  %492 = vmatprep.subr.bf16.mxu0 0
  %493 = vmatpush1.bf16.msra.mxu0 0
  %494 = vmatprep.subr.bf16.mxu0 0
  %495 = vmatpush1.bf16.msra.mxu0 0
  %496 = vmatprep.subr.bf16.mxu0 0
  %497 = vmatpush1.bf16.msra.mxu0 0
  %498 = vmatprep.subr.bf16.mxu0 0
  %499 = vmatpush1.bf16.msra.mxu0 0
  %500 = vmatprep.subr.bf16.mxu0 0
  %501 = vmatpush1.bf16.msra.mxu0 0
  %502 = vmatprep.subr.bf16.mxu0 0
  %503 = vmatpush1.bf16.msra.mxu0 0
  %504 = vmatprep.subr.bf16.mxu0 0
  %505 = vmatpush1.bf16.msra.mxu0 0
  %506 = vmatprep.subr.bf16.mxu0 0
  %507 = vmatpush1.bf16.msra.mxu0 0
  %508 = vmatprep.mubr.bf16.mxu0 0
  %509 = vmatmul.mubr.bf16.gmra.mrb[0].mxu0 %v114
  %v510 = vpop.f32.mrb[0].mxu0
  %v511 = vadd.f32 %v397, %v510
  %v512 = vpop.f32.mrb[0].mxu0
  %v513 = vpop.f32.mrb[0].mxu0
  %v514 = vadd.f32 %v397, %v513
  %v515 = vpop.f32.mrb[0].mxu0
  %516 = vmatprep.mubr.bf16.mxu0 0
  %517 = vmatmul.mubr.bf16.gmra.mrb[0].mxu0 %v117
  %v518 = vpop.f32.mrb[0].mxu0
  %v519 = vadd.f32 %v397, %v518
  %v520 = vpop.f32.mrb[0].mxu0
  %v521 = vpop.f32.mrb[0].mxu0
  %v522 = vadd.f32 %v397, %v521
  %v523 = vpop.f32.mrb[0].mxu0
  %524 = vdwg.mxu0
  %v525 = vxor.u32 %v311, 2147483648
  %v526 = vxor.u32 %v313, 2147483648
  %v527 = vxor.u32 %v364, 2147483648
  %v528 = vxor.u32 %v315, 2147483648
  %v529 = vxor.u32 %v317, 2147483648
  %v530 = vxor.u32 %v367, 2147483648
  %v531 = vxor.u32 %v321, 2147483648
  %v532 = vxor.u32 %v323, 2147483648
  %v533 = vxor.u32 %v372, 2147483648
  %v534 = vxor.u32 %v325, 2147483648
  %v535 = vxor.u32 %v327, 2147483648
  %v536 = vxor.u32 %v375, 2147483648
  %v537 = vmul.f32 %v525, 1.442695
  %v538 = vpow.pop %v537
  %v539 = vmul.f32 %v526, 1.442695
  %v540 = vpow.pop %v539
  %v541 = vmul.f32 %v527, 1.442695
  %v542 = vpow.pop %v541
  %v543 = vmul.f32 %v528, 1.442695
  %v544 = vpow.pop %v543
  %v545 = vmul.f32 %v529, 1.442695
  %v546 = vpow.pop %v545
  %v547 = vmul.f32 %v530, 1.442695
  %v548 = vpow.pop %v547
  %v549 = vmul.f32 %v531, 1.442695
  %v550 = vpow.pop %v549
  %v551 = vmul.f32 %v532, 1.442695
  %v552 = vpow.pop %v551
  %v553 = vmul.f32 %v533, 1.442695
  %v554 = vpow.pop %v553
  %v555 = vmul.f32 %v534, 1.442695
  %v556 = vpow.pop %v555
  %v557 = vmul.f32 %v535, 1.442695
  %v558 = vpow.pop %v557
  %v559 = vmul.f32 %v536, 1.442695
  %v560 = vpow.pop %v559
  %v561 = vadd.f32 %v538, 1.0
  %v562 = vadd.f32 %v540, 1.0
  %v563 = vadd.f32 %v542, 1.0
  %v564 = vadd.f32 %v544, 1.0
  %v565 = vadd.f32 %v546, 1.0
  %v566 = vadd.f32 %v548, 1.0
  %v567 = vadd.f32 %v550, 1.0
  %v568 = vadd.f32 %v552, 1.0
  %v569 = vadd.f32 %v554, 1.0
  %v570 = vadd.f32 %v556, 1.0
  %v571 = vadd.f32 %v558, 1.0
  %v572 = vadd.f32 %v560, 1.0
  %v573 = vrcp.pop %v561
  %v574 = vmul.f32 1.0, %v573
  %v575 = vrcp.pop %v562
  %v576 = vmul.f32 1.0, %v575
  %v577 = vrcp.pop %v563
  %v578 = vmul.f32 1.0, %v577
  %v579 = vrcp.pop %v564
  %v580 = vmul.f32 1.0, %v579
  %v581 = vrcp.pop %v565
  %v582 = vmul.f32 1.0, %v581
  %v583 = vrcp.pop %v566
  %v584 = vmul.f32 1.0, %v583
  %v585 = vrcp.pop %v567
  %v586 = vmul.f32 1.0, %v585
  %v587 = vrcp.pop %v568
  %v588 = vmul.f32 1.0, %v587
  %v589 = vrcp.pop %v569
  %v590 = vmul.f32 1.0, %v589
  %v591 = vrcp.pop %v570
  %v592 = vmul.f32 1.0, %v591
  %v593 = vrcp.pop %v571
  %v594 = vmul.f32 1.0, %v593
  %v595 = vrcp.pop %v572
  %v596 = vmul.f32 1.0, %v595
  %v597 = vadd.f32 %v164, %v574
  %v598 = vadd.f32 %v166, %v576
  %v599 = vadd.f32 %v217, %v578
  %v600 = vadd.f32 %v168, %v580
  %v601 = vadd.f32 %v170, %v582
  %v602 = vadd.f32 %v220, %v584
  %v603 = vadd.f32 %v174, %v586
  %v604 = vadd.f32 %v176, %v588
  %v605 = vadd.f32 %v225, %v590
  %v606 = vadd.f32 %v178, %v592
  %v607 = vadd.f32 %v180, %v594
  %v608 = vadd.f32 %v228, %v596
  %v609 = vadd.f32 %v597, %v458
  %v610 = vadd.f32 %v598, %v460
  %v611 = vadd.f32 %v599, %v511
  %v612 = vadd.f32 %v600, %v462
  %v613 = vadd.f32 %v601, %v464
  %v614 = vadd.f32 %v602, %v514
  %v615 = vadd.f32 %v603, %v468
  %v616 = vadd.f32 %v604, %v470
  %v617 = vadd.f32 %v605, %v519
  %v618 = vadd.f32 %v606, %v472
  %v619 = vadd.f32 %v607, %v474
  %v620 = vadd.f32 %v608, %v522
  %v621 = vmax.f32 %v609, 0.0
  %v622 = vmax.f32 %v610, 0.0
  %v623 = vmax.f32 %v611, 0.0
  %v624 = vmax.f32 %v612, 0.0
  %v625 = vmax.f32 %v613, 0.0
  %v626 = vmax.f32 %v614, 0.0
  %v627 = vmax.f32 %v615, 0.0
  %v628 = vmax.f32 %v616, 0.0
  %v629 = vmax.f32 %v617, 0.0
  %v630 = vmax.f32 %v618, 0.0
  %v631 = vmax.f32 %v619, 0.0
  %v632 = vmax.f32 %v620, 0.0
  %v633 = vpack.c.bf16 %v624, %v621
  %v634 = vpack.c.bf16 %v625, %v622
  %v635 = vpack.c.bf16 %v626, %v623
  %v636 = vpack.c.bf16 %v630, %v627
  %v637 = vpack.c.bf16 %v631, %v628
  %v638 = vpack.c.bf16 %v632, %v629
  %v643 = vunpack.c.l.b16 %v68
  %v644 = vunpack.c.l.b16 %v69
  %v645 = vunpack.c.l.b16 %v70
  %v646 = vunpack.c.l.b16 %v71
  %v647 = vpack.c.b16 %v644, %v643
  %v648 = vpack.c.b16 %v646, %v645
  %vm649 = vcmask 261120
  %v651 = vsel %vm649, %v647, 0
  %v654 = vsel %vm649, %v648, 0
  %656 = vmatprep.subr.bf16.mxu0 %v634
  %657 = vmatpush1.bf16.msra.mxu0 %v633
  %658 = vmatprep.subr.bf16.mxu0 %v637
  %659 = vmatpush1.bf16.msra.mxu0 %v636
  %660 = vmatprep.subr.bf16.mxu0 0
  %661 = vmatpush1.bf16.msra.mxu0 0
  %662 = vmatprep.subr.bf16.mxu0 0
  %663 = vmatpush1.bf16.msra.mxu0 0
  %664 = vmatprep.subr.bf16.mxu0 0
  %665 = vmatpush1.bf16.msra.mxu0 0
  %666 = vmatprep.subr.bf16.mxu0 0
  %667 = vmatpush1.bf16.msra.mxu0 0
  %668 = vmatprep.subr.bf16.mxu0 0
  %669 = vmatpush1.bf16.msra.mxu0 0
  %670 = vmatprep.subr.bf16.mxu0 0
  %671 = vmatpush1.bf16.msra.mxu0 0
  %672 = vmatprep.subr.bf16.mxu0 0
  %673 = vmatpush1.bf16.msra.mxu0 0
  %674 = vmatprep.subr.bf16.mxu0 0
  %675 = vmatpush1.bf16.msra.mxu0 0
  %676 = vmatprep.subr.bf16.mxu0 0
  %677 = vmatpush1.bf16.msra.mxu0 0
  %678 = vmatprep.subr.bf16.mxu0 0
  %679 = vmatpush1.bf16.msra.mxu0 0
  %680 = vmatprep.subr.bf16.mxu0 0
  %681 = vmatpush1.bf16.msra.mxu0 0
  %682 = vmatprep.subr.bf16.mxu0 0
  %683 = vmatpush1.bf16.msra.mxu0 0
  %684 = vmatprep.subr.bf16.mxu0 0
  %685 = vmatpush1.bf16.msra.mxu0 0
  %686 = vmatprep.subr.bf16.mxu0 0
  %687 = vmatpush1.bf16.msra.mxu0 0
  %688 = vmatprep.mubr.bf16.mxu0 0
  %689 = vmatmul.mubr.bf16.gmra.mrb[0].mxu0 %v651
  %v690 = vpop.f32.mrb[0].mxu0
  %v691 = vadd.f32 0.0, %v690
  %v692 = vpop.f32.mrb[0].mxu0
  %v693 = vadd.f32 0.0, %v692
  %v694 = vpop.f32.mrb[0].mxu0
  %v695 = vadd.f32 0.0, %v694
  %v696 = vpop.f32.mrb[0].mxu0
  %v697 = vadd.f32 0.0, %v696
  %698 = vmatprep.mubr.bf16.mxu0 0
  %699 = vmatmul.mubr.bf16.gmra.mrb[0].mxu0 %v654
  %v700 = vpop.f32.mrb[0].mxu0
  %v701 = vadd.f32 0.0, %v700
  %v702 = vpop.f32.mrb[0].mxu0
  %v703 = vadd.f32 0.0, %v702
  %v704 = vpop.f32.mrb[0].mxu0
  %v705 = vadd.f32 0.0, %v704
  %v706 = vpop.f32.mrb[0].mxu0
  %v707 = vadd.f32 0.0, %v706
  %708 = vdwg.mxu0
  %709 = vmatprep.subr.bf16.mxu0 0
  %710 = vmatpush1.bf16.msra.mxu0 %v635
  %711 = vmatprep.subr.bf16.mxu0 0
  %712 = vmatpush1.bf16.msra.mxu0 %v638
  %713 = vmatprep.subr.bf16.mxu0 0
  %714 = vmatpush1.bf16.msra.mxu0 0
  %715 = vmatprep.subr.bf16.mxu0 0
  %716 = vmatpush1.bf16.msra.mxu0 0
  %717 = vmatprep.subr.bf16.mxu0 0
  %718 = vmatpush1.bf16.msra.mxu0 0
  %719 = vmatprep.subr.bf16.mxu0 0
  %720 = vmatpush1.bf16.msra.mxu0 0
  %721 = vmatprep.subr.bf16.mxu0 0
  %722 = vmatpush1.bf16.msra.mxu0 0
  %723 = vmatprep.subr.bf16.mxu0 0
  %724 = vmatpush1.bf16.msra.mxu0 0
  %725 = vmatprep.subr.bf16.mxu0 0
  %726 = vmatpush1.bf16.msra.mxu0 0
  %727 = vmatprep.subr.bf16.mxu0 0
  %728 = vmatpush1.bf16.msra.mxu0 0
  %729 = vmatprep.subr.bf16.mxu0 0
  %730 = vmatpush1.bf16.msra.mxu0 0
  %731 = vmatprep.subr.bf16.mxu0 0
  %732 = vmatpush1.bf16.msra.mxu0 0
  %733 = vmatprep.subr.bf16.mxu0 0
  %734 = vmatpush1.bf16.msra.mxu0 0
  %735 = vmatprep.subr.bf16.mxu0 0
  %736 = vmatpush1.bf16.msra.mxu0 0
  %737 = vmatprep.subr.bf16.mxu0 0
  %738 = vmatpush1.bf16.msra.mxu0 0
  %739 = vmatprep.subr.bf16.mxu0 0
  %740 = vmatpush1.bf16.msra.mxu0 0
  %741 = vmatprep.mubr.bf16.mxu0 0
  %742 = vmatmul.mubr.bf16.gmra.mrb[0].mxu0 %v651
  %v743 = vpop.f32.mrb[0].mxu0
  %v744 = vadd.f32 0.0, %v743
  %v745 = vpop.f32.mrb[0].mxu0
  %v746 = vpop.f32.mrb[0].mxu0
  %v747 = vadd.f32 0.0, %v746
  %v748 = vpop.f32.mrb[0].mxu0
  %749 = vmatprep.mubr.bf16.mxu0 0
  %750 = vmatmul.mubr.bf16.gmra.mrb[0].mxu0 %v654
  %v751 = vpop.f32.mrb[0].mxu0
  %v752 = vadd.f32 0.0, %v751
  %v753 = vpop.f32.mrb[0].mxu0
  %v754 = vpop.f32.mrb[0].mxu0
  %v755 = vadd.f32 0.0, %v754
  %v756 = vpop.f32.mrb[0].mxu0
  %757 = vdwg.mxu0
  %v758 = vpack.c.bf16 %v695, %v691
  %v759 = vpack.c.bf16 %v697, %v693
  %v760 = vpack.c.bf16 %v747, %v744
  %v761 = vpack.c.bf16 %v705, %v701
  %v762 = vpack.c.bf16 %v707, %v703
  %v763 = vpack.c.bf16 %v755, %v752
  %v764 = vld [vmem:[%s4] sm:$0xff]
  %v765 = vld [vmem:[%s4 + $0x8] sm:$0xff]
  %v766 = vld [vmem:[%s4 + $0x10] sm:$0xff]
  %v767 = vld [vmem:[%s4 + $0x18] sm:$0xff]
  %v768 = vld [vmem:[%s4 + $0x20] sm:$0xff]
  %v769 = vld [vmem:[%s4 + $0x28] sm:$0xff]
  %v770 = vld [vmem:[%s4 + $0x30] sm:$0xff]
  %v771 = vld [vmem:[%s4 + $0x38] sm:$0xff]
  %v772 = vld [vmem:[%s4 + $0x40] sm:$0xff]
  %v773 = vld [vmem:[%s4 + $0x48] sm:$0xff]
  %v774 = vld [vmem:[%s4 + $0x50] sm:$0xff]
  %v775 = vld [vmem:[%s4 + $0x58] sm:$0xff]
  %v776 = vld [vmem:[%s4 + $0x60] sm:$0xff]
  %v777 = vld [vmem:[%s4 + $0x68] sm:$0xff]
  %v778 = vld [vmem:[%s4 + $0x70] sm:$0xff]
  %v779 = vld [vmem:[%s4 + $0x78] sm:$0xff]
  %v780 = vld [vmem:[%s4 + $0x80] sm:$0xff]
  %v781 = vld [vmem:[%s4 + $0x88] sm:$0xff]
  %v782 = vld [vmem:[%s4 + $0x90] sm:$0xff]
  %v783 = vld [vmem:[%s4 + $0x98] sm:$0xff]
  %v784 = vld [vmem:[%s4 + $0xa0] sm:$0xff]
  %v785 = vld [vmem:[%s4 + $0xa8] sm:$0xff]
  %v786 = vld [vmem:[%s4 + $0xb0] sm:$0xff]
  %v787 = vld [vmem:[%s4 + $0xb8] sm:$0xff]
  %v788 = vld [vmem:[%s4 + $0xc0] sm:$0xff]
  %v789 = vld [vmem:[%s4 + $0xc8] sm:$0xff]
  %v790 = vld [vmem:[%s4 + $0xd0] sm:$0xff]
  %v791 = vld [vmem:[%s4 + $0xd8] sm:$0xff]
  %v792 = vld [vmem:[%s4 + $0xe0] sm:$0xff]
  %v793 = vld [vmem:[%s4 + $0xe8] sm:$0xff]
  %v794 = vld [vmem:[%s4 + $0xf0] sm:$0xff]
  %v795 = vld [vmem:[%s4 + $0xf8] sm:$0xff]
  %v796 = vld [vmem:[%s4 + $0x100] sm:$0xff]
  %v797 = vld [vmem:[%s4 + $0x108] sm:$0xff]
  %v798 = vld [vmem:[%s4 + $0x110] sm:$0xff]
  %v799 = vld [vmem:[%s4 + $0x118] sm:$0xff]
  %v800 = vld [vmem:[%s4 + $0x120] sm:$0xff]
  %v801 = vld [vmem:[%s4 + $0x128] sm:$0xff]
  %v802 = vld [vmem:[%s4 + $0x130] sm:$0xff]
  %v803 = vld [vmem:[%s4 + $0x138] sm:$0xff]
  %v844 = vunpack.c.l.b16 %v764
  %v845 = vunpack.c.h.b16 %v764
  %v846 = vunpack.c.l.b16 %v765
  %v847 = vunpack.c.h.b16 %v765
  %v848 = vunpack.c.l.b16 %v766
  %v849 = vunpack.c.h.b16 %v766
  %v850 = vunpack.c.l.b16 %v767
  %v851 = vunpack.c.h.b16 %v767
  %v852 = vunpack.c.l.b16 %v768
  %v853 = vunpack.c.h.b16 %v768
  %v854 = vunpack.c.l.b16 %v769
  %v855 = vunpack.c.h.b16 %v769
  %v856 = vunpack.c.l.b16 %v770
  %v857 = vunpack.c.h.b16 %v770
  %v858 = vunpack.c.l.b16 %v771
  %v859 = vunpack.c.h.b16 %v771
  %v860 = vunpack.c.l.b16 %v772
  %v861 = vunpack.c.h.b16 %v772
  %v862 = vunpack.c.l.b16 %v773
  %v863 = vunpack.c.h.b16 %v773
  %v864 = vunpack.c.l.b16 %v774
  %v865 = vunpack.c.h.b16 %v774
  %v866 = vunpack.c.l.b16 %v775
  %v867 = vunpack.c.h.b16 %v775
  %v868 = vunpack.c.l.b16 %v776
  %v869 = vunpack.c.h.b16 %v776
  %v870 = vunpack.c.l.b16 %v777
  %v871 = vunpack.c.h.b16 %v777
  %v872 = vunpack.c.l.b16 %v778
  %v873 = vunpack.c.h.b16 %v778
  %v874 = vunpack.c.l.b16 %v779
  %v875 = vunpack.c.h.b16 %v779
  %v876 = vunpack.c.l.b16 %v780
  %v877 = vunpack.c.h.b16 %v780
  %v878 = vunpack.c.l.b16 %v781
  %v879 = vunpack.c.h.b16 %v781
  %v880 = vunpack.c.l.b16 %v782
  %v881 = vunpack.c.h.b16 %v782
  %v882 = vunpack.c.l.b16 %v783
  %v883 = vunpack.c.h.b16 %v783
  %v884 = vunpack.c.l.b16 %v784
  %v885 = vunpack.c.h.b16 %v784
  %v886 = vunpack.c.l.b16 %v785
  %v887 = vunpack.c.h.b16 %v785
  %v888 = vunpack.c.l.b16 %v786
  %v889 = vunpack.c.h.b16 %v786
  %v890 = vunpack.c.l.b16 %v787
  %v891 = vunpack.c.h.b16 %v787
  %v892 = vunpack.c.l.b16 %v788
  %v893 = vunpack.c.h.b16 %v788
  %v894 = vunpack.c.l.b16 %v789
  %v895 = vunpack.c.h.b16 %v789
  %v896 = vunpack.c.l.b16 %v790
  %v897 = vunpack.c.h.b16 %v790
  %v898 = vunpack.c.l.b16 %v791
  %v899 = vunpack.c.h.b16 %v791
  %v900 = vunpack.c.l.b16 %v792
  %v901 = vunpack.c.h.b16 %v792
  %v902 = vunpack.c.l.b16 %v793
  %v903 = vunpack.c.h.b16 %v793
  %v904 = vunpack.c.l.b16 %v794
  %v905 = vunpack.c.h.b16 %v794
  %v906 = vunpack.c.l.b16 %v795
  %v907 = vunpack.c.h.b16 %v795
  %v908 = vunpack.c.l.b16 %v796
  %v909 = vunpack.c.h.b16 %v796
  %v910 = vunpack.c.l.b16 %v797
  %v911 = vunpack.c.h.b16 %v797
  %v912 = vunpack.c.l.b16 %v798
  %v913 = vunpack.c.h.b16 %v798
  %v914 = vunpack.c.l.b16 %v799
  %v915 = vunpack.c.h.b16 %v799
  %v916 = vunpack.c.l.b16 %v800
  %v917 = vunpack.c.h.b16 %v800
  %v918 = vunpack.c.l.b16 %v801
  %v919 = vunpack.c.h.b16 %v801
  %v920 = vunpack.c.l.b16 %v802
  %v921 = vunpack.c.h.b16 %v802
  %v922 = vunpack.c.l.b16 %v803
  %v923 = vunpack.c.h.b16 %v803
  %v924 = vpack.c.b16 %v846, %v844
  %v925 = vpack.c.b16 %v847, %v845
  %v926 = vpack.c.b16 %v850, %v848
  %v927 = vpack.c.b16 %v851, %v849
  %v928 = vpack.c.b16 %v854, %v852
  %v929 = vpack.c.b16 %v855, %v853
  %v930 = vpack.c.b16 %v858, %v856
  %v931 = vpack.c.b16 %v859, %v857
  %v932 = vpack.c.b16 %v862, %v860
  %v933 = vpack.c.b16 %v863, %v861
  %v934 = vpack.c.b16 %v866, %v864
  %v935 = vpack.c.b16 %v867, %v865
  %v936 = vpack.c.b16 %v870, %v868
  %v937 = vpack.c.b16 %v871, %v869
  %v938 = vpack.c.b16 %v874, %v872
  %v939 = vpack.c.b16 %v875, %v873
  %v940 = vpack.c.b16 %v878, %v876
  %v941 = vpack.c.b16 %v879, %v877
  %v942 = vpack.c.b16 %v882, %v880
  %v943 = vpack.c.b16 %v883, %v881
  %v944 = vpack.c.b16 %v886, %v884
  %v945 = vpack.c.b16 %v887, %v885
  %v946 = vpack.c.b16 %v890, %v888
  %v947 = vpack.c.b16 %v891, %v889
  %v948 = vpack.c.b16 %v894, %v892
  %v949 = vpack.c.b16 %v895, %v893
  %v950 = vpack.c.b16 %v898, %v896
  %v951 = vpack.c.b16 %v899, %v897
  %v952 = vpack.c.b16 %v902, %v900
  %v953 = vpack.c.b16 %v903, %v901
  %v954 = vpack.c.b16 %v906, %v904
  %v955 = vpack.c.b16 %v907, %v905
  %v956 = vpack.c.b16 %v910, %v908
  %v957 = vpack.c.b16 %v911, %v909
  %v958 = vpack.c.b16 %v914, %v912
  %v959 = vpack.c.b16 %v915, %v913
  %v960 = vpack.c.b16 %v918, %v916
  %v961 = vpack.c.b16 %v919, %v917
  %v962 = vpack.c.b16 %v922, %v920
  %v963 = vpack.c.b16 %v923, %v921
  %vm1004 = vcmask 523264
  %v1006 = vsel %vm1004, %v760, 0
  %v1009 = vsel %vm1004, %v763, 0
  %1011 = vmatprep.subr.bf16.mxu0 %v925
  %1012 = vmatpush1.bf16.msra.mxu0 %v924
  %1013 = vmatprep.subr.bf16.mxu0 %v927
  %1014 = vmatpush1.bf16.msra.mxu0 %v926
  %1015 = vmatprep.subr.bf16.mxu0 %v929
  %1016 = vmatpush1.bf16.msra.mxu0 %v928
  %1017 = vmatprep.subr.bf16.mxu0 %v931
  %1018 = vmatpush1.bf16.msra.mxu0 %v930
  %1019 = vmatprep.subr.bf16.mxu0 %v933
  %1020 = vmatpush1.bf16.msra.mxu0 %v932
  %1021 = vmatprep.subr.bf16.mxu0 %v935
  %1022 = vmatpush1.bf16.msra.mxu0 %v934
  %1023 = vmatprep.subr.bf16.mxu0 %v937
  %1024 = vmatpush1.bf16.msra.mxu0 %v936
  %1025 = vmatprep.subr.bf16.mxu0 %v939
  %1026 = vmatpush1.bf16.msra.mxu0 %v938
  %1027 = vmatprep.subr.bf16.mxu0 %v941
  %1028 = vmatpush1.bf16.msra.mxu0 %v940
  %1029 = vmatprep.subr.bf16.mxu0 %v943
  %1030 = vmatpush1.bf16.msra.mxu0 %v942
  %1031 = vmatprep.subr.bf16.mxu0 %v945
  %1032 = vmatpush1.bf16.msra.mxu0 %v944
  %1033 = vmatprep.subr.bf16.mxu0 %v947
  %1034 = vmatpush1.bf16.msra.mxu0 %v946
  %1035 = vmatprep.subr.bf16.mxu0 %v949
  %1036 = vmatpush1.bf16.msra.mxu0 %v948
  %1037 = vmatprep.subr.bf16.mxu0 %v951
  %1038 = vmatpush1.bf16.msra.mxu0 %v950
  %1039 = vmatprep.subr.bf16.mxu0 %v953
  %1040 = vmatpush1.bf16.msra.mxu0 %v952
  %1041 = vmatprep.subr.bf16.mxu0 %v955
  %1042 = vmatpush1.bf16.msra.mxu0 %v954
  %1043 = vmatprep.mubr.bf16.mxu0 %v759
  %1044 = vmatmul.mubr.bf16.gmra.mrb[0].mxu0 %v758
  %v1045 = vpop.f32.mrb[0].mxu0
  %v1046 = vadd.f32 0.0, %v1045
  %v1047 = vpop.f32.mrb[0].mxu0
  %v1048 = vadd.f32 0.0, %v1047
  %v1049 = vpop.f32.mrb[0].mxu0
  %v1050 = vadd.f32 0.0, %v1049
  %v1051 = vpop.f32.mrb[0].mxu0
  %v1052 = vadd.f32 0.0, %v1051
  %1053 = vmatprep.mubr.bf16.mxu0 %v762
  %1054 = vmatmul.mubr.bf16.gmra.mrb[0].mxu0 %v761
  %v1055 = vpop.f32.mrb[0].mxu0
  %v1056 = vadd.f32 0.0, %v1055
  %v1057 = vpop.f32.mrb[0].mxu0
  %v1058 = vadd.f32 0.0, %v1057
  %v1059 = vpop.f32.mrb[0].mxu0
  %v1060 = vadd.f32 0.0, %v1059
  %v1061 = vpop.f32.mrb[0].mxu0
  %v1062 = vadd.f32 0.0, %v1061
  %1063 = vdwg.mxu0
  %1064 = vmatprep.subr.bf16.mxu0 %v957
  %1065 = vmatpush1.bf16.msra.mxu0 %v956
  %1066 = vmatprep.subr.bf16.mxu0 %v959
  %1067 = vmatpush1.bf16.msra.mxu0 %v958
  %1068 = vmatprep.subr.bf16.mxu0 %v961
  %1069 = vmatpush1.bf16.msra.mxu0 %v960
  %1070 = vmatprep.subr.bf16.mxu0 %v963
  %1071 = vmatpush1.bf16.msra.mxu0 %v962
  %1072 = vmatprep.subr.bf16.mxu0 0
  %1073 = vmatpush1.bf16.msra.mxu0 0
  %1074 = vmatprep.subr.bf16.mxu0 0
  %1075 = vmatpush1.bf16.msra.mxu0 0
  %1076 = vmatprep.subr.bf16.mxu0 0
  %1077 = vmatpush1.bf16.msra.mxu0 0
  %1078 = vmatprep.subr.bf16.mxu0 0
  %1079 = vmatpush1.bf16.msra.mxu0 0
  %1080 = vmatprep.subr.bf16.mxu0 0
  %1081 = vmatpush1.bf16.msra.mxu0 0
  %1082 = vmatprep.subr.bf16.mxu0 0
  %1083 = vmatpush1.bf16.msra.mxu0 0
  %1084 = vmatprep.subr.bf16.mxu0 0
  %1085 = vmatpush1.bf16.msra.mxu0 0
  %1086 = vmatprep.subr.bf16.mxu0 0
  %1087 = vmatpush1.bf16.msra.mxu0 0
  %1088 = vmatprep.subr.bf16.mxu0 0
  %1089 = vmatpush1.bf16.msra.mxu0 0
  %1090 = vmatprep.subr.bf16.mxu0 0
  %1091 = vmatpush1.bf16.msra.mxu0 0
  %1092 = vmatprep.subr.bf16.mxu0 0
  %1093 = vmatpush1.bf16.msra.mxu0 0
  %1094 = vmatprep.subr.bf16.mxu0 0
  %1095 = vmatpush1.bf16.msra.mxu0 0
  %1096 = vmatprep.mubr.bf16.mxu0 0
  %1097 = vmatmul.mubr.bf16.gmra.mrb[0].mxu0 %v1006
  %v1098 = vpop.f32.mrb[0].mxu0
  %v1099 = vadd.f32 %v1046, %v1098
  %v1100 = vpop.f32.mrb[0].mxu0
  %v1101 = vadd.f32 %v1048, %v1100
  %v1102 = vpop.f32.mrb[0].mxu0
  %v1103 = vadd.f32 %v1050, %v1102
  %v1104 = vpop.f32.mrb[0].mxu0
  %v1105 = vadd.f32 %v1052, %v1104
  %1106 = vmatprep.mubr.bf16.mxu0 0
  %1107 = vmatmul.mubr.bf16.gmra.mrb[0].mxu0 %v1009
  %v1108 = vpop.f32.mrb[0].mxu0
  %v1109 = vadd.f32 %v1056, %v1108
  %v1110 = vpop.f32.mrb[0].mxu0
  %v1111 = vadd.f32 %v1058, %v1110
  %v1112 = vpop.f32.mrb[0].mxu0
  %v1113 = vadd.f32 %v1060, %v1112
  %v1114 = vpop.f32.mrb[0].mxu0
  %v1115 = vadd.f32 %v1062, %v1114
  %1116 = vdwg.mxu0
  %v1117 = vmax.f32 %v1099, 0.0
  %v1118 = vmax.f32 %v1101, 0.0
  %v1119 = vmax.f32 %v1103, 0.0
  %v1120 = vmax.f32 %v1105, 0.0
  %v1121 = vmax.f32 %v1109, 0.0
  %v1122 = vmax.f32 %v1111, 0.0
  %v1123 = vmax.f32 %v1113, 0.0
  %v1124 = vmax.f32 %v1115, 0.0
  %v1125 = vpack.c.bf16 %v1119, %v1117
  %v1126 = vpack.c.bf16 %v1120, %v1118
  %v1127 = vpack.c.bf16 %v1123, %v1121
  %v1128 = vpack.c.bf16 %v1124, %v1122
  %v1129 = vld [vmem:[%s5] sm:$0xff]
  %v1130 = vld [vmem:[%s5 + $0x8] sm:$0xff]
  %v1131 = vld [vmem:[%s5 + $0x10] sm:$0xff]
  %v1132 = vld [vmem:[%s5 + $0x18] sm:$0xff]
  %v1133 = vld [vmem:[%s5 + $0x20] sm:$0xff]
  %v1134 = vld [vmem:[%s5 + $0x28] sm:$0xff]
  %v1135 = vld [vmem:[%s5 + $0x30] sm:$0xff]
  %v1136 = vld [vmem:[%s5 + $0x38] sm:$0xff]
  %v1137 = vld [vmem:[%s5 + $0x40] sm:$0xff]
  %v1138 = vld [vmem:[%s5 + $0x48] sm:$0xff]
  %v1139 = vld [vmem:[%s5 + $0x50] sm:$0xff]
  %v1140 = vld [vmem:[%s5 + $0x58] sm:$0xff]
  %v1141 = vld [vmem:[%s5 + $0x60] sm:$0xff]
  %v1142 = vld [vmem:[%s5 + $0x68] sm:$0xff]
  %v1143 = vld [vmem:[%s5 + $0x70] sm:$0xff]
  %v1144 = vld [vmem:[%s5 + $0x78] sm:$0xff]
  %v1145 = vld [vmem:[%s5 + $0x80] sm:$0xff]
  %v1146 = vld [vmem:[%s5 + $0x88] sm:$0xff]
  %v1147 = vld [vmem:[%s5 + $0x90] sm:$0xff]
  %v1148 = vld [vmem:[%s5 + $0x98] sm:$0xff]
  %v1149 = vld [vmem:[%s6] sm:$0x3]
  %v1151 = vlaneseq
  %v1152 = vshrl.u32 %v1151, 7
  %v1153 = vsub.s32 0, %v1152
  %v1154 = vrot.slane %v1149, %v1153
  %v1155 = vlaneseq
  %v1156 = vshrl.u32 %v1155, 7
  %v1157 = vsub.s32 1, %v1156
  %v1158 = vrot.slane %v1149, %v1157
  %v1181 = vunpack.c.l.b16 %v1129
  %v1182 = vunpack.c.h.b16 %v1129
  %v1183 = vunpack.c.l.b16 %v1130
  %v1184 = vunpack.c.h.b16 %v1130
  %v1185 = vunpack.c.l.b16 %v1131
  %v1186 = vunpack.c.h.b16 %v1131
  %v1187 = vunpack.c.l.b16 %v1132
  %v1188 = vunpack.c.h.b16 %v1132
  %v1189 = vunpack.c.l.b16 %v1133
  %v1190 = vunpack.c.h.b16 %v1133
  %v1191 = vunpack.c.l.b16 %v1134
  %v1192 = vunpack.c.h.b16 %v1134
  %v1193 = vunpack.c.l.b16 %v1135
  %v1194 = vunpack.c.h.b16 %v1135
  %v1195 = vunpack.c.l.b16 %v1136
  %v1196 = vunpack.c.h.b16 %v1136
  %v1197 = vunpack.c.l.b16 %v1137
  %v1198 = vunpack.c.h.b16 %v1137
  %v1199 = vunpack.c.l.b16 %v1138
  %v1200 = vunpack.c.h.b16 %v1138
  %v1201 = vunpack.c.l.b16 %v1139
  %v1202 = vunpack.c.h.b16 %v1139
  %v1203 = vunpack.c.l.b16 %v1140
  %v1204 = vunpack.c.h.b16 %v1140
  %v1205 = vunpack.c.l.b16 %v1141
  %v1206 = vunpack.c.h.b16 %v1141
  %v1207 = vunpack.c.l.b16 %v1142
  %v1208 = vunpack.c.h.b16 %v1142
  %v1209 = vunpack.c.l.b16 %v1143
  %v1210 = vunpack.c.h.b16 %v1143
  %v1211 = vunpack.c.l.b16 %v1144
  %v1212 = vunpack.c.h.b16 %v1144
  %v1213 = vunpack.c.l.b16 %v1145
  %v1214 = vunpack.c.h.b16 %v1145
  %v1215 = vunpack.c.l.b16 %v1146
  %v1216 = vunpack.c.h.b16 %v1146
  %v1217 = vunpack.c.l.b16 %v1147
  %v1218 = vunpack.c.h.b16 %v1147
  %v1219 = vunpack.c.l.b16 %v1148
  %v1220 = vunpack.c.h.b16 %v1148
  %v1221 = vpack.c.b16 %v1183, %v1181
  %v1222 = vpack.c.b16 %v1184, %v1182
  %v1223 = vpack.c.b16 %v1187, %v1185
  %v1224 = vpack.c.b16 %v1188, %v1186
  %v1225 = vpack.c.b16 %v1191, %v1189
  %v1226 = vpack.c.b16 %v1192, %v1190
  %v1227 = vpack.c.b16 %v1195, %v1193
  %v1228 = vpack.c.b16 %v1196, %v1194
  %v1229 = vpack.c.b16 %v1199, %v1197
  %v1230 = vpack.c.b16 %v1200, %v1198
  %v1231 = vpack.c.b16 %v1203, %v1201
  %v1232 = vpack.c.b16 %v1204, %v1202
  %v1233 = vpack.c.b16 %v1207, %v1205
  %v1234 = vpack.c.b16 %v1208, %v1206
  %v1235 = vpack.c.b16 %v1211, %v1209
  %v1236 = vpack.c.b16 %v1212, %v1210
  %v1237 = vpack.c.b16 %v1215, %v1213
  %v1238 = vpack.c.b16 %v1216, %v1214
  %v1239 = vpack.c.b16 %v1219, %v1217
  %v1240 = vpack.c.b16 %v1220, %v1218
  %v1262 = vsel %vm649, %v1126, 0
  %v1265 = vsel %vm649, %v1128, 0
  %1267 = vmatprep.subr.bf16.mxu0 %v1222
  %1268 = vmatpush1.bf16.msra.mxu0 %v1221
  %1269 = vmatprep.subr.bf16.mxu0 %v1224
  %1270 = vmatpush1.bf16.msra.mxu0 %v1223
  %1271 = vmatprep.subr.bf16.mxu0 %v1226
  %1272 = vmatpush1.bf16.msra.mxu0 %v1225
  %1273 = vmatprep.subr.bf16.mxu0 %v1228
  %1274 = vmatpush1.bf16.msra.mxu0 %v1227
  %1275 = vmatprep.subr.bf16.mxu0 %v1230
  %1276 = vmatpush1.bf16.msra.mxu0 %v1229
  %1277 = vmatprep.subr.bf16.mxu0 %v1232
  %1278 = vmatpush1.bf16.msra.mxu0 %v1231
  %1279 = vmatprep.subr.bf16.mxu0 %v1234
  %1280 = vmatpush1.bf16.msra.mxu0 %v1233
  %1281 = vmatprep.subr.bf16.mxu0 %v1236
  %1282 = vmatpush1.bf16.msra.mxu0 %v1235
  %1283 = vmatprep.subr.bf16.mxu0 %v1238
  %1284 = vmatpush1.bf16.msra.mxu0 %v1237
  %1285 = vmatprep.subr.bf16.mxu0 %v1240
  %1286 = vmatpush1.bf16.msra.mxu0 %v1239
  %1287 = vmatprep.subr.bf16.mxu0 0
  %1288 = vmatpush1.bf16.msra.mxu0 0
  %1289 = vmatprep.subr.bf16.mxu0 0
  %1290 = vmatpush1.bf16.msra.mxu0 0
  %1291 = vmatprep.subr.bf16.mxu0 0
  %1292 = vmatpush1.bf16.msra.mxu0 0
  %1293 = vmatprep.subr.bf16.mxu0 0
  %1294 = vmatpush1.bf16.msra.mxu0 0
  %1295 = vmatprep.subr.bf16.mxu0 0
  %1296 = vmatpush1.bf16.msra.mxu0 0
  %1297 = vmatprep.subr.bf16.mxu0 0
  %1298 = vmatpush1.bf16.msra.mxu0 0
  %1299 = vmatprep.mubr.bf16.mxu0 %v1262
  %1300 = vmatmul.mubr.bf16.gmra.mrb[0].mxu0 %v1125
  %v1301 = vpop.f32.mrb[0].mxu0
  %v1302 = vadd.f32 %v1154, %v1301
  %v1303 = vpop.f32.mrb[0].mxu0
  %v1304 = vadd.f32 %v1158, %v1303
  %v1305 = vpop.f32.mrb[0].mxu0
  %v1306 = vadd.f32 %v1154, %v1305
  %v1307 = vpop.f32.mrb[0].mxu0
  %v1308 = vadd.f32 %v1158, %v1307
  %1309 = vmatprep.mubr.bf16.mxu0 %v1265
  %1310 = vmatmul.mubr.bf16.gmra.mrb[0].mxu0 %v1127
  %v1311 = vpop.f32.mrb[0].mxu0
  %v1312 = vadd.f32 %v1154, %v1311
  %v1313 = vpop.f32.mrb[0].mxu0
  %v1314 = vadd.f32 %v1158, %v1313
  %v1315 = vpop.f32.mrb[0].mxu0
  %v1316 = vadd.f32 %v1154, %v1315
  %v1317 = vpop.f32.mrb[0].mxu0
  %v1318 = vadd.f32 %v1158, %v1317
  %1319 = vdwg.mxu0
  %s1320 = scalar_lea.vmem %s5, 160
  %v1321 = vld [vmem:[%s1320] sm:$0xff]
  %v1322 = vld [vmem:[%s1320 + $0x8] sm:$0xff]
  %v1323 = vld [vmem:[%s1320 + $0x10] sm:$0xff]
  %v1324 = vld [vmem:[%s1320 + $0x18] sm:$0xff]
  %v1325 = vld [vmem:[%s1320 + $0x20] sm:$0xff]
  %v1326 = vld [vmem:[%s1320 + $0x28] sm:$0xff]
  %v1327 = vld [vmem:[%s1320 + $0x30] sm:$0xff]
  %v1328 = vld [vmem:[%s1320 + $0x38] sm:$0xff]
  %v1329 = vld [vmem:[%s1320 + $0x40] sm:$0xff]
  %v1330 = vld [vmem:[%s1320 + $0x48] sm:$0xff]
  %v1331 = vld [vmem:[%s1320 + $0x50] sm:$0xff]
  %v1332 = vld [vmem:[%s1320 + $0x58] sm:$0xff]
  %v1333 = vld [vmem:[%s1320 + $0x60] sm:$0xff]
  %v1334 = vld [vmem:[%s1320 + $0x68] sm:$0xff]
  %v1335 = vld [vmem:[%s1320 + $0x70] sm:$0xff]
  %v1336 = vld [vmem:[%s1320 + $0x78] sm:$0xff]
  %v1337 = vld [vmem:[%s1320 + $0x80] sm:$0xff]
  %v1338 = vld [vmem:[%s1320 + $0x88] sm:$0xff]
  %v1339 = vld [vmem:[%s1320 + $0x90] sm:$0xff]
  %v1340 = vld [vmem:[%s1320 + $0x98] sm:$0xff]
  %s1341 = scalar_lea.vmem %s6, 2
  %v1342 = vld [vmem:[%s1341] sm:$0x3]
  %v1344 = vlaneseq
  %v1345 = vshrl.u32 %v1344, 7
  %v1346 = vsub.s32 0, %v1345
  %v1347 = vrot.slane %v1342, %v1346
  %v1348 = vlaneseq
  %v1349 = vshrl.u32 %v1348, 7
  %v1350 = vsub.s32 1, %v1349
  %v1351 = vrot.slane %v1342, %v1350
  %v1374 = vunpack.c.l.b16 %v1321
  %v1375 = vunpack.c.h.b16 %v1321
  %v1376 = vunpack.c.l.b16 %v1322
  %v1377 = vunpack.c.h.b16 %v1322
  %v1378 = vunpack.c.l.b16 %v1323
  %v1379 = vunpack.c.h.b16 %v1323
  %v1380 = vunpack.c.l.b16 %v1324
  %v1381 = vunpack.c.h.b16 %v1324
  %v1382 = vunpack.c.l.b16 %v1325
  %v1383 = vunpack.c.h.b16 %v1325
  %v1384 = vunpack.c.l.b16 %v1326
  %v1385 = vunpack.c.h.b16 %v1326
  %v1386 = vunpack.c.l.b16 %v1327
  %v1387 = vunpack.c.h.b16 %v1327
  %v1388 = vunpack.c.l.b16 %v1328
  %v1389 = vunpack.c.h.b16 %v1328
  %v1390 = vunpack.c.l.b16 %v1329
  %v1391 = vunpack.c.h.b16 %v1329
  %v1392 = vunpack.c.l.b16 %v1330
  %v1393 = vunpack.c.h.b16 %v1330
  %v1394 = vunpack.c.l.b16 %v1331
  %v1395 = vunpack.c.h.b16 %v1331
  %v1396 = vunpack.c.l.b16 %v1332
  %v1397 = vunpack.c.h.b16 %v1332
  %v1398 = vunpack.c.l.b16 %v1333
  %v1399 = vunpack.c.h.b16 %v1333
  %v1400 = vunpack.c.l.b16 %v1334
  %v1401 = vunpack.c.h.b16 %v1334
  %v1402 = vunpack.c.l.b16 %v1335
  %v1403 = vunpack.c.h.b16 %v1335
  %v1404 = vunpack.c.l.b16 %v1336
  %v1405 = vunpack.c.h.b16 %v1336
  %v1406 = vunpack.c.l.b16 %v1337
  %v1407 = vunpack.c.h.b16 %v1337
  %v1408 = vunpack.c.l.b16 %v1338
  %v1409 = vunpack.c.h.b16 %v1338
  %v1410 = vunpack.c.l.b16 %v1339
  %v1411 = vunpack.c.h.b16 %v1339
  %v1412 = vunpack.c.l.b16 %v1340
  %v1413 = vunpack.c.h.b16 %v1340
  %v1414 = vpack.c.b16 %v1376, %v1374
  %v1415 = vpack.c.b16 %v1377, %v1375
  %v1416 = vpack.c.b16 %v1380, %v1378
  %v1417 = vpack.c.b16 %v1381, %v1379
  %v1418 = vpack.c.b16 %v1384, %v1382
  %v1419 = vpack.c.b16 %v1385, %v1383
  %v1420 = vpack.c.b16 %v1388, %v1386
  %v1421 = vpack.c.b16 %v1389, %v1387
  %v1422 = vpack.c.b16 %v1392, %v1390
  %v1423 = vpack.c.b16 %v1393, %v1391
  %v1424 = vpack.c.b16 %v1396, %v1394
  %v1425 = vpack.c.b16 %v1397, %v1395
  %v1426 = vpack.c.b16 %v1400, %v1398
  %v1427 = vpack.c.b16 %v1401, %v1399
  %v1428 = vpack.c.b16 %v1404, %v1402
  %v1429 = vpack.c.b16 %v1405, %v1403
  %v1430 = vpack.c.b16 %v1408, %v1406
  %v1431 = vpack.c.b16 %v1409, %v1407
  %v1432 = vpack.c.b16 %v1412, %v1410
  %v1433 = vpack.c.b16 %v1413, %v1411
  %1454 = vmatprep.subr.bf16.mxu0 %v1415
  %1455 = vmatpush1.bf16.msra.mxu0 %v1414
  %1456 = vmatprep.subr.bf16.mxu0 %v1417
  %1457 = vmatpush1.bf16.msra.mxu0 %v1416
  %1458 = vmatprep.subr.bf16.mxu0 %v1419
  %1459 = vmatpush1.bf16.msra.mxu0 %v1418
  %1460 = vmatprep.subr.bf16.mxu0 %v1421
  %1461 = vmatpush1.bf16.msra.mxu0 %v1420
  %1462 = vmatprep.subr.bf16.mxu0 %v1423
  %1463 = vmatpush1.bf16.msra.mxu0 %v1422
  %1464 = vmatprep.subr.bf16.mxu0 %v1425
  %1465 = vmatpush1.bf16.msra.mxu0 %v1424
  %1466 = vmatprep.subr.bf16.mxu0 %v1427
  %1467 = vmatpush1.bf16.msra.mxu0 %v1426
  %1468 = vmatprep.subr.bf16.mxu0 %v1429
  %1469 = vmatpush1.bf16.msra.mxu0 %v1428
  %1470 = vmatprep.subr.bf16.mxu0 %v1431
  %1471 = vmatpush1.bf16.msra.mxu0 %v1430
  %1472 = vmatprep.subr.bf16.mxu0 %v1433
  %1473 = vmatpush1.bf16.msra.mxu0 %v1432
  %1474 = vmatprep.subr.bf16.mxu0 0
  %1475 = vmatpush1.bf16.msra.mxu0 0
  %1476 = vmatprep.subr.bf16.mxu0 0
  %1477 = vmatpush1.bf16.msra.mxu0 0
  %1478 = vmatprep.subr.bf16.mxu0 0
  %1479 = vmatpush1.bf16.msra.mxu0 0
  %1480 = vmatprep.subr.bf16.mxu0 0
  %1481 = vmatpush1.bf16.msra.mxu0 0
  %1482 = vmatprep.subr.bf16.mxu0 0
  %1483 = vmatpush1.bf16.msra.mxu0 0
  %1484 = vmatprep.subr.bf16.mxu0 0
  %1485 = vmatpush1.bf16.msra.mxu0 0
  %1486 = vmatprep.mubr.bf16.mxu0 %v1262
  %1487 = vmatmul.mubr.bf16.gmra.mrb[0].mxu0 %v1125
  %v1488 = vpop.f32.mrb[0].mxu0
  %v1489 = vadd.f32 %v1347, %v1488
  %v1490 = vpop.f32.mrb[0].mxu0
  %v1491 = vadd.f32 %v1351, %v1490
  %v1492 = vpop.f32.mrb[0].mxu0
  %v1493 = vadd.f32 %v1347, %v1492
  %v1494 = vpop.f32.mrb[0].mxu0
  %v1495 = vadd.f32 %v1351, %v1494
  %1496 = vmatprep.mubr.bf16.mxu0 %v1265
  %1497 = vmatmul.mubr.bf16.gmra.mrb[0].mxu0 %v1127
  %v1498 = vpop.f32.mrb[0].mxu0
  %v1499 = vadd.f32 %v1347, %v1498
  %v1500 = vpop.f32.mrb[0].mxu0
  %v1501 = vadd.f32 %v1351, %v1500
  %v1502 = vpop.f32.mrb[0].mxu0
  %v1503 = vadd.f32 %v1347, %v1502
  %v1504 = vpop.f32.mrb[0].mxu0
  %v1505 = vadd.f32 %v1351, %v1504
  %1506 = vdwg.mxu0
  %s1507 = scalar_lea.vmem %s5, 320
  %v1508 = vld [vmem:[%s1507] sm:$0xff]
  %v1509 = vld [vmem:[%s1507 + $0x8] sm:$0xff]
  %v1510 = vld [vmem:[%s1507 + $0x10] sm:$0xff]
  %v1511 = vld [vmem:[%s1507 + $0x18] sm:$0xff]
  %v1512 = vld [vmem:[%s1507 + $0x20] sm:$0xff]
  %v1513 = vld [vmem:[%s1507 + $0x28] sm:$0xff]
  %v1514 = vld [vmem:[%s1507 + $0x30] sm:$0xff]
  %v1515 = vld [vmem:[%s1507 + $0x38] sm:$0xff]
  %v1516 = vld [vmem:[%s1507 + $0x40] sm:$0xff]
  %v1517 = vld [vmem:[%s1507 + $0x48] sm:$0xff]
  %v1518 = vld [vmem:[%s1507 + $0x50] sm:$0xff]
  %v1519 = vld [vmem:[%s1507 + $0x58] sm:$0xff]
  %v1520 = vld [vmem:[%s1507 + $0x60] sm:$0xff]
  %v1521 = vld [vmem:[%s1507 + $0x68] sm:$0xff]
  %v1522 = vld [vmem:[%s1507 + $0x70] sm:$0xff]
  %v1523 = vld [vmem:[%s1507 + $0x78] sm:$0xff]
  %v1524 = vld [vmem:[%s1507 + $0x80] sm:$0xff]
  %v1525 = vld [vmem:[%s1507 + $0x88] sm:$0xff]
  %v1526 = vld [vmem:[%s1507 + $0x90] sm:$0xff]
  %v1527 = vld [vmem:[%s1507 + $0x98] sm:$0xff]
  %s1528 = scalar_lea.vmem %s6, 4
  %v1529 = vld [vmem:[%s1528] sm:$0x3]
  %v1531 = vlaneseq
  %v1532 = vshrl.u32 %v1531, 7
  %v1533 = vsub.s32 0, %v1532
  %v1534 = vrot.slane %v1529, %v1533
  %v1535 = vlaneseq
  %v1536 = vshrl.u32 %v1535, 7
  %v1537 = vsub.s32 1, %v1536
  %v1538 = vrot.slane %v1529, %v1537
  %v1561 = vunpack.c.l.b16 %v1508
  %v1562 = vunpack.c.h.b16 %v1508
  %v1563 = vunpack.c.l.b16 %v1509
  %v1564 = vunpack.c.h.b16 %v1509
  %v1565 = vunpack.c.l.b16 %v1510
  %v1566 = vunpack.c.h.b16 %v1510
  %v1567 = vunpack.c.l.b16 %v1511
  %v1568 = vunpack.c.h.b16 %v1511
  %v1569 = vunpack.c.l.b16 %v1512
  %v1570 = vunpack.c.h.b16 %v1512
  %v1571 = vunpack.c.l.b16 %v1513
  %v1572 = vunpack.c.h.b16 %v1513
  %v1573 = vunpack.c.l.b16 %v1514
  %v1574 = vunpack.c.h.b16 %v1514
  %v1575 = vunpack.c.l.b16 %v1515
  %v1576 = vunpack.c.h.b16 %v1515
  %v1577 = vunpack.c.l.b16 %v1516
  %v1578 = vunpack.c.h.b16 %v1516
  %v1579 = vunpack.c.l.b16 %v1517
  %v1580 = vunpack.c.h.b16 %v1517
  %v1581 = vunpack.c.l.b16 %v1518
  %v1582 = vunpack.c.h.b16 %v1518
  %v1583 = vunpack.c.l.b16 %v1519
  %v1584 = vunpack.c.h.b16 %v1519
  %v1585 = vunpack.c.l.b16 %v1520
  %v1586 = vunpack.c.h.b16 %v1520
  %v1587 = vunpack.c.l.b16 %v1521
  %v1588 = vunpack.c.h.b16 %v1521
  %v1589 = vunpack.c.l.b16 %v1522
  %v1590 = vunpack.c.h.b16 %v1522
  %v1591 = vunpack.c.l.b16 %v1523
  %v1592 = vunpack.c.h.b16 %v1523
  %v1593 = vunpack.c.l.b16 %v1524
  %v1594 = vunpack.c.h.b16 %v1524
  %v1595 = vunpack.c.l.b16 %v1525
  %v1596 = vunpack.c.h.b16 %v1525
  %v1597 = vunpack.c.l.b16 %v1526
  %v1598 = vunpack.c.h.b16 %v1526
  %v1599 = vunpack.c.l.b16 %v1527
  %v1600 = vunpack.c.h.b16 %v1527
  %v1601 = vpack.c.b16 %v1563, %v1561
  %v1602 = vpack.c.b16 %v1564, %v1562
  %v1603 = vpack.c.b16 %v1567, %v1565
  %v1604 = vpack.c.b16 %v1568, %v1566
  %v1605 = vpack.c.b16 %v1571, %v1569
  %v1606 = vpack.c.b16 %v1572, %v1570
  %v1607 = vpack.c.b16 %v1575, %v1573
  %v1608 = vpack.c.b16 %v1576, %v1574
  %v1609 = vpack.c.b16 %v1579, %v1577
  %v1610 = vpack.c.b16 %v1580, %v1578
  %v1611 = vpack.c.b16 %v1583, %v1581
  %v1612 = vpack.c.b16 %v1584, %v1582
  %v1613 = vpack.c.b16 %v1587, %v1585
  %v1614 = vpack.c.b16 %v1588, %v1586
  %v1615 = vpack.c.b16 %v1591, %v1589
  %v1616 = vpack.c.b16 %v1592, %v1590
  %v1617 = vpack.c.b16 %v1595, %v1593
  %v1618 = vpack.c.b16 %v1596, %v1594
  %v1619 = vpack.c.b16 %v1599, %v1597
  %v1620 = vpack.c.b16 %v1600, %v1598
  %1641 = vmatprep.subr.bf16.mxu0 %v1602
  %1642 = vmatpush1.bf16.msra.mxu0 %v1601
  %1643 = vmatprep.subr.bf16.mxu0 %v1604
  %1644 = vmatpush1.bf16.msra.mxu0 %v1603
  %1645 = vmatprep.subr.bf16.mxu0 %v1606
  %1646 = vmatpush1.bf16.msra.mxu0 %v1605
  %1647 = vmatprep.subr.bf16.mxu0 %v1608
  %1648 = vmatpush1.bf16.msra.mxu0 %v1607
  %1649 = vmatprep.subr.bf16.mxu0 %v1610
  %1650 = vmatpush1.bf16.msra.mxu0 %v1609
  %1651 = vmatprep.subr.bf16.mxu0 %v1612
  %1652 = vmatpush1.bf16.msra.mxu0 %v1611
  %1653 = vmatprep.subr.bf16.mxu0 %v1614
  %1654 = vmatpush1.bf16.msra.mxu0 %v1613
  %1655 = vmatprep.subr.bf16.mxu0 %v1616
  %1656 = vmatpush1.bf16.msra.mxu0 %v1615
  %1657 = vmatprep.subr.bf16.mxu0 %v1618
  %1658 = vmatpush1.bf16.msra.mxu0 %v1617
  %1659 = vmatprep.subr.bf16.mxu0 %v1620
  %1660 = vmatpush1.bf16.msra.mxu0 %v1619
  %1661 = vmatprep.subr.bf16.mxu0 0
  %1662 = vmatpush1.bf16.msra.mxu0 0
  %1663 = vmatprep.subr.bf16.mxu0 0
  %1664 = vmatpush1.bf16.msra.mxu0 0
  %1665 = vmatprep.subr.bf16.mxu0 0
  %1666 = vmatpush1.bf16.msra.mxu0 0
  %1667 = vmatprep.subr.bf16.mxu0 0
  %1668 = vmatpush1.bf16.msra.mxu0 0
  %1669 = vmatprep.subr.bf16.mxu0 0
  %1670 = vmatpush1.bf16.msra.mxu0 0
  %1671 = vmatprep.subr.bf16.mxu0 0
  %1672 = vmatpush1.bf16.msra.mxu0 0
  %1673 = vmatprep.mubr.bf16.mxu0 %v1262
  %1674 = vmatmul.mubr.bf16.gmra.mrb[0].mxu0 %v1125
  %v1675 = vpop.f32.mrb[0].mxu0
  %v1676 = vadd.f32 %v1534, %v1675
  %v1677 = vpop.f32.mrb[0].mxu0
  %v1678 = vadd.f32 %v1538, %v1677
  %v1679 = vpop.f32.mrb[0].mxu0
  %v1680 = vadd.f32 %v1534, %v1679
  %v1681 = vpop.f32.mrb[0].mxu0
  %v1682 = vadd.f32 %v1538, %v1681
  %1683 = vmatprep.mubr.bf16.mxu0 %v1265
  %1684 = vmatmul.mubr.bf16.gmra.mrb[0].mxu0 %v1127
  %v1685 = vpop.f32.mrb[0].mxu0
  %v1686 = vadd.f32 %v1534, %v1685
  %v1687 = vpop.f32.mrb[0].mxu0
  %v1688 = vadd.f32 %v1538, %v1687
  %v1689 = vpop.f32.mrb[0].mxu0
  %v1690 = vadd.f32 %v1534, %v1689
  %v1691 = vpop.f32.mrb[0].mxu0
  %v1692 = vadd.f32 %v1538, %v1691
  %1693 = vdwg.mxu0
  %v1694 = vxor.u32 %v1489, 2147483648
  %v1695 = vxor.u32 %v1491, 2147483648
  %v1696 = vxor.u32 %v1493, 2147483648
  %v1697 = vxor.u32 %v1495, 2147483648
  %v1698 = vxor.u32 %v1499, 2147483648
  %v1699 = vxor.u32 %v1501, 2147483648
  %v1700 = vxor.u32 %v1503, 2147483648
  %v1701 = vxor.u32 %v1505, 2147483648
  %v1702 = vmul.f32 %v1694, 1.442695
  %v1703 = vpow.pop %v1702
  %v1704 = vmul.f32 %v1695, 1.442695
  %v1705 = vpow.pop %v1704
  %v1706 = vmul.f32 %v1696, 1.442695
  %v1707 = vpow.pop %v1706
  %v1708 = vmul.f32 %v1697, 1.442695
  %v1709 = vpow.pop %v1708
  %v1710 = vmul.f32 %v1698, 1.442695
  %v1711 = vpow.pop %v1710
  %v1712 = vmul.f32 %v1699, 1.442695
  %v1713 = vpow.pop %v1712
  %v1714 = vmul.f32 %v1700, 1.442695
  %v1715 = vpow.pop %v1714
  %v1716 = vmul.f32 %v1701, 1.442695
  %v1717 = vpow.pop %v1716
  %v1718 = vadd.f32 %v1703, 1.0
  %v1719 = vadd.f32 %v1705, 1.0
  %v1720 = vadd.f32 %v1707, 1.0
  %v1721 = vadd.f32 %v1709, 1.0
  %v1722 = vadd.f32 %v1711, 1.0
  %v1723 = vadd.f32 %v1713, 1.0
  %v1724 = vadd.f32 %v1715, 1.0
  %v1725 = vadd.f32 %v1717, 1.0
  %v1726 = vrcp.pop %v1718
  %v1727 = vmul.f32 1.0, %v1726
  %v1728 = vrcp.pop %v1719
  %v1729 = vmul.f32 1.0, %v1728
  %v1730 = vrcp.pop %v1720
  %v1731 = vmul.f32 1.0, %v1730
  %v1732 = vrcp.pop %v1721
  %v1733 = vmul.f32 1.0, %v1732
  %v1734 = vrcp.pop %v1722
  %v1735 = vmul.f32 1.0, %v1734
  %v1736 = vrcp.pop %v1723
  %v1737 = vmul.f32 1.0, %v1736
  %v1738 = vrcp.pop %v1724
  %v1739 = vmul.f32 1.0, %v1738
  %v1740 = vrcp.pop %v1725
  %v1741 = vmul.f32 1.0, %v1740
  %v1742 = vadd.f32 %v1302, %v1727
  %v1743 = vadd.f32 %v1304, %v1729
  %v1744 = vadd.f32 %v1306, %v1731
  %v1745 = vadd.f32 %v1308, %v1733
  %v1746 = vadd.f32 %v1312, %v1735
  %v1747 = vadd.f32 %v1314, %v1737
  %v1748 = vadd.f32 %v1316, %v1739
  %v1749 = vadd.f32 %v1318, %v1741
  %v1750 = vadd.f32 %v1742, %v1676
  %v1751 = vadd.f32 %v1743, %v1678
  %v1752 = vadd.f32 %v1744, %v1680
  %v1753 = vadd.f32 %v1745, %v1682
  %v1754 = vadd.f32 %v1746, %v1686
  %v1755 = vadd.f32 %v1747, %v1688
  %v1756 = vadd.f32 %v1748, %v1690
  %v1757 = vadd.f32 %v1749, %v1692
  %v1758 = vmax.f32 %v1750, 0.0
  %v1759 = vmax.f32 %v1751, 0.0
  %v1760 = vmax.f32 %v1752, 0.0
  %v1761 = vmax.f32 %v1753, 0.0
  %v1762 = vmax.f32 %v1754, 0.0
  %v1763 = vmax.f32 %v1755, 0.0
  %v1764 = vmax.f32 %v1756, 0.0
  %v1765 = vmax.f32 %v1757, 0.0
  %v1766 = vadd.f32 %v1758, %v1759
  %1767 = vadd.xlane.f32.xlu0 %v1766
  %v1768 = vpop.xlane.xlu0 %1767
  %v1769 = vadd.f32 %v1760, %v1761
  %1770 = vadd.xlane.f32.xlu0 %v1769
  %v1771 = vpop.xlane.xlu0 %1770
  %v1772 = vadd.f32 %v1762, %v1763
  %1773 = vadd.xlane.f32.xlu0 %v1772
  %v1774 = vpop.xlane.xlu0 %1773
  %v1775 = vadd.f32 %v1764, %v1765
  %1776 = vadd.xlane.f32.xlu0 %v1775
  %v1777 = vpop.xlane.xlu0 %1776
  %v1778 = vmul.f32 %v1758, %v1758
  %v1779 = vmul.f32 %v1759, %v1759
  %v1780 = vmul.f32 %v1760, %v1760
  %v1781 = vmul.f32 %v1761, %v1761
  %v1782 = vmul.f32 %v1762, %v1762
  %v1783 = vmul.f32 %v1763, %v1763
  %v1784 = vmul.f32 %v1764, %v1764
  %v1785 = vmul.f32 %v1765, %v1765
  %v1786 = vadd.f32 %v1778, %v1779
  %1787 = vadd.xlane.f32.xlu0 %v1786
  %v1788 = vpop.xlane.xlu0 %1787
  %v1789 = vadd.f32 %v1780, %v1781
  %1790 = vadd.xlane.f32.xlu0 %v1789
  %v1791 = vpop.xlane.xlu0 %1790
  %v1792 = vadd.f32 %v1782, %v1783
  %1793 = vadd.xlane.f32.xlu0 %v1792
  %v1794 = vpop.xlane.xlu0 %1793
  %v1795 = vadd.f32 %v1784, %v1785
  %1796 = vadd.xlane.f32.xlu0 %v1795
  %v1797 = vpop.xlane.xlu0 %1796
  %v1798 = vadd.f32 %v1768, %v1774
  %v1799 = vadd.f32 %v1771, %v1777
  %v1800 = vadd.f32 %v1788, %v1794
  %v1801 = vadd.f32 %v1791, %v1797
  %v1802 = vmul.f32 %v1798, 0.001953125
  %v1803 = vmul.f32 %v1799, 0.001953125
  %v1804 = vmul.f32 %v1800, 0.001953125
  %v1805 = vmul.f32 %v1801, 0.001953125
  %v1806 = vmul.f32 %v1802, %v1802
  %v1807 = vmul.f32 %v1803, %v1803
  %v1808 = vsub.f32 %v1804, %v1806
  %v1809 = vsub.f32 %v1805, %v1807
  %v1810 = vadd.f32 %v1808, 1e-05
  %v1811 = vadd.f32 %v1809, 1e-05
  %v1812 = vrsqrt.pop %v1810
  %v1813 = vrsqrt.pop %v1811
  %1815 = vset.pattern.permute.xlu0 0
  %1816 = vperm.xlu0 %1815, %v1802
  %v1817 = vpop.permute.xlu0 %1816
  %1820 = vset.pattern.permute.xlu0 0
  %1821 = vperm.xlu0 %1820, %v1803
  %v1822 = vpop.permute.xlu0 %1821
  %v1824 = vsub.f32 %v1758, %v1817
  %v1825 = vsub.f32 %v1759, %v1817
  %v1826 = vsub.f32 %v1760, %v1822
  %v1827 = vsub.f32 %v1761, %v1822
  %v1828 = vsub.f32 %v1762, %v1817
  %v1829 = vsub.f32 %v1763, %v1817
  %v1830 = vsub.f32 %v1764, %v1822
  %v1831 = vsub.f32 %v1765, %v1822
  %1833 = vset.pattern.permute.xlu0 0
  %1834 = vperm.xlu0 %1833, %v1812
  %v1835 = vpop.permute.xlu0 %1834
  %1838 = vset.pattern.permute.xlu0 0
  %1839 = vperm.xlu0 %1838, %v1813
  %v1840 = vpop.permute.xlu0 %1839
  %v1842 = vmul.f32 %v1824, %v1835
  %v1843 = vmul.f32 %v1825, %v1835
  %v1844 = vmul.f32 %v1826, %v1840
  %v1845 = vmul.f32 %v1827, %v1840
  %v1846 = vmul.f32 %v1828, %v1835
  %v1847 = vmul.f32 %v1829, %v1835
  %v1848 = vmul.f32 %v1830, %v1840
  %v1849 = vmul.f32 %v1831, %v1840
  %v1850 = vld [vmem:[%s7] sm:$0xff]
  %v1851 = vld [vmem:[%s7 + $0x8] sm:$0xff]
  %v1852 = vld [vmem:[%s7 + $0x10] sm:$0xff]
  %v1853 = vld [vmem:[%s7 + $0x18] sm:$0xff]
  %1855 = vset.pattern.permute.xlu0 0
  %1856 = vperm.xlu0 %1855, %v1850
  %v1857 = vpop.permute.xlu0 %1856
  %1860 = vset.pattern.permute.xlu0 0
  %1861 = vperm.xlu0 %1860, %v1851
  %v1862 = vpop.permute.xlu0 %1861
  %1865 = vset.pattern.permute.xlu0 0
  %1866 = vperm.xlu0 %1865, %v1852
  %v1867 = vpop.permute.xlu0 %1866
  %1870 = vset.pattern.permute.xlu0 0
  %1871 = vperm.xlu0 %1870, %v1853
  %v1872 = vpop.permute.xlu0 %1871
  %v1874 = vmul.f32 %v1842, %v1857
  %v1875 = vmul.f32 %v1843, %v1857
  %v1876 = vmul.f32 %v1844, %v1862
  %v1877 = vmul.f32 %v1845, %v1862
  %v1878 = vmul.f32 %v1846, %v1867
  %v1879 = vmul.f32 %v1847, %v1867
  %v1880 = vmul.f32 %v1848, %v1872
  %v1881 = vmul.f32 %v1849, %v1872
  %v1882 = vld [vmem:[%s8] sm:$0xff]
  %v1883 = vld [vmem:[%s8 + $0x8] sm:$0xff]
  %v1884 = vld [vmem:[%s8 + $0x10] sm:$0xff]
  %v1885 = vld [vmem:[%s8 + $0x18] sm:$0xff]
  %1887 = vset.pattern.permute.xlu0 0
  %1888 = vperm.xlu0 %1887, %v1882
  %v1889 = vpop.permute.xlu0 %1888
  %1892 = vset.pattern.permute.xlu0 0
  %1893 = vperm.xlu0 %1892, %v1883
  %v1894 = vpop.permute.xlu0 %1893
  %1897 = vset.pattern.permute.xlu0 0
  %1898 = vperm.xlu0 %1897, %v1884
  %v1899 = vpop.permute.xlu0 %1898
  %1902 = vset.pattern.permute.xlu0 0
  %1903 = vperm.xlu0 %1902, %v1885
  %v1904 = vpop.permute.xlu0 %1903
  %v1906 = vadd.f32 %v1874, %v1889
  %v1907 = vadd.f32 %v1875, %v1889
  %v1908 = vadd.f32 %v1876, %v1894
  %v1909 = vadd.f32 %v1877, %v1894
  %v1910 = vadd.f32 %v1878, %v1899
  %v1911 = vadd.f32 %v1879, %v1899
  %v1912 = vadd.f32 %v1880, %v1904
  %v1913 = vadd.f32 %v1881, %v1904
  %v1914 = vpack.c.bf16 %v1908, %v1906
  %v1915 = vpack.c.bf16 %v1909, %v1907
  %v1916 = vpack.c.bf16 %v1912, %v1910
  %v1917 = vpack.c.bf16 %v1913, %v1911
  %v1918 = vld [vmem:[%s9] sm:$0xff]
  %v1919 = vld [vmem:[%s9 + $0x8] sm:$0xff]
  %v1920 = vld [vmem:[%s9 + $0x10] sm:$0xff]
  %v1921 = vld [vmem:[%s9 + $0x18] sm:$0xff]
  %v1922 = vld [vmem:[%s9 + $0x20] sm:$0xff]
  %v1923 = vld [vmem:[%s9 + $0x28] sm:$0xff]
  %v1924 = vld [vmem:[%s9 + $0x30] sm:$0xff]
  %v1925 = vld [vmem:[%s9 + $0x38] sm:$0xff]
  %v1926 = vld [vmem:[%s9 + $0x40] sm:$0xff]
  %v1927 = vld [vmem:[%s9 + $0x48] sm:$0xff]
  %v1928 = vld [vmem:[%s9 + $0x50] sm:$0xff]
  %v1929 = vld [vmem:[%s9 + $0x58] sm:$0xff]
  %v1930 = vld [vmem:[%s9 + $0x60] sm:$0xff]
  %v1931 = vld [vmem:[%s9 + $0x68] sm:$0xff]
  %v1932 = vld [vmem:[%s9 + $0x70] sm:$0xff]
  %v1933 = vld [vmem:[%s9 + $0x78] sm:$0xff]
  %v1934 = vld [vmem:[%s9 + $0x80] sm:$0xff]
  %v1935 = vld [vmem:[%s9 + $0x88] sm:$0xff]
  %v1936 = vld [vmem:[%s9 + $0x90] sm:$0xff]
  %v1937 = vld [vmem:[%s9 + $0x98] sm:$0xff]
  %v1938 = vld [vmem:[%s9 + $0xa0] sm:$0xff]
  %v1939 = vld [vmem:[%s9 + $0xa8] sm:$0xff]
  %v1940 = vld [vmem:[%s9 + $0xb0] sm:$0xff]
  %v1941 = vld [vmem:[%s9 + $0xb8] sm:$0xff]
  %v1942 = vld [vmem:[%s9 + $0xc0] sm:$0xff]
  %v1943 = vld [vmem:[%s9 + $0xc8] sm:$0xff]
  %v1944 = vld [vmem:[%s9 + $0xd0] sm:$0xff]
  %v1945 = vld [vmem:[%s9 + $0xd8] sm:$0xff]
  %v1946 = vld [vmem:[%s9 + $0xe0] sm:$0xff]
  %v1947 = vld [vmem:[%s9 + $0xe8] sm:$0xff]
  %v1948 = vld [vmem:[%s9 + $0xf0] sm:$0xff]
  %v1949 = vld [vmem:[%s9 + $0xf8] sm:$0xff]
  %v1950 = vld [vmem:[%s10] sm:$0x3]
  %v1952 = vlaneseq
  %v1953 = vshrl.u32 %v1952, 7
  %v1954 = vsub.s32 0, %v1953
  %v1955 = vrot.slane %v1950, %v1954
  %v1956 = vlaneseq
  %v1957 = vshrl.u32 %v1956, 7
  %v1958 = vsub.s32 1, %v1957
  %v1959 = vrot.slane %v1950, %v1958
  %v1994 = vunpack.c.l.b16 %v1918
  %v1995 = vunpack.c.h.b16 %v1918
  %v1996 = vunpack.c.l.b16 %v1919
  %v1997 = vunpack.c.h.b16 %v1919
  %v1998 = vunpack.c.l.b16 %v1920
  %v1999 = vunpack.c.h.b16 %v1920
  %v2000 = vunpack.c.l.b16 %v1921
  %v2001 = vunpack.c.h.b16 %v1921
  %v2002 = vunpack.c.l.b16 %v1922
  %v2003 = vunpack.c.h.b16 %v1922
  %v2004 = vunpack.c.l.b16 %v1923
  %v2005 = vunpack.c.h.b16 %v1923
  %v2006 = vunpack.c.l.b16 %v1924
  %v2007 = vunpack.c.h.b16 %v1924
  %v2008 = vunpack.c.l.b16 %v1925
  %v2009 = vunpack.c.h.b16 %v1925
  %v2010 = vunpack.c.l.b16 %v1926
  %v2011 = vunpack.c.h.b16 %v1926
  %v2012 = vunpack.c.l.b16 %v1927
  %v2013 = vunpack.c.h.b16 %v1927
  %v2014 = vunpack.c.l.b16 %v1928
  %v2015 = vunpack.c.h.b16 %v1928
  %v2016 = vunpack.c.l.b16 %v1929
  %v2017 = vunpack.c.h.b16 %v1929
  %v2018 = vunpack.c.l.b16 %v1930
  %v2019 = vunpack.c.h.b16 %v1930
  %v2020 = vunpack.c.l.b16 %v1931
  %v2021 = vunpack.c.h.b16 %v1931
  %v2022 = vunpack.c.l.b16 %v1932
  %v2023 = vunpack.c.h.b16 %v1932
  %v2024 = vunpack.c.l.b16 %v1933
  %v2025 = vunpack.c.h.b16 %v1933
  %v2026 = vunpack.c.l.b16 %v1934
  %v2027 = vunpack.c.h.b16 %v1934
  %v2028 = vunpack.c.l.b16 %v1935
  %v2029 = vunpack.c.h.b16 %v1935
  %v2030 = vunpack.c.l.b16 %v1936
  %v2031 = vunpack.c.h.b16 %v1936
  %v2032 = vunpack.c.l.b16 %v1937
  %v2033 = vunpack.c.h.b16 %v1937
  %v2034 = vunpack.c.l.b16 %v1938
  %v2035 = vunpack.c.h.b16 %v1938
  %v2036 = vunpack.c.l.b16 %v1939
  %v2037 = vunpack.c.h.b16 %v1939
  %v2038 = vunpack.c.l.b16 %v1940
  %v2039 = vunpack.c.h.b16 %v1940
  %v2040 = vunpack.c.l.b16 %v1941
  %v2041 = vunpack.c.h.b16 %v1941
  %v2042 = vunpack.c.l.b16 %v1942
  %v2043 = vunpack.c.h.b16 %v1942
  %v2044 = vunpack.c.l.b16 %v1943
  %v2045 = vunpack.c.h.b16 %v1943
  %v2046 = vunpack.c.l.b16 %v1944
  %v2047 = vunpack.c.h.b16 %v1944
  %v2048 = vunpack.c.l.b16 %v1945
  %v2049 = vunpack.c.h.b16 %v1945
  %v2050 = vunpack.c.l.b16 %v1946
  %v2051 = vunpack.c.h.b16 %v1946
  %v2052 = vunpack.c.l.b16 %v1947
  %v2053 = vunpack.c.h.b16 %v1947
  %v2054 = vunpack.c.l.b16 %v1948
  %v2055 = vunpack.c.h.b16 %v1948
  %v2056 = vunpack.c.l.b16 %v1949
  %v2057 = vunpack.c.h.b16 %v1949
  %v2058 = vpack.c.b16 %v1996, %v1994
  %v2059 = vpack.c.b16 %v1997, %v1995
  %v2060 = vpack.c.b16 %v2000, %v1998
  %v2061 = vpack.c.b16 %v2001, %v1999
  %v2062 = vpack.c.b16 %v2004, %v2002
  %v2063 = vpack.c.b16 %v2005, %v2003
  %v2064 = vpack.c.b16 %v2008, %v2006
  %v2065 = vpack.c.b16 %v2009, %v2007
  %v2066 = vpack.c.b16 %v2012, %v2010
  %v2067 = vpack.c.b16 %v2013, %v2011
  %v2068 = vpack.c.b16 %v2016, %v2014
  %v2069 = vpack.c.b16 %v2017, %v2015
  %v2070 = vpack.c.b16 %v2020, %v2018
  %v2071 = vpack.c.b16 %v2021, %v2019
  %v2072 = vpack.c.b16 %v2024, %v2022
  %v2073 = vpack.c.b16 %v2025, %v2023
  %v2074 = vpack.c.b16 %v2028, %v2026
  %v2075 = vpack.c.b16 %v2029, %v2027
  %v2076 = vpack.c.b16 %v2032, %v2030
  %v2077 = vpack.c.b16 %v2033, %v2031
  %v2078 = vpack.c.b16 %v2036, %v2034
  %v2079 = vpack.c.b16 %v2037, %v2035
  %v2080 = vpack.c.b16 %v2040, %v2038
  %v2081 = vpack.c.b16 %v2041, %v2039
  %v2082 = vpack.c.b16 %v2044, %v2042
  %v2083 = vpack.c.b16 %v2045, %v2043
  %v2084 = vpack.c.b16 %v2048, %v2046
  %v2085 = vpack.c.b16 %v2049, %v2047
  %v2086 = vpack.c.b16 %v2052, %v2050
  %v2087 = vpack.c.b16 %v2053, %v2051
  %v2088 = vpack.c.b16 %v2056, %v2054
  %v2089 = vpack.c.b16 %v2057, %v2055
  %2122 = vmatprep.subr.bf16.mxu0 %v2059
  %2123 = vmatpush1.bf16.msra.mxu0 %v2058
  %2124 = vmatprep.subr.bf16.mxu0 %v2061
  %2125 = vmatpush1.bf16.msra.mxu0 %v2060
  %2126 = vmatprep.subr.bf16.mxu0 %v2063
  %2127 = vmatpush1.bf16.msra.mxu0 %v2062
  %2128 = vmatprep.subr.bf16.mxu0 %v2065
  %2129 = vmatpush1.bf16.msra.mxu0 %v2064
  %2130 = vmatprep.subr.bf16.mxu0 %v2067
  %2131 = vmatpush1.bf16.msra.mxu0 %v2066
  %2132 = vmatprep.subr.bf16.mxu0 %v2069
  %2133 = vmatpush1.bf16.msra.mxu0 %v2068
  %2134 = vmatprep.subr.bf16.mxu0 %v2071
  %2135 = vmatpush1.bf16.msra.mxu0 %v2070
  %2136 = vmatprep.subr.bf16.mxu0 %v2073
  %2137 = vmatpush1.bf16.msra.mxu0 %v2072
  %2138 = vmatprep.subr.bf16.mxu0 %v2075
  %2139 = vmatpush1.bf16.msra.mxu0 %v2074
  %2140 = vmatprep.subr.bf16.mxu0 %v2077
  %2141 = vmatpush1.bf16.msra.mxu0 %v2076
  %2142 = vmatprep.subr.bf16.mxu0 %v2079
  %2143 = vmatpush1.bf16.msra.mxu0 %v2078
  %2144 = vmatprep.subr.bf16.mxu0 %v2081
  %2145 = vmatpush1.bf16.msra.mxu0 %v2080
  %2146 = vmatprep.subr.bf16.mxu0 %v2083
  %2147 = vmatpush1.bf16.msra.mxu0 %v2082
  %2148 = vmatprep.subr.bf16.mxu0 %v2085
  %2149 = vmatpush1.bf16.msra.mxu0 %v2084
  %2150 = vmatprep.subr.bf16.mxu0 %v2087
  %2151 = vmatpush1.bf16.msra.mxu0 %v2086
  %2152 = vmatprep.subr.bf16.mxu0 %v2089
  %2153 = vmatpush1.bf16.msra.mxu0 %v2088
  %2154 = vmatprep.mubr.bf16.mxu0 %v1915
  %2155 = vmatmul.mubr.bf16.gmra.mrb[0].mxu0 %v1914
  %v2156 = vpop.f32.mrb[0].mxu0
  %v2157 = vadd.f32 %v1955, %v2156
  %v2158 = vpop.f32.mrb[0].mxu0
  %v2159 = vadd.f32 %v1959, %v2158
  %v2160 = vpop.f32.mrb[0].mxu0
  %v2161 = vadd.f32 %v1955, %v2160
  %v2162 = vpop.f32.mrb[0].mxu0
  %v2163 = vadd.f32 %v1959, %v2162
  %2164 = vmatprep.mubr.bf16.mxu0 %v1917
  %2165 = vmatmul.mubr.bf16.gmra.mrb[0].mxu0 %v1916
  %v2166 = vpop.f32.mrb[0].mxu0
  %v2167 = vadd.f32 %v1955, %v2166
  %v2168 = vpop.f32.mrb[0].mxu0
  %v2169 = vadd.f32 %v1959, %v2168
  %v2170 = vpop.f32.mrb[0].mxu0
  %v2171 = vadd.f32 %v1955, %v2170
  %v2172 = vpop.f32.mrb[0].mxu0
  %v2173 = vadd.f32 %v1959, %v2172
  %2174 = vdwg.mxu0
  %s2175 = scalar_lea.vmem %s9, 256
  %v2176 = vld [vmem:[%s2175] sm:$0xff]
  %v2177 = vld [vmem:[%s2175 + $0x8] sm:$0xff]
  %v2178 = vld [vmem:[%s2175 + $0x10] sm:$0xff]
  %v2179 = vld [vmem:[%s2175 + $0x18] sm:$0xff]
  %v2180 = vld [vmem:[%s2175 + $0x20] sm:$0xff]
  %v2181 = vld [vmem:[%s2175 + $0x28] sm:$0xff]
  %v2182 = vld [vmem:[%s2175 + $0x30] sm:$0xff]
  %v2183 = vld [vmem:[%s2175 + $0x38] sm:$0xff]
  %v2184 = vld [vmem:[%s2175 + $0x40] sm:$0xff]
  %v2185 = vld [vmem:[%s2175 + $0x48] sm:$0xff]
  %v2186 = vld [vmem:[%s2175 + $0x50] sm:$0xff]
  %v2187 = vld [vmem:[%s2175 + $0x58] sm:$0xff]
  %v2188 = vld [vmem:[%s2175 + $0x60] sm:$0xff]
  %v2189 = vld [vmem:[%s2175 + $0x68] sm:$0xff]
  %v2190 = vld [vmem:[%s2175 + $0x70] sm:$0xff]
  %v2191 = vld [vmem:[%s2175 + $0x78] sm:$0xff]
  %v2192 = vld [vmem:[%s2175 + $0x80] sm:$0xff]
  %v2193 = vld [vmem:[%s2175 + $0x88] sm:$0xff]
  %v2194 = vld [vmem:[%s2175 + $0x90] sm:$0xff]
  %v2195 = vld [vmem:[%s2175 + $0x98] sm:$0xff]
  %v2196 = vld [vmem:[%s2175 + $0xa0] sm:$0xff]
  %v2197 = vld [vmem:[%s2175 + $0xa8] sm:$0xff]
  %v2198 = vld [vmem:[%s2175 + $0xb0] sm:$0xff]
  %v2199 = vld [vmem:[%s2175 + $0xb8] sm:$0xff]
  %v2200 = vld [vmem:[%s2175 + $0xc0] sm:$0xff]
  %v2201 = vld [vmem:[%s2175 + $0xc8] sm:$0xff]
  %v2202 = vld [vmem:[%s2175 + $0xd0] sm:$0xff]
  %v2203 = vld [vmem:[%s2175 + $0xd8] sm:$0xff]
  %v2204 = vld [vmem:[%s2175 + $0xe0] sm:$0xff]
  %v2205 = vld [vmem:[%s2175 + $0xe8] sm:$0xff]
  %v2206 = vld [vmem:[%s2175 + $0xf0] sm:$0xff]
  %v2207 = vld [vmem:[%s2175 + $0xf8] sm:$0xff]
  %s2208 = scalar_lea.vmem %s10, 2
  %v2209 = vld [vmem:[%s2208] sm:$0x3]
  %v2211 = vlaneseq
  %v2212 = vshrl.u32 %v2211, 7
  %v2213 = vsub.s32 0, %v2212
  %v2214 = vrot.slane %v2209, %v2213
  %v2215 = vlaneseq
  %v2216 = vshrl.u32 %v2215, 7
  %v2217 = vsub.s32 1, %v2216
  %v2218 = vrot.slane %v2209, %v2217
  %v2253 = vunpack.c.l.b16 %v2176
  %v2254 = vunpack.c.h.b16 %v2176
  %v2255 = vunpack.c.l.b16 %v2177
  %v2256 = vunpack.c.h.b16 %v2177
  %v2257 = vunpack.c.l.b16 %v2178
  %v2258 = vunpack.c.h.b16 %v2178
  %v2259 = vunpack.c.l.b16 %v2179
  %v2260 = vunpack.c.h.b16 %v2179
  %v2261 = vunpack.c.l.b16 %v2180
  %v2262 = vunpack.c.h.b16 %v2180
  %v2263 = vunpack.c.l.b16 %v2181
  %v2264 = vunpack.c.h.b16 %v2181
  %v2265 = vunpack.c.l.b16 %v2182
  %v2266 = vunpack.c.h.b16 %v2182
  %v2267 = vunpack.c.l.b16 %v2183
  %v2268 = vunpack.c.h.b16 %v2183
  %v2269 = vunpack.c.l.b16 %v2184
  %v2270 = vunpack.c.h.b16 %v2184
  %v2271 = vunpack.c.l.b16 %v2185
  %v2272 = vunpack.c.h.b16 %v2185
  %v2273 = vunpack.c.l.b16 %v2186
  %v2274 = vunpack.c.h.b16 %v2186
  %v2275 = vunpack.c.l.b16 %v2187
  %v2276 = vunpack.c.h.b16 %v2187
  %v2277 = vunpack.c.l.b16 %v2188
  %v2278 = vunpack.c.h.b16 %v2188
  %v2279 = vunpack.c.l.b16 %v2189
  %v2280 = vunpack.c.h.b16 %v2189
  %v2281 = vunpack.c.l.b16 %v2190
  %v2282 = vunpack.c.h.b16 %v2190
  %v2283 = vunpack.c.l.b16 %v2191
  %v2284 = vunpack.c.h.b16 %v2191
  %v2285 = vunpack.c.l.b16 %v2192
  %v2286 = vunpack.c.h.b16 %v2192
  %v2287 = vunpack.c.l.b16 %v2193
  %v2288 = vunpack.c.h.b16 %v2193
  %v2289 = vunpack.c.l.b16 %v2194
  %v2290 = vunpack.c.h.b16 %v2194
  %v2291 = vunpack.c.l.b16 %v2195
  %v2292 = vunpack.c.h.b16 %v2195
  %v2293 = vunpack.c.l.b16 %v2196
  %v2294 = vunpack.c.h.b16 %v2196
  %v2295 = vunpack.c.l.b16 %v2197
  %v2296 = vunpack.c.h.b16 %v2197
  %v2297 = vunpack.c.l.b16 %v2198
  %v2298 = vunpack.c.h.b16 %v2198
  %v2299 = vunpack.c.l.b16 %v2199
  %v2300 = vunpack.c.h.b16 %v2199
  %v2301 = vunpack.c.l.b16 %v2200
  %v2302 = vunpack.c.h.b16 %v2200
  %v2303 = vunpack.c.l.b16 %v2201
  %v2304 = vunpack.c.h.b16 %v2201
  %v2305 = vunpack.c.l.b16 %v2202
  %v2306 = vunpack.c.h.b16 %v2202
  %v2307 = vunpack.c.l.b16 %v2203
  %v2308 = vunpack.c.h.b16 %v2203
  %v2309 = vunpack.c.l.b16 %v2204
  %v2310 = vunpack.c.h.b16 %v2204
  %v2311 = vunpack.c.l.b16 %v2205
  %v2312 = vunpack.c.h.b16 %v2205
  %v2313 = vunpack.c.l.b16 %v2206
  %v2314 = vunpack.c.h.b16 %v2206
  %v2315 = vunpack.c.l.b16 %v2207
  %v2316 = vunpack.c.h.b16 %v2207
  %v2317 = vpack.c.b16 %v2255, %v2253
  %v2318 = vpack.c.b16 %v2256, %v2254
  %v2319 = vpack.c.b16 %v2259, %v2257
  %v2320 = vpack.c.b16 %v2260, %v2258
  %v2321 = vpack.c.b16 %v2263, %v2261
  %v2322 = vpack.c.b16 %v2264, %v2262
  %v2323 = vpack.c.b16 %v2267, %v2265
  %v2324 = vpack.c.b16 %v2268, %v2266
  %v2325 = vpack.c.b16 %v2271, %v2269
  %v2326 = vpack.c.b16 %v2272, %v2270
  %v2327 = vpack.c.b16 %v2275, %v2273
  %v2328 = vpack.c.b16 %v2276, %v2274
  %v2329 = vpack.c.b16 %v2279, %v2277
  %v2330 = vpack.c.b16 %v2280, %v2278
  %v2331 = vpack.c.b16 %v2283, %v2281
  %v2332 = vpack.c.b16 %v2284, %v2282
  %v2333 = vpack.c.b16 %v2287, %v2285
  %v2334 = vpack.c.b16 %v2288, %v2286
  %v2335 = vpack.c.b16 %v2291, %v2289
  %v2336 = vpack.c.b16 %v2292, %v2290
  %v2337 = vpack.c.b16 %v2295, %v2293
  %v2338 = vpack.c.b16 %v2296, %v2294
  %v2339 = vpack.c.b16 %v2299, %v2297
  %v2340 = vpack.c.b16 %v2300, %v2298
  %v2341 = vpack.c.b16 %v2303, %v2301
  %v2342 = vpack.c.b16 %v2304, %v2302
  %v2343 = vpack.c.b16 %v2307, %v2305
  %v2344 = vpack.c.b16 %v2308, %v2306
  %v2345 = vpack.c.b16 %v2311, %v2309
  %v2346 = vpack.c.b16 %v2312, %v2310
  %v2347 = vpack.c.b16 %v2315, %v2313
  %v2348 = vpack.c.b16 %v2316, %v2314
  %2381 = vmatprep.subr.bf16.mxu0 %v2318
  %2382 = vmatpush1.bf16.msra.mxu0 %v2317
  %2383 = vmatprep.subr.bf16.mxu0 %v2320
  %2384 = vmatpush1.bf16.msra.mxu0 %v2319
  %2385 = vmatprep.subr.bf16.mxu0 %v2322
  %2386 = vmatpush1.bf16.msra.mxu0 %v2321
  %2387 = vmatprep.subr.bf16.mxu0 %v2324
  %2388 = vmatpush1.bf16.msra.mxu0 %v2323
  %2389 = vmatprep.subr.bf16.mxu0 %v2326
  %2390 = vmatpush1.bf16.msra.mxu0 %v2325
  %2391 = vmatprep.subr.bf16.mxu0 %v2328
  %2392 = vmatpush1.bf16.msra.mxu0 %v2327
  %2393 = vmatprep.subr.bf16.mxu0 %v2330
  %2394 = vmatpush1.bf16.msra.mxu0 %v2329
  %2395 = vmatprep.subr.bf16.mxu0 %v2332
  %2396 = vmatpush1.bf16.msra.mxu0 %v2331
  %2397 = vmatprep.subr.bf16.mxu0 %v2334
  %2398 = vmatpush1.bf16.msra.mxu0 %v2333
  %2399 = vmatprep.subr.bf16.mxu0 %v2336
  %2400 = vmatpush1.bf16.msra.mxu0 %v2335
  %2401 = vmatprep.subr.bf16.mxu0 %v2338
  %2402 = vmatpush1.bf16.msra.mxu0 %v2337
  %2403 = vmatprep.subr.bf16.mxu0 %v2340
  %2404 = vmatpush1.bf16.msra.mxu0 %v2339
  %2405 = vmatprep.subr.bf16.mxu0 %v2342
  %2406 = vmatpush1.bf16.msra.mxu0 %v2341
  %2407 = vmatprep.subr.bf16.mxu0 %v2344
  %2408 = vmatpush1.bf16.msra.mxu0 %v2343
  %2409 = vmatprep.subr.bf16.mxu0 %v2346
  %2410 = vmatpush1.bf16.msra.mxu0 %v2345
  %2411 = vmatprep.subr.bf16.mxu0 %v2348
  %2412 = vmatpush1.bf16.msra.mxu0 %v2347
  %2413 = vmatprep.mubr.bf16.mxu0 %v1915
  %2414 = vmatmul.mubr.bf16.gmra.mrb[0].mxu0 %v1914
  %v2415 = vpop.f32.mrb[0].mxu0
  %v2416 = vadd.f32 %v2214, %v2415
  %v2417 = vpop.f32.mrb[0].mxu0
  %v2418 = vadd.f32 %v2218, %v2417
  %v2419 = vpop.f32.mrb[0].mxu0
  %v2420 = vadd.f32 %v2214, %v2419
  %v2421 = vpop.f32.mrb[0].mxu0
  %v2422 = vadd.f32 %v2218, %v2421
  %2423 = vmatprep.mubr.bf16.mxu0 %v1917
  %2424 = vmatmul.mubr.bf16.gmra.mrb[0].mxu0 %v1916
  %v2425 = vpop.f32.mrb[0].mxu0
  %v2426 = vadd.f32 %v2214, %v2425
  %v2427 = vpop.f32.mrb[0].mxu0
  %v2428 = vadd.f32 %v2218, %v2427
  %v2429 = vpop.f32.mrb[0].mxu0
  %v2430 = vadd.f32 %v2214, %v2429
  %v2431 = vpop.f32.mrb[0].mxu0
  %v2432 = vadd.f32 %v2218, %v2431
  %2433 = vdwg.mxu0
  %s2434 = scalar_lea.vmem %s9, 512
  %v2435 = vld [vmem:[%s2434] sm:$0xff]
  %v2436 = vld [vmem:[%s2434 + $0x8] sm:$0xff]
  %v2437 = vld [vmem:[%s2434 + $0x10] sm:$0xff]
  %v2438 = vld [vmem:[%s2434 + $0x18] sm:$0xff]
  %v2439 = vld [vmem:[%s2434 + $0x20] sm:$0xff]
  %v2440 = vld [vmem:[%s2434 + $0x28] sm:$0xff]
  %v2441 = vld [vmem:[%s2434 + $0x30] sm:$0xff]
  %v2442 = vld [vmem:[%s2434 + $0x38] sm:$0xff]
  %v2443 = vld [vmem:[%s2434 + $0x40] sm:$0xff]
  %v2444 = vld [vmem:[%s2434 + $0x48] sm:$0xff]
  %v2445 = vld [vmem:[%s2434 + $0x50] sm:$0xff]
  %v2446 = vld [vmem:[%s2434 + $0x58] sm:$0xff]
  %v2447 = vld [vmem:[%s2434 + $0x60] sm:$0xff]
  %v2448 = vld [vmem:[%s2434 + $0x68] sm:$0xff]
  %v2449 = vld [vmem:[%s2434 + $0x70] sm:$0xff]
  %v2450 = vld [vmem:[%s2434 + $0x78] sm:$0xff]
  %v2451 = vld [vmem:[%s2434 + $0x80] sm:$0xff]
  %v2452 = vld [vmem:[%s2434 + $0x88] sm:$0xff]
  %v2453 = vld [vmem:[%s2434 + $0x90] sm:$0xff]
  %v2454 = vld [vmem:[%s2434 + $0x98] sm:$0xff]
  %v2455 = vld [vmem:[%s2434 + $0xa0] sm:$0xff]
  %v2456 = vld [vmem:[%s2434 + $0xa8] sm:$0xff]
  %v2457 = vld [vmem:[%s2434 + $0xb0] sm:$0xff]
  %v2458 = vld [vmem:[%s2434 + $0xb8] sm:$0xff]
  %v2459 = vld [vmem:[%s2434 + $0xc0] sm:$0xff]
  %v2460 = vld [vmem:[%s2434 + $0xc8] sm:$0xff]
  %v2461 = vld [vmem:[%s2434 + $0xd0] sm:$0xff]
  %v2462 = vld [vmem:[%s2434 + $0xd8] sm:$0xff]
  %v2463 = vld [vmem:[%s2434 + $0xe0] sm:$0xff]
  %v2464 = vld [vmem:[%s2434 + $0xe8] sm:$0xff]
  %v2465 = vld [vmem:[%s2434 + $0xf0] sm:$0xff]
  %v2466 = vld [vmem:[%s2434 + $0xf8] sm:$0xff]
  %s2467 = scalar_lea.vmem %s10, 4
  %v2468 = vld [vmem:[%s2467] sm:$0x3]
  %v2470 = vlaneseq
  %v2471 = vshrl.u32 %v2470, 7
  %v2472 = vsub.s32 0, %v2471
  %v2473 = vrot.slane %v2468, %v2472
  %v2474 = vlaneseq
  %v2475 = vshrl.u32 %v2474, 7
  %v2476 = vsub.s32 1, %v2475
  %v2477 = vrot.slane %v2468, %v2476
  %v2512 = vunpack.c.l.b16 %v2435
  %v2513 = vunpack.c.h.b16 %v2435
  %v2514 = vunpack.c.l.b16 %v2436
  %v2515 = vunpack.c.h.b16 %v2436
  %v2516 = vunpack.c.l.b16 %v2437
  %v2517 = vunpack.c.h.b16 %v2437
  %v2518 = vunpack.c.l.b16 %v2438
  %v2519 = vunpack.c.h.b16 %v2438
  %v2520 = vunpack.c.l.b16 %v2439
  %v2521 = vunpack.c.h.b16 %v2439
  %v2522 = vunpack.c.l.b16 %v2440
  %v2523 = vunpack.c.h.b16 %v2440
  %v2524 = vunpack.c.l.b16 %v2441
  %v2525 = vunpack.c.h.b16 %v2441
  %v2526 = vunpack.c.l.b16 %v2442
  %v2527 = vunpack.c.h.b16 %v2442
  %v2528 = vunpack.c.l.b16 %v2443
  %v2529 = vunpack.c.h.b16 %v2443
  %v2530 = vunpack.c.l.b16 %v2444
  %v2531 = vunpack.c.h.b16 %v2444
  %v2532 = vunpack.c.l.b16 %v2445
  %v2533 = vunpack.c.h.b16 %v2445
  %v2534 = vunpack.c.l.b16 %v2446
  %v2535 = vunpack.c.h.b16 %v2446
  %v2536 = vunpack.c.l.b16 %v2447
  %v2537 = vunpack.c.h.b16 %v2447
  %v2538 = vunpack.c.l.b16 %v2448
  %v2539 = vunpack.c.h.b16 %v2448
  %v2540 = vunpack.c.l.b16 %v2449
  %v2541 = vunpack.c.h.b16 %v2449
  %v2542 = vunpack.c.l.b16 %v2450
  %v2543 = vunpack.c.h.b16 %v2450
  %v2544 = vunpack.c.l.b16 %v2451
  %v2545 = vunpack.c.h.b16 %v2451
  %v2546 = vunpack.c.l.b16 %v2452
  %v2547 = vunpack.c.h.b16 %v2452
  %v2548 = vunpack.c.l.b16 %v2453
  %v2549 = vunpack.c.h.b16 %v2453
  %v2550 = vunpack.c.l.b16 %v2454
  %v2551 = vunpack.c.h.b16 %v2454
  %v2552 = vunpack.c.l.b16 %v2455
  %v2553 = vunpack.c.h.b16 %v2455
  %v2554 = vunpack.c.l.b16 %v2456
  %v2555 = vunpack.c.h.b16 %v2456
  %v2556 = vunpack.c.l.b16 %v2457
  %v2557 = vunpack.c.h.b16 %v2457
  %v2558 = vunpack.c.l.b16 %v2458
  %v2559 = vunpack.c.h.b16 %v2458
  %v2560 = vunpack.c.l.b16 %v2459
  %v2561 = vunpack.c.h.b16 %v2459
  %v2562 = vunpack.c.l.b16 %v2460
  %v2563 = vunpack.c.h.b16 %v2460
  %v2564 = vunpack.c.l.b16 %v2461
  %v2565 = vunpack.c.h.b16 %v2461
  %v2566 = vunpack.c.l.b16 %v2462
  %v2567 = vunpack.c.h.b16 %v2462
  %v2568 = vunpack.c.l.b16 %v2463
  %v2569 = vunpack.c.h.b16 %v2463
  %v2570 = vunpack.c.l.b16 %v2464
  %v2571 = vunpack.c.h.b16 %v2464
  %v2572 = vunpack.c.l.b16 %v2465
  %v2573 = vunpack.c.h.b16 %v2465
  %v2574 = vunpack.c.l.b16 %v2466
  %v2575 = vunpack.c.h.b16 %v2466
  %v2576 = vpack.c.b16 %v2514, %v2512
  %v2577 = vpack.c.b16 %v2515, %v2513
  %v2578 = vpack.c.b16 %v2518, %v2516
  %v2579 = vpack.c.b16 %v2519, %v2517
  %v2580 = vpack.c.b16 %v2522, %v2520
  %v2581 = vpack.c.b16 %v2523, %v2521
  %v2582 = vpack.c.b16 %v2526, %v2524
  %v2583 = vpack.c.b16 %v2527, %v2525
  %v2584 = vpack.c.b16 %v2530, %v2528
  %v2585 = vpack.c.b16 %v2531, %v2529
  %v2586 = vpack.c.b16 %v2534, %v2532
  %v2587 = vpack.c.b16 %v2535, %v2533
  %v2588 = vpack.c.b16 %v2538, %v2536
  %v2589 = vpack.c.b16 %v2539, %v2537
  %v2590 = vpack.c.b16 %v2542, %v2540
  %v2591 = vpack.c.b16 %v2543, %v2541
  %v2592 = vpack.c.b16 %v2546, %v2544
  %v2593 = vpack.c.b16 %v2547, %v2545
  %v2594 = vpack.c.b16 %v2550, %v2548
  %v2595 = vpack.c.b16 %v2551, %v2549
  %v2596 = vpack.c.b16 %v2554, %v2552
  %v2597 = vpack.c.b16 %v2555, %v2553
  %v2598 = vpack.c.b16 %v2558, %v2556
  %v2599 = vpack.c.b16 %v2559, %v2557
  %v2600 = vpack.c.b16 %v2562, %v2560
  %v2601 = vpack.c.b16 %v2563, %v2561
  %v2602 = vpack.c.b16 %v2566, %v2564
  %v2603 = vpack.c.b16 %v2567, %v2565
  %v2604 = vpack.c.b16 %v2570, %v2568
  %v2605 = vpack.c.b16 %v2571, %v2569
  %v2606 = vpack.c.b16 %v2574, %v2572
  %v2607 = vpack.c.b16 %v2575, %v2573
  %2640 = vmatprep.subr.bf16.mxu0 %v2577
  %2641 = vmatpush1.bf16.msra.mxu0 %v2576
  %2642 = vmatprep.subr.bf16.mxu0 %v2579
  %2643 = vmatpush1.bf16.msra.mxu0 %v2578
  %2644 = vmatprep.subr.bf16.mxu0 %v2581
  %2645 = vmatpush1.bf16.msra.mxu0 %v2580
  %2646 = vmatprep.subr.bf16.mxu0 %v2583
  %2647 = vmatpush1.bf16.msra.mxu0 %v2582
  %2648 = vmatprep.subr.bf16.mxu0 %v2585
  %2649 = vmatpush1.bf16.msra.mxu0 %v2584
  %2650 = vmatprep.subr.bf16.mxu0 %v2587
  %2651 = vmatpush1.bf16.msra.mxu0 %v2586
  %2652 = vmatprep.subr.bf16.mxu0 %v2589
  %2653 = vmatpush1.bf16.msra.mxu0 %v2588
  %2654 = vmatprep.subr.bf16.mxu0 %v2591
  %2655 = vmatpush1.bf16.msra.mxu0 %v2590
  %2656 = vmatprep.subr.bf16.mxu0 %v2593
  %2657 = vmatpush1.bf16.msra.mxu0 %v2592
  %2658 = vmatprep.subr.bf16.mxu0 %v2595
  %2659 = vmatpush1.bf16.msra.mxu0 %v2594
  %2660 = vmatprep.subr.bf16.mxu0 %v2597
  %2661 = vmatpush1.bf16.msra.mxu0 %v2596
  %2662 = vmatprep.subr.bf16.mxu0 %v2599
  %2663 = vmatpush1.bf16.msra.mxu0 %v2598
  %2664 = vmatprep.subr.bf16.mxu0 %v2601
  %2665 = vmatpush1.bf16.msra.mxu0 %v2600
  %2666 = vmatprep.subr.bf16.mxu0 %v2603
  %2667 = vmatpush1.bf16.msra.mxu0 %v2602
  %2668 = vmatprep.subr.bf16.mxu0 %v2605
  %2669 = vmatpush1.bf16.msra.mxu0 %v2604
  %2670 = vmatprep.subr.bf16.mxu0 %v2607
  %2671 = vmatpush1.bf16.msra.mxu0 %v2606
  %2672 = vmatprep.mubr.bf16.mxu0 %v1915
  %2673 = vmatmul.mubr.bf16.gmra.mrb[0].mxu0 %v1914
  %v2674 = vpop.f32.mrb[0].mxu0
  %v2675 = vadd.f32 %v2473, %v2674
  %v2676 = vpop.f32.mrb[0].mxu0
  %v2677 = vadd.f32 %v2477, %v2676
  %v2678 = vpop.f32.mrb[0].mxu0
  %v2679 = vadd.f32 %v2473, %v2678
  %v2680 = vpop.f32.mrb[0].mxu0
  %v2681 = vadd.f32 %v2477, %v2680
  %2682 = vmatprep.mubr.bf16.mxu0 %v1917
  %2683 = vmatmul.mubr.bf16.gmra.mrb[0].mxu0 %v1916
  %v2684 = vpop.f32.mrb[0].mxu0
  %v2685 = vadd.f32 %v2473, %v2684
  %v2686 = vpop.f32.mrb[0].mxu0
  %v2687 = vadd.f32 %v2477, %v2686
  %v2688 = vpop.f32.mrb[0].mxu0
  %v2689 = vadd.f32 %v2473, %v2688
  %v2690 = vpop.f32.mrb[0].mxu0
  %v2691 = vadd.f32 %v2477, %v2690
  %2692 = vdwg.mxu0
  %v2693 = vxor.u32 %v2416, 2147483648
  %v2694 = vxor.u32 %v2418, 2147483648
  %v2695 = vxor.u32 %v2420, 2147483648
  %v2696 = vxor.u32 %v2422, 2147483648
  %v2697 = vxor.u32 %v2426, 2147483648
  %v2698 = vxor.u32 %v2428, 2147483648
  %v2699 = vxor.u32 %v2430, 2147483648
  %v2700 = vxor.u32 %v2432, 2147483648
  %v2701 = vmul.f32 %v2693, 1.442695
  %v2702 = vpow.pop %v2701
  %v2703 = vmul.f32 %v2694, 1.442695
  %v2704 = vpow.pop %v2703
  %v2705 = vmul.f32 %v2695, 1.442695
  %v2706 = vpow.pop %v2705
  %v2707 = vmul.f32 %v2696, 1.442695
  %v2708 = vpow.pop %v2707
  %v2709 = vmul.f32 %v2697, 1.442695
  %v2710 = vpow.pop %v2709
  %v2711 = vmul.f32 %v2698, 1.442695
  %v2712 = vpow.pop %v2711
  %v2713 = vmul.f32 %v2699, 1.442695
  %v2714 = vpow.pop %v2713
  %v2715 = vmul.f32 %v2700, 1.442695
  %v2716 = vpow.pop %v2715
  %v2717 = vadd.f32 %v2702, 1.0
  %v2718 = vadd.f32 %v2704, 1.0
  %v2719 = vadd.f32 %v2706, 1.0
  %v2720 = vadd.f32 %v2708, 1.0
  %v2721 = vadd.f32 %v2710, 1.0
  %v2722 = vadd.f32 %v2712, 1.0
  %v2723 = vadd.f32 %v2714, 1.0
  %v2724 = vadd.f32 %v2716, 1.0
  %v2725 = vrcp.pop %v2717
  %v2726 = vmul.f32 1.0, %v2725
  %v2727 = vrcp.pop %v2718
  %v2728 = vmul.f32 1.0, %v2727
  %v2729 = vrcp.pop %v2719
  %v2730 = vmul.f32 1.0, %v2729
  %v2731 = vrcp.pop %v2720
  %v2732 = vmul.f32 1.0, %v2731
  %v2733 = vrcp.pop %v2721
  %v2734 = vmul.f32 1.0, %v2733
  %v2735 = vrcp.pop %v2722
  %v2736 = vmul.f32 1.0, %v2735
  %v2737 = vrcp.pop %v2723
  %v2738 = vmul.f32 1.0, %v2737
  %v2739 = vrcp.pop %v2724
  %v2740 = vmul.f32 1.0, %v2739
  %v2741 = vadd.f32 %v2157, %v2726
  %v2742 = vadd.f32 %v2159, %v2728
  %v2743 = vadd.f32 %v2161, %v2730
  %v2744 = vadd.f32 %v2163, %v2732
  %v2745 = vadd.f32 %v2167, %v2734
  %v2746 = vadd.f32 %v2169, %v2736
  %v2747 = vadd.f32 %v2171, %v2738
  %v2748 = vadd.f32 %v2173, %v2740
  %v2749 = vadd.f32 %v2741, %v2675
  %v2750 = vadd.f32 %v2742, %v2677
  %v2751 = vadd.f32 %v2743, %v2679
  %v2752 = vadd.f32 %v2744, %v2681
  %v2753 = vadd.f32 %v2745, %v2685
  %v2754 = vadd.f32 %v2746, %v2687
  %v2755 = vadd.f32 %v2747, %v2689
  %v2756 = vadd.f32 %v2748, %v2691
  %v2757 = vmax.f32 %v2749, 0.0
  %v2758 = vmax.f32 %v2750, 0.0
  %v2759 = vmax.f32 %v2751, 0.0
  %v2760 = vmax.f32 %v2752, 0.0
  %v2761 = vmax.f32 %v2753, 0.0
  %v2762 = vmax.f32 %v2754, 0.0
  %v2763 = vmax.f32 %v2755, 0.0
  %v2764 = vmax.f32 %v2756, 0.0
  %v2765 = vpack.c.bf16 %v2759, %v2757
  %v2766 = vpack.c.bf16 %v2760, %v2758
  %v2767 = vpack.c.bf16 %v2763, %v2761
  %v2768 = vpack.c.bf16 %v2764, %v2762
  %2769 = vmatprep.subr.bf16.mxu0 %v2766
  %2770 = vmatpush1.bf16.msra.mxu0 %v2765
  %2771 = vmatprep.subr.bf16.mxu0 %v2768
  %2772 = vmatpush1.bf16.msra.mxu0 %v2767
  %2773 = vmatprep.subr.bf16.mxu0 0
  %2774 = vmatpush1.bf16.msra.mxu0 0
  %2775 = vmatprep.subr.bf16.mxu0 0
  %2776 = vmatpush1.bf16.msra.mxu0 0
  %2777 = vmatprep.subr.bf16.mxu0 0
  %2778 = vmatpush1.bf16.msra.mxu0 0
  %2779 = vmatprep.subr.bf16.mxu0 0
  %2780 = vmatpush1.bf16.msra.mxu0 0
  %2781 = vmatprep.subr.bf16.mxu0 0
  %2782 = vmatpush1.bf16.msra.mxu0 0
  %2783 = vmatprep.subr.bf16.mxu0 0
  %2784 = vmatpush1.bf16.msra.mxu0 0
  %2785 = vmatprep.subr.bf16.mxu0 0
  %2786 = vmatpush1.bf16.msra.mxu0 0
  %2787 = vmatprep.subr.bf16.mxu0 0
  %2788 = vmatpush1.bf16.msra.mxu0 0
  %2789 = vmatprep.subr.bf16.mxu0 0
  %2790 = vmatpush1.bf16.msra.mxu0 0
  %2791 = vmatprep.subr.bf16.mxu0 0
  %2792 = vmatpush1.bf16.msra.mxu0 0
  %2793 = vmatprep.subr.bf16.mxu0 0
  %2794 = vmatpush1.bf16.msra.mxu0 0
  %2795 = vmatprep.subr.bf16.mxu0 0
  %2796 = vmatpush1.bf16.msra.mxu0 0
  %2797 = vmatprep.subr.bf16.mxu0 0
  %2798 = vmatpush1.bf16.msra.mxu0 0
  %2799 = vmatprep.subr.bf16.mxu0 0
  %2800 = vmatpush1.bf16.msra.mxu0 0
  %2801 = vmatprep.mubr.bf16.mxu0 0
  %2802 = vmatmul.mubr.bf16.gmra.mrb[0].mxu0 %v651
  %v2803 = vpop.f32.mrb[0].mxu0
  %v2804 = vadd.f32 0.0, %v2803
  %v2805 = vpop.f32.mrb[0].mxu0
  %v2806 = vadd.f32 0.0, %v2805
  %v2807 = vpop.f32.mrb[0].mxu0
  %v2808 = vadd.f32 0.0, %v2807
  %v2809 = vpop.f32.mrb[0].mxu0
  %v2810 = vadd.f32 0.0, %v2809
  %2811 = vmatprep.mubr.bf16.mxu0 0
  %2812 = vmatmul.mubr.bf16.gmra.mrb[0].mxu0 %v654
  %v2813 = vpop.f32.mrb[0].mxu0
  %v2814 = vadd.f32 0.0, %v2813
  %v2815 = vpop.f32.mrb[0].mxu0
  %v2816 = vadd.f32 0.0, %v2815
  %v2817 = vpop.f32.mrb[0].mxu0
  %v2818 = vadd.f32 0.0, %v2817
  %v2819 = vpop.f32.mrb[0].mxu0
  %v2820 = vadd.f32 0.0, %v2819
  %2821 = vdwg.mxu0
  %v2822 = vpack.c.bf16 %v2808, %v2804
  %v2823 = vpack.c.bf16 %v2810, %v2806
  %v2824 = vpack.c.bf16 %v2818, %v2814
  %v2825 = vpack.c.bf16 %v2820, %v2816
  %v2826 = vld [vmem:[%s11] sm:$0xf]
  %v2827 = vld [vmem:[%s11 + $0x4] sm:$0xf]
  %v2828 = vld [vmem:[%s11 + $0x8] sm:$0xf]
  %v2829 = vld [vmem:[%s11 + $0xc] sm:$0xf]
  %v2830 = vld [vmem:[%s11 + $0x10] sm:$0xf]
  %v2831 = vld [vmem:[%s11 + $0x14] sm:$0xf]
  %v2832 = vld [vmem:[%s11 + $0x18] sm:$0xf]
  %v2833 = vld [vmem:[%s11 + $0x1c] sm:$0xf]
  %v2834 = vld [vmem:[%s11 + $0x20] sm:$0xf]
  %v2835 = vld [vmem:[%s11 + $0x24] sm:$0xf]
  %v2836 = vld [vmem:[%s11 + $0x28] sm:$0xf]
  %v2837 = vld [vmem:[%s11 + $0x2c] sm:$0xf]
  %v2838 = vld [vmem:[%s11 + $0x30] sm:$0xf]
  %v2839 = vld [vmem:[%s11 + $0x34] sm:$0xf]
  %v2840 = vld [vmem:[%s11 + $0x38] sm:$0xf]
  %v2841 = vld [vmem:[%s11 + $0x3c] sm:$0xf]
  %v2842 = vld [vmem:[%s11 + $0x40] sm:$0xf]
  %v2843 = vld [vmem:[%s11 + $0x44] sm:$0xf]
  %v2844 = vld [vmem:[%s11 + $0x48] sm:$0xf]
  %v2845 = vld [vmem:[%s11 + $0x4c] sm:$0xf]
  %v2846 = vld [vmem:[%s11 + $0x50] sm:$0xf]
  %v2847 = vld [vmem:[%s11 + $0x54] sm:$0xf]
  %v2848 = vld [vmem:[%s11 + $0x58] sm:$0xf]
  %v2849 = vld [vmem:[%s11 + $0x5c] sm:$0xf]
  %v2874 = vunpack.c.l.b16 %v2826
  %v2875 = vunpack.c.l.b16 %v2827
  %v2876 = vunpack.c.l.b16 %v2828
  %v2877 = vunpack.c.l.b16 %v2829
  %v2878 = vunpack.c.l.b16 %v2830
  %v2879 = vunpack.c.l.b16 %v2831
  %v2880 = vunpack.c.l.b16 %v2832
  %v2881 = vunpack.c.l.b16 %v2833
  %v2882 = vunpack.c.l.b16 %v2834
  %v2883 = vunpack.c.l.b16 %v2835
  %v2884 = vunpack.c.l.b16 %v2836
  %v2885 = vunpack.c.l.b16 %v2837
  %v2886 = vunpack.c.l.b16 %v2838
  %v2887 = vunpack.c.l.b16 %v2839
  %v2888 = vunpack.c.l.b16 %v2840
  %v2889 = vunpack.c.l.b16 %v2841
  %v2890 = vunpack.c.l.b16 %v2842
  %v2891 = vunpack.c.l.b16 %v2843
  %v2892 = vunpack.c.l.b16 %v2844
  %v2893 = vunpack.c.l.b16 %v2845
  %v2894 = vunpack.c.l.b16 %v2846
  %v2895 = vunpack.c.l.b16 %v2847
  %v2896 = vunpack.c.l.b16 %v2848
  %v2897 = vunpack.c.l.b16 %v2849
  %v2898 = vpack.c.b16 %v2875, %v2874
  %v2899 = vpack.c.b16 %v2877, %v2876
  %v2900 = vpack.c.b16 %v2879, %v2878
  %v2901 = vpack.c.b16 %v2881, %v2880
  %v2902 = vpack.c.b16 %v2883, %v2882
  %v2903 = vpack.c.b16 %v2885, %v2884
  %v2904 = vpack.c.b16 %v2887, %v2886
  %v2905 = vpack.c.b16 %v2889, %v2888
  %v2906 = vpack.c.b16 %v2891, %v2890
  %v2907 = vpack.c.b16 %v2893, %v2892
  %v2908 = vpack.c.b16 %v2895, %v2894
  %v2909 = vpack.c.b16 %v2897, %v2896
  %v2923 = vsel %vm1004, %v2823, 0
  %v2926 = vsel %vm1004, %v2825, 0
  %2928 = vmatprep.subr.bf16.mxu0 0
  %2929 = vmatpush1.bf16.msra.mxu0 %v2898
  %2930 = vmatprep.subr.bf16.mxu0 0
  %2931 = vmatpush1.bf16.msra.mxu0 %v2899
  %2932 = vmatprep.subr.bf16.mxu0 0
  %2933 = vmatpush1.bf16.msra.mxu0 %v2900
  %2934 = vmatprep.subr.bf16.mxu0 0
  %2935 = vmatpush1.bf16.msra.mxu0 %v2901
  %2936 = vmatprep.subr.bf16.mxu0 0
  %2937 = vmatpush1.bf16.msra.mxu0 %v2902
  %2938 = vmatprep.subr.bf16.mxu0 0
  %2939 = vmatpush1.bf16.msra.mxu0 %v2903
  %2940 = vmatprep.subr.bf16.mxu0 0
  %2941 = vmatpush1.bf16.msra.mxu0 %v2904
  %2942 = vmatprep.subr.bf16.mxu0 0
  %2943 = vmatpush1.bf16.msra.mxu0 %v2905
  %2944 = vmatprep.subr.bf16.mxu0 0
  %2945 = vmatpush1.bf16.msra.mxu0 %v2906
  %2946 = vmatprep.subr.bf16.mxu0 0
  %2947 = vmatpush1.bf16.msra.mxu0 %v2907
  %2948 = vmatprep.subr.bf16.mxu0 0
  %2949 = vmatpush1.bf16.msra.mxu0 %v2908
  %2950 = vmatprep.subr.bf16.mxu0 0
  %2951 = vmatpush1.bf16.msra.mxu0 %v2909
  %2952 = vmatprep.subr.bf16.mxu0 0
  %2953 = vmatpush1.bf16.msra.mxu0 0
  %2954 = vmatprep.subr.bf16.mxu0 0
  %2955 = vmatpush1.bf16.msra.mxu0 0
  %2956 = vmatprep.subr.bf16.mxu0 0
  %2957 = vmatpush1.bf16.msra.mxu0 0
  %2958 = vmatprep.subr.bf16.mxu0 0
  %2959 = vmatpush1.bf16.msra.mxu0 0
  %2960 = vmatprep.mubr.bf16.mxu0 %v2923
  %2961 = vmatmul.mubr.bf16.gmra.mrb[0].mxu0 %v2822
  %v2962 = vpop.f32.mrb[0].mxu0
  %v2963 = vadd.f32 0.0, %v2962
  %v2964 = vpop.f32.mrb[0].mxu0
  %v2965 = vpop.f32.mrb[0].mxu0
  %v2966 = vadd.f32 0.0, %v2965
  %v2967 = vpop.f32.mrb[0].mxu0
  %2968 = vmatprep.mubr.bf16.mxu0 %v2926
  %2969 = vmatmul.mubr.bf16.gmra.mrb[0].mxu0 %v2824
  %v2970 = vpop.f32.mrb[0].mxu0
  %v2971 = vadd.f32 0.0, %v2970
  %v2972 = vpop.f32.mrb[0].mxu0
  %v2973 = vpop.f32.mrb[0].mxu0
  %v2974 = vadd.f32 0.0, %v2973
  %v2975 = vpop.f32.mrb[0].mxu0
  %2976 = vdwg.mxu0
  %v2977 = vmax.f32 %v2963, 0.0
  %v2978 = vmax.f32 %v2966, 0.0
  %v2979 = vmax.f32 %v2971, 0.0
  %v2980 = vmax.f32 %v2974, 0.0
  %v2981 = vpack.c.bf16 %v2978, %v2977
  %v2982 = vpack.c.bf16 %v2980, %v2979
  %v2983 = vld [vmem:[%s12] sm:$0xf]
  %v2984 = vld [vmem:[%s12 + $0x4] sm:$0xf]
  %v2985 = vld [vmem:[%s12 + $0x8] sm:$0xf]
  %v2986 = vld [vmem:[%s12 + $0xc] sm:$0xf]
  %v2987 = vld [vmem:[%s12 + $0x10] sm:$0xf]
  %v2988 = vld [vmem:[%s12 + $0x14] sm:$0xf]
  %v2989 = vld [vmem:[%s12 + $0x18] sm:$0xf]
  %v2990 = vld [vmem:[%s12 + $0x1c] sm:$0xf]
  %v2991 = vld [vmem:[%s12 + $0x20] sm:$0xf]
  %v2992 = vld [vmem:[%s12 + $0x24] sm:$0xf]
  %v2993 = vld [vmem:[%s12 + $0x28] sm:$0xf]
  %v2994 = vld [vmem:[%s12 + $0x2c] sm:$0xf]
  %v2995 = vld [vmem:[%s13] sm:$0x1]
  %v2997 = vlaneseq
  %v2998 = vshrl.u32 %v2997, 7
  %v2999 = vsub.s32 0, %v2998
  %v3000 = vrot.slane %v2995, %v2999
  %v3014 = vunpack.c.l.b16 %v2983
  %v3015 = vunpack.c.l.b16 %v2984
  %v3016 = vunpack.c.l.b16 %v2985
  %v3017 = vunpack.c.l.b16 %v2986
  %v3018 = vunpack.c.l.b16 %v2987
  %v3019 = vunpack.c.l.b16 %v2988
  %v3020 = vunpack.c.l.b16 %v2989
  %v3021 = vunpack.c.l.b16 %v2990
  %v3022 = vunpack.c.l.b16 %v2991
  %v3023 = vunpack.c.l.b16 %v2992
  %v3024 = vunpack.c.l.b16 %v2993
  %v3025 = vunpack.c.l.b16 %v2994
  %v3026 = vpack.c.b16 %v3015, %v3014
  %v3027 = vpack.c.b16 %v3017, %v3016
  %v3028 = vpack.c.b16 %v3019, %v3018
  %v3029 = vpack.c.b16 %v3021, %v3020
  %v3030 = vpack.c.b16 %v3023, %v3022
  %v3031 = vpack.c.b16 %v3025, %v3024
  %vm3038 = vcmask 785408
  %v3040 = vsel %vm3038, %v2981, 0
  %v3043 = vsel %vm3038, %v2982, 0
  %3045 = vmatprep.subr.bf16.mxu0 0
  %3046 = vmatpush1.bf16.msra.mxu0 %v3026
  %3047 = vmatprep.subr.bf16.mxu0 0
  %3048 = vmatpush1.bf16.msra.mxu0 %v3027
  %3049 = vmatprep.subr.bf16.mxu0 0
  %3050 = vmatpush1.bf16.msra.mxu0 %v3028
  %3051 = vmatprep.subr.bf16.mxu0 0
  %3052 = vmatpush1.bf16.msra.mxu0 %v3029
  %3053 = vmatprep.subr.bf16.mxu0 0
  %3054 = vmatpush1.bf16.msra.mxu0 %v3030
  %3055 = vmatprep.subr.bf16.mxu0 0
  %3056 = vmatpush1.bf16.msra.mxu0 %v3031
  %3057 = vmatprep.subr.bf16.mxu0 0
  %3058 = vmatpush1.bf16.msra.mxu0 0
  %3059 = vmatprep.subr.bf16.mxu0 0
  %3060 = vmatpush1.bf16.msra.mxu0 0
  %3061 = vmatprep.subr.bf16.mxu0 0
  %3062 = vmatpush1.bf16.msra.mxu0 0
  %3063 = vmatprep.subr.bf16.mxu0 0
  %3064 = vmatpush1.bf16.msra.mxu0 0
  %3065 = vmatprep.subr.bf16.mxu0 0
  %3066 = vmatpush1.bf16.msra.mxu0 0
  %3067 = vmatprep.subr.bf16.mxu0 0
  %3068 = vmatpush1.bf16.msra.mxu0 0
  %3069 = vmatprep.subr.bf16.mxu0 0
  %3070 = vmatpush1.bf16.msra.mxu0 0
  %3071 = vmatprep.subr.bf16.mxu0 0
  %3072 = vmatpush1.bf16.msra.mxu0 0
  %3073 = vmatprep.subr.bf16.mxu0 0
  %3074 = vmatpush1.bf16.msra.mxu0 0
  %3075 = vmatprep.subr.bf16.mxu0 0
  %3076 = vmatpush1.bf16.msra.mxu0 0
  %3077 = vmatprep.mubr.bf16.mxu0 0
  %3078 = vmatmul.mubr.bf16.gmra.mrb[0].mxu0 %v3040
  %v3079 = vpop.f32.mrb[0].mxu0
  %v3080 = vadd.f32 %v3000, %v3079
  %v3081 = vpop.f32.mrb[0].mxu0
  %v3082 = vpop.f32.mrb[0].mxu0
  %v3083 = vadd.f32 %v3000, %v3082
  %v3084 = vpop.f32.mrb[0].mxu0
  %3085 = vmatprep.mubr.bf16.mxu0 0
  %3086 = vmatmul.mubr.bf16.gmra.mrb[0].mxu0 %v3043
  %v3087 = vpop.f32.mrb[0].mxu0
  %v3088 = vadd.f32 %v3000, %v3087
  %v3089 = vpop.f32.mrb[0].mxu0
  %v3090 = vpop.f32.mrb[0].mxu0
  %v3091 = vadd.f32 %v3000, %v3090
  %v3092 = vpop.f32.mrb[0].mxu0
  %3093 = vdwg.mxu0
  %s3094 = scalar_lea.vmem %s12, 48
  %v3095 = vld [vmem:[%s3094] sm:$0xf]
  %v3096 = vld [vmem:[%s3094 + $0x4] sm:$0xf]
  %v3097 = vld [vmem:[%s3094 + $0x8] sm:$0xf]
  %v3098 = vld [vmem:[%s3094 + $0xc] sm:$0xf]
  %v3099 = vld [vmem:[%s3094 + $0x10] sm:$0xf]
  %v3100 = vld [vmem:[%s3094 + $0x14] sm:$0xf]
  %v3101 = vld [vmem:[%s3094 + $0x18] sm:$0xf]
  %v3102 = vld [vmem:[%s3094 + $0x1c] sm:$0xf]
  %v3103 = vld [vmem:[%s3094 + $0x20] sm:$0xf]
  %v3104 = vld [vmem:[%s3094 + $0x24] sm:$0xf]
  %v3105 = vld [vmem:[%s3094 + $0x28] sm:$0xf]
  %v3106 = vld [vmem:[%s3094 + $0x2c] sm:$0xf]
  %s3107 = scalar_lea.vmem %s13, 1
  %v3108 = vld [vmem:[%s3107] sm:$0x1]
  %v3110 = vlaneseq
  %v3111 = vshrl.u32 %v3110, 7
  %v3112 = vsub.s32 0, %v3111
  %v3113 = vrot.slane %v3108, %v3112
  %v3127 = vunpack.c.l.b16 %v3095
  %v3128 = vunpack.c.l.b16 %v3096
  %v3129 = vunpack.c.l.b16 %v3097
  %v3130 = vunpack.c.l.b16 %v3098
  %v3131 = vunpack.c.l.b16 %v3099
  %v3132 = vunpack.c.l.b16 %v3100
  %v3133 = vunpack.c.l.b16 %v3101
  %v3134 = vunpack.c.l.b16 %v3102
  %v3135 = vunpack.c.l.b16 %v3103
  %v3136 = vunpack.c.l.b16 %v3104
  %v3137 = vunpack.c.l.b16 %v3105
  %v3138 = vunpack.c.l.b16 %v3106
  %v3139 = vpack.c.b16 %v3128, %v3127
  %v3140 = vpack.c.b16 %v3130, %v3129
  %v3141 = vpack.c.b16 %v3132, %v3131
  %v3142 = vpack.c.b16 %v3134, %v3133
  %v3143 = vpack.c.b16 %v3136, %v3135
  %v3144 = vpack.c.b16 %v3138, %v3137
  %3151 = vmatprep.subr.bf16.mxu0 0
  %3152 = vmatpush1.bf16.msra.mxu0 %v3139
  %3153 = vmatprep.subr.bf16.mxu0 0
  %3154 = vmatpush1.bf16.msra.mxu0 %v3140
  %3155 = vmatprep.subr.bf16.mxu0 0
  %3156 = vmatpush1.bf16.msra.mxu0 %v3141
  %3157 = vmatprep.subr.bf16.mxu0 0
  %3158 = vmatpush1.bf16.msra.mxu0 %v3142
  %3159 = vmatprep.subr.bf16.mxu0 0
  %3160 = vmatpush1.bf16.msra.mxu0 %v3143
  %3161 = vmatprep.subr.bf16.mxu0 0
  %3162 = vmatpush1.bf16.msra.mxu0 %v3144
  %3163 = vmatprep.subr.bf16.mxu0 0
  %3164 = vmatpush1.bf16.msra.mxu0 0
  %3165 = vmatprep.subr.bf16.mxu0 0
  %3166 = vmatpush1.bf16.msra.mxu0 0
  %3167 = vmatprep.subr.bf16.mxu0 0
  %3168 = vmatpush1.bf16.msra.mxu0 0
  %3169 = vmatprep.subr.bf16.mxu0 0
  %3170 = vmatpush1.bf16.msra.mxu0 0
  %3171 = vmatprep.subr.bf16.mxu0 0
  %3172 = vmatpush1.bf16.msra.mxu0 0
  %3173 = vmatprep.subr.bf16.mxu0 0
  %3174 = vmatpush1.bf16.msra.mxu0 0
  %3175 = vmatprep.subr.bf16.mxu0 0
  %3176 = vmatpush1.bf16.msra.mxu0 0
  %3177 = vmatprep.subr.bf16.mxu0 0
  %3178 = vmatpush1.bf16.msra.mxu0 0
  %3179 = vmatprep.subr.bf16.mxu0 0
  %3180 = vmatpush1.bf16.msra.mxu0 0
  %3181 = vmatprep.subr.bf16.mxu0 0
  %3182 = vmatpush1.bf16.msra.mxu0 0
  %3183 = vmatprep.mubr.bf16.mxu0 0
  %3184 = vmatmul.mubr.bf16.gmra.mrb[0].mxu0 %v3040
  %v3185 = vpop.f32.mrb[0].mxu0
  %v3186 = vadd.f32 %v3113, %v3185
  %v3187 = vpop.f32.mrb[0].mxu0
  %v3188 = vpop.f32.mrb[0].mxu0
  %v3189 = vadd.f32 %v3113, %v3188
  %v3190 = vpop.f32.mrb[0].mxu0
  %3191 = vmatprep.mubr.bf16.mxu0 0
  %3192 = vmatmul.mubr.bf16.gmra.mrb[0].mxu0 %v3043
  %v3193 = vpop.f32.mrb[0].mxu0
  %v3194 = vadd.f32 %v3113, %v3193
  %v3195 = vpop.f32.mrb[0].mxu0
  %v3196 = vpop.f32.mrb[0].mxu0
  %v3197 = vadd.f32 %v3113, %v3196
  %v3198 = vpop.f32.mrb[0].mxu0
  %3199 = vdwg.mxu0
  %s3200 = scalar_lea.vmem %s12, 96
  %v3201 = vld [vmem:[%s3200] sm:$0xf]
  %v3202 = vld [vmem:[%s3200 + $0x4] sm:$0xf]
  %v3203 = vld [vmem:[%s3200 + $0x8] sm:$0xf]
  %v3204 = vld [vmem:[%s3200 + $0xc] sm:$0xf]
  %v3205 = vld [vmem:[%s3200 + $0x10] sm:$0xf]
  %v3206 = vld [vmem:[%s3200 + $0x14] sm:$0xf]
  %v3207 = vld [vmem:[%s3200 + $0x18] sm:$0xf]
  %v3208 = vld [vmem:[%s3200 + $0x1c] sm:$0xf]
  %v3209 = vld [vmem:[%s3200 + $0x20] sm:$0xf]
  %v3210 = vld [vmem:[%s3200 + $0x24] sm:$0xf]
  %v3211 = vld [vmem:[%s3200 + $0x28] sm:$0xf]
  %v3212 = vld [vmem:[%s3200 + $0x2c] sm:$0xf]
  %s3213 = scalar_lea.vmem %s13, 2
  %v3214 = vld [vmem:[%s3213] sm:$0x1]
  %v3216 = vlaneseq
  %v3217 = vshrl.u32 %v3216, 7
  %v3218 = vsub.s32 0, %v3217
  %v3219 = vrot.slane %v3214, %v3218
  %v3233 = vunpack.c.l.b16 %v3201
  %v3234 = vunpack.c.l.b16 %v3202
  %v3235 = vunpack.c.l.b16 %v3203
  %v3236 = vunpack.c.l.b16 %v3204
  %v3237 = vunpack.c.l.b16 %v3205
  %v3238 = vunpack.c.l.b16 %v3206
  %v3239 = vunpack.c.l.b16 %v3207
  %v3240 = vunpack.c.l.b16 %v3208
  %v3241 = vunpack.c.l.b16 %v3209
  %v3242 = vunpack.c.l.b16 %v3210
  %v3243 = vunpack.c.l.b16 %v3211
  %v3244 = vunpack.c.l.b16 %v3212
  %v3245 = vpack.c.b16 %v3234, %v3233
  %v3246 = vpack.c.b16 %v3236, %v3235
  %v3247 = vpack.c.b16 %v3238, %v3237
  %v3248 = vpack.c.b16 %v3240, %v3239
  %v3249 = vpack.c.b16 %v3242, %v3241
  %v3250 = vpack.c.b16 %v3244, %v3243
  %3257 = vmatprep.subr.bf16.mxu0 0
  %3258 = vmatpush1.bf16.msra.mxu0 %v3245
  %3259 = vmatprep.subr.bf16.mxu0 0
  %3260 = vmatpush1.bf16.msra.mxu0 %v3246
  %3261 = vmatprep.subr.bf16.mxu0 0
  %3262 = vmatpush1.bf16.msra.mxu0 %v3247
  %3263 = vmatprep.subr.bf16.mxu0 0
  %3264 = vmatpush1.bf16.msra.mxu0 %v3248
  %3265 = vmatprep.subr.bf16.mxu0 0
  %3266 = vmatpush1.bf16.msra.mxu0 %v3249
  %3267 = vmatprep.subr.bf16.mxu0 0
  %3268 = vmatpush1.bf16.msra.mxu0 %v3250
  %3269 = vmatprep.subr.bf16.mxu0 0
  %3270 = vmatpush1.bf16.msra.mxu0 0
  %3271 = vmatprep.subr.bf16.mxu0 0
  %3272 = vmatpush1.bf16.msra.mxu0 0
  %3273 = vmatprep.subr.bf16.mxu0 0
  %3274 = vmatpush1.bf16.msra.mxu0 0
  %3275 = vmatprep.subr.bf16.mxu0 0
  %3276 = vmatpush1.bf16.msra.mxu0 0
  %3277 = vmatprep.subr.bf16.mxu0 0
  %3278 = vmatpush1.bf16.msra.mxu0 0
  %3279 = vmatprep.subr.bf16.mxu0 0
  %3280 = vmatpush1.bf16.msra.mxu0 0
  %3281 = vmatprep.subr.bf16.mxu0 0
  %3282 = vmatpush1.bf16.msra.mxu0 0
  %3283 = vmatprep.subr.bf16.mxu0 0
  %3284 = vmatpush1.bf16.msra.mxu0 0
  %3285 = vmatprep.subr.bf16.mxu0 0
  %3286 = vmatpush1.bf16.msra.mxu0 0
  %3287 = vmatprep.subr.bf16.mxu0 0
  %3288 = vmatpush1.bf16.msra.mxu0 0
  %3289 = vmatprep.mubr.bf16.mxu0 0
  %3290 = vmatmul.mubr.bf16.gmra.mrb[0].mxu0 %v3040
  %v3291 = vpop.f32.mrb[0].mxu0
  %v3292 = vadd.f32 %v3219, %v3291
  %v3293 = vpop.f32.mrb[0].mxu0
  %v3294 = vpop.f32.mrb[0].mxu0
  %v3295 = vadd.f32 %v3219, %v3294
  %v3296 = vpop.f32.mrb[0].mxu0
  %3297 = vmatprep.mubr.bf16.mxu0 0
  %3298 = vmatmul.mubr.bf16.gmra.mrb[0].mxu0 %v3043
  %v3299 = vpop.f32.mrb[0].mxu0
  %v3300 = vadd.f32 %v3219, %v3299
  %v3301 = vpop.f32.mrb[0].mxu0
  %v3302 = vpop.f32.mrb[0].mxu0
  %v3303 = vadd.f32 %v3219, %v3302
  %v3304 = vpop.f32.mrb[0].mxu0
  %3305 = vdwg.mxu0
  %v3306 = vxor.u32 %v3186, 2147483648
  %v3307 = vxor.u32 %v3189, 2147483648
  %v3308 = vxor.u32 %v3194, 2147483648
  %v3309 = vxor.u32 %v3197, 2147483648
  %v3310 = vmul.f32 %v3306, 1.442695
  %v3311 = vpow.pop %v3310
  %v3312 = vmul.f32 %v3307, 1.442695
  %v3313 = vpow.pop %v3312
  %v3314 = vmul.f32 %v3308, 1.442695
  %v3315 = vpow.pop %v3314
  %v3316 = vmul.f32 %v3309, 1.442695
  %v3317 = vpow.pop %v3316
  %v3318 = vadd.f32 %v3311, 1.0
  %v3319 = vadd.f32 %v3313, 1.0
  %v3320 = vadd.f32 %v3315, 1.0
  %v3321 = vadd.f32 %v3317, 1.0
  %v3322 = vrcp.pop %v3318
  %v3323 = vmul.f32 1.0, %v3322
  %v3324 = vrcp.pop %v3319
  %v3325 = vmul.f32 1.0, %v3324
  %v3326 = vrcp.pop %v3320
  %v3327 = vmul.f32 1.0, %v3326
  %v3328 = vrcp.pop %v3321
  %v3329 = vmul.f32 1.0, %v3328
  %v3330 = vadd.f32 %v3080, %v3323
  %v3331 = vadd.f32 %v3083, %v3325
  %v3332 = vadd.f32 %v3088, %v3327
  %v3333 = vadd.f32 %v3091, %v3329
  %v3334 = vadd.f32 %v3330, %v3292
  %v3335 = vadd.f32 %v3331, %v3295
  %v3336 = vadd.f32 %v3332, %v3300
  %v3337 = vadd.f32 %v3333, %v3303
  %v3338 = vmax.f32 %v3334, 0.0
  %v3339 = vmax.f32 %v3335, 0.0
  %v3340 = vmax.f32 %v3336, 0.0
  %v3341 = vmax.f32 %v3337, 0.0
  %3342 = vadd.xlane.f32.xlu0 %v3338
  %v3343 = vpop.xlane.xlu0 %3342
  %3344 = vadd.xlane.f32.xlu0 %v3339
  %v3345 = vpop.xlane.xlu0 %3344
  %3346 = vadd.xlane.f32.xlu0 %v3340
  %v3347 = vpop.xlane.xlu0 %3346
  %3348 = vadd.xlane.f32.xlu0 %v3341
  %v3349 = vpop.xlane.xlu0 %3348
  %v3350 = vmul.f32 %v3338, %v3338
  %v3351 = vmul.f32 %v3339, %v3339
  %v3352 = vmul.f32 %v3340, %v3340
  %v3353 = vmul.f32 %v3341, %v3341
  %3354 = vadd.xlane.f32.xlu0 %v3350
  %v3355 = vpop.xlane.xlu0 %3354
  %3356 = vadd.xlane.f32.xlu0 %v3351
  %v3357 = vpop.xlane.xlu0 %3356
  %3358 = vadd.xlane.f32.xlu0 %v3352
  %v3359 = vpop.xlane.xlu0 %3358
  %3360 = vadd.xlane.f32.xlu0 %v3353
  %v3361 = vpop.xlane.xlu0 %3360
  %v3362 = vadd.f32 %v3343, %v3347
  %v3363 = vadd.f32 %v3345, %v3349
  %v3364 = vadd.f32 %v3355, %v3359
  %v3365 = vadd.f32 %v3357, %v3361
  %v3366 = vmul.f32 %v3362, 0.00390625
  %v3367 = vmul.f32 %v3363, 0.00390625
  %v3368 = vmul.f32 %v3364, 0.00390625
  %v3369 = vmul.f32 %v3365, 0.00390625
  %v3370 = vmul.f32 %v3366, %v3366
  %v3371 = vmul.f32 %v3367, %v3367
  %v3372 = vsub.f32 %v3368, %v3370
  %v3373 = vsub.f32 %v3369, %v3371
  %v3374 = vadd.f32 %v3372, 1e-05
  %v3375 = vadd.f32 %v3373, 1e-05
  %v3376 = vrsqrt.pop %v3374
  %v3377 = vrsqrt.pop %v3375
  %3379 = vset.pattern.permute.xlu0 0
  %3380 = vperm.xlu0 %3379, %v3366
  %v3381 = vpop.permute.xlu0 %3380
  %3384 = vset.pattern.permute.xlu0 0
  %3385 = vperm.xlu0 %3384, %v3367
  %v3386 = vpop.permute.xlu0 %3385
  %v3388 = vsub.f32 %v3338, %v3381
  %v3389 = vsub.f32 %v3339, %v3386
  %v3390 = vsub.f32 %v3340, %v3381
  %v3391 = vsub.f32 %v3341, %v3386
  %3393 = vset.pattern.permute.xlu0 0
  %3394 = vperm.xlu0 %3393, %v3376
  %v3395 = vpop.permute.xlu0 %3394
  %3398 = vset.pattern.permute.xlu0 0
  %3399 = vperm.xlu0 %3398, %v3377
  %v3400 = vpop.permute.xlu0 %3399
  %v3402 = vmul.f32 %v3388, %v3395
  %v3403 = vmul.f32 %v3389, %v3400
  %v3404 = vmul.f32 %v3390, %v3395
  %v3405 = vmul.f32 %v3391, %v3400
  %v3406 = vld [vmem:[%s14] sm:$0xff]
  %v3407 = vld [vmem:[%s14 + $0x8] sm:$0xff]
  %v3408 = vld [vmem:[%s14 + $0x10] sm:$0xff]
  %v3409 = vld [vmem:[%s14 + $0x18] sm:$0xff]
  %3411 = vset.pattern.permute.xlu0 0
  %3412 = vperm.xlu0 %3411, %v3406
  %v3413 = vpop.permute.xlu0 %3412
  %3416 = vset.pattern.permute.xlu0 0
  %3417 = vperm.xlu0 %3416, %v3407
  %v3418 = vpop.permute.xlu0 %3417
  %3421 = vset.pattern.permute.xlu0 0
  %3422 = vperm.xlu0 %3421, %v3408
  %v3423 = vpop.permute.xlu0 %3422
  %3426 = vset.pattern.permute.xlu0 0
  %3427 = vperm.xlu0 %3426, %v3409
  %v3428 = vpop.permute.xlu0 %3427
  %v3430 = vmul.f32 %v3402, %v3413
  %v3431 = vmul.f32 %v3403, %v3418
  %v3432 = vmul.f32 %v3404, %v3423
  %v3433 = vmul.f32 %v3405, %v3428
  %v3434 = vld [vmem:[%s15] sm:$0xff]
  %v3435 = vld [vmem:[%s15 + $0x8] sm:$0xff]
  %v3436 = vld [vmem:[%s15 + $0x10] sm:$0xff]
  %v3437 = vld [vmem:[%s15 + $0x18] sm:$0xff]
  %3439 = vset.pattern.permute.xlu0 0
  %3440 = vperm.xlu0 %3439, %v3434
  %v3441 = vpop.permute.xlu0 %3440
  %3444 = vset.pattern.permute.xlu0 0
  %3445 = vperm.xlu0 %3444, %v3435
  %v3446 = vpop.permute.xlu0 %3445
  %3449 = vset.pattern.permute.xlu0 0
  %3450 = vperm.xlu0 %3449, %v3436
  %v3451 = vpop.permute.xlu0 %3450
  %3454 = vset.pattern.permute.xlu0 0
  %3455 = vperm.xlu0 %3454, %v3437
  %v3456 = vpop.permute.xlu0 %3455
  %v3458 = vadd.f32 %v3430, %v3441
  %v3459 = vadd.f32 %v3431, %v3446
  %v3460 = vadd.f32 %v3432, %v3451
  %v3461 = vadd.f32 %v3433, %v3456
  %v3462 = vpack.c.bf16 %v3459, %v3458
  %v3463 = vpack.c.bf16 %v3461, %v3460
  %v3464 = vld [vmem:[%s16] sm:$0xf]
  %v3465 = vld [vmem:[%s16 + $0x4] sm:$0xf]
  %v3466 = vld [vmem:[%s16 + $0x8] sm:$0xf]
  %v3467 = vld [vmem:[%s16 + $0xc] sm:$0xf]
  %v3468 = vld [vmem:[%s16 + $0x10] sm:$0xf]
  %v3469 = vld [vmem:[%s16 + $0x14] sm:$0xf]
  %v3470 = vld [vmem:[%s16 + $0x18] sm:$0xf]
  %v3471 = vld [vmem:[%s16 + $0x1c] sm:$0xf]
  %v3472 = vld [vmem:[%s16 + $0x20] sm:$0xf]
  %v3473 = vld [vmem:[%s16 + $0x24] sm:$0xf]
  %v3474 = vld [vmem:[%s16 + $0x28] sm:$0xf]
  %v3475 = vld [vmem:[%s16 + $0x2c] sm:$0xf]
  %v3476 = vld [vmem:[%s16 + $0x30] sm:$0xf]
  %v3477 = vld [vmem:[%s16 + $0x34] sm:$0xf]
  %v3478 = vld [vmem:[%s16 + $0x38] sm:$0xf]
  %v3479 = vld [vmem:[%s16 + $0x3c] sm:$0xf]
  %v3480 = vld [vmem:[%s17] sm:$0x1]
  %v3482 = vlaneseq
  %v3483 = vshrl.u32 %v3482, 7
  %v3484 = vsub.s32 0, %v3483
  %v3485 = vrot.slane %v3480, %v3484
  %v3503 = vunpack.c.l.b16 %v3464
  %v3504 = vunpack.c.l.b16 %v3465
  %v3505 = vunpack.c.l.b16 %v3466
  %v3506 = vunpack.c.l.b16 %v3467
  %v3507 = vunpack.c.l.b16 %v3468
  %v3508 = vunpack.c.l.b16 %v3469
  %v3509 = vunpack.c.l.b16 %v3470
  %v3510 = vunpack.c.l.b16 %v3471
  %v3511 = vunpack.c.l.b16 %v3472
  %v3512 = vunpack.c.l.b16 %v3473
  %v3513 = vunpack.c.l.b16 %v3474
  %v3514 = vunpack.c.l.b16 %v3475
  %v3515 = vunpack.c.l.b16 %v3476
  %v3516 = vunpack.c.l.b16 %v3477
  %v3517 = vunpack.c.l.b16 %v3478
  %v3518 = vunpack.c.l.b16 %v3479
  %v3519 = vpack.c.b16 %v3504, %v3503
  %v3520 = vpack.c.b16 %v3506, %v3505
  %v3521 = vpack.c.b16 %v3508, %v3507
  %v3522 = vpack.c.b16 %v3510, %v3509
  %v3523 = vpack.c.b16 %v3512, %v3511
  %v3524 = vpack.c.b16 %v3514, %v3513
  %v3525 = vpack.c.b16 %v3516, %v3515
  %v3526 = vpack.c.b16 %v3518, %v3517
  %3535 = vmatprep.subr.bf16.mxu0 0
  %3536 = vmatpush1.bf16.msra.mxu0 %v3519
  %3537 = vmatprep.subr.bf16.mxu0 0
  %3538 = vmatpush1.bf16.msra.mxu0 %v3520
  %3539 = vmatprep.subr.bf16.mxu0 0
  %3540 = vmatpush1.bf16.msra.mxu0 %v3521
  %3541 = vmatprep.subr.bf16.mxu0 0
  %3542 = vmatpush1.bf16.msra.mxu0 %v3522
  %3543 = vmatprep.subr.bf16.mxu0 0
  %3544 = vmatpush1.bf16.msra.mxu0 %v3523
  %3545 = vmatprep.subr.bf16.mxu0 0
  %3546 = vmatpush1.bf16.msra.mxu0 %v3524
  %3547 = vmatprep.subr.bf16.mxu0 0
  %3548 = vmatpush1.bf16.msra.mxu0 %v3525
  %3549 = vmatprep.subr.bf16.mxu0 0
  %3550 = vmatpush1.bf16.msra.mxu0 %v3526
  %3551 = vmatprep.subr.bf16.mxu0 0
  %3552 = vmatpush1.bf16.msra.mxu0 0
  %3553 = vmatprep.subr.bf16.mxu0 0
  %3554 = vmatpush1.bf16.msra.mxu0 0
  %3555 = vmatprep.subr.bf16.mxu0 0
  %3556 = vmatpush1.bf16.msra.mxu0 0
  %3557 = vmatprep.subr.bf16.mxu0 0
  %3558 = vmatpush1.bf16.msra.mxu0 0
  %3559 = vmatprep.subr.bf16.mxu0 0
  %3560 = vmatpush1.bf16.msra.mxu0 0
  %3561 = vmatprep.subr.bf16.mxu0 0
  %3562 = vmatpush1.bf16.msra.mxu0 0
  %3563 = vmatprep.subr.bf16.mxu0 0
  %3564 = vmatpush1.bf16.msra.mxu0 0
  %3565 = vmatprep.subr.bf16.mxu0 0
  %3566 = vmatpush1.bf16.msra.mxu0 0
  %3567 = vmatprep.mubr.bf16.mxu0 0
  %3568 = vmatmul.mubr.bf16.gmra.mrb[0].mxu0 %v3462
  %v3569 = vpop.f32.mrb[0].mxu0
  %v3570 = vadd.f32 %v3485, %v3569
  %v3571 = vpop.f32.mrb[0].mxu0
  %v3572 = vpop.f32.mrb[0].mxu0
  %v3573 = vadd.f32 %v3485, %v3572
  %v3574 = vpop.f32.mrb[0].mxu0
  %3575 = vmatprep.mubr.bf16.mxu0 0
  %3576 = vmatmul.mubr.bf16.gmra.mrb[0].mxu0 %v3463
  %v3577 = vpop.f32.mrb[0].mxu0
  %v3578 = vadd.f32 %v3485, %v3577
  %v3579 = vpop.f32.mrb[0].mxu0
  %v3580 = vpop.f32.mrb[0].mxu0
  %v3581 = vadd.f32 %v3485, %v3580
  %v3582 = vpop.f32.mrb[0].mxu0
  %3583 = vdwg.mxu0
  %s3584 = scalar_lea.vmem %s16, 64
  %v3585 = vld [vmem:[%s3584] sm:$0xf]
  %v3586 = vld [vmem:[%s3584 + $0x4] sm:$0xf]
  %v3587 = vld [vmem:[%s3584 + $0x8] sm:$0xf]
  %v3588 = vld [vmem:[%s3584 + $0xc] sm:$0xf]
  %v3589 = vld [vmem:[%s3584 + $0x10] sm:$0xf]
  %v3590 = vld [vmem:[%s3584 + $0x14] sm:$0xf]
  %v3591 = vld [vmem:[%s3584 + $0x18] sm:$0xf]
  %v3592 = vld [vmem:[%s3584 + $0x1c] sm:$0xf]
  %v3593 = vld [vmem:[%s3584 + $0x20] sm:$0xf]
  %v3594 = vld [vmem:[%s3584 + $0x24] sm:$0xf]
  %v3595 = vld [vmem:[%s3584 + $0x28] sm:$0xf]
  %v3596 = vld [vmem:[%s3584 + $0x2c] sm:$0xf]
  %v3597 = vld [vmem:[%s3584 + $0x30] sm:$0xf]
  %v3598 = vld [vmem:[%s3584 + $0x34] sm:$0xf]
  %v3599 = vld [vmem:[%s3584 + $0x38] sm:$0xf]
  %v3600 = vld [vmem:[%s3584 + $0x3c] sm:$0xf]
  %s3601 = scalar_lea.vmem %s17, 1
  %v3602 = vld [vmem:[%s3601] sm:$0x1]
  %v3604 = vlaneseq
  %v3605 = vshrl.u32 %v3604, 7
  %v3606 = vsub.s32 0, %v3605
  %v3607 = vrot.slane %v3602, %v3606
  %v3625 = vunpack.c.l.b16 %v3585
  %v3626 = vunpack.c.l.b16 %v3586
  %v3627 = vunpack.c.l.b16 %v3587
  %v3628 = vunpack.c.l.b16 %v3588
  %v3629 = vunpack.c.l.b16 %v3589
  %v3630 = vunpack.c.l.b16 %v3590
  %v3631 = vunpack.c.l.b16 %v3591
  %v3632 = vunpack.c.l.b16 %v3592
  %v3633 = vunpack.c.l.b16 %v3593
  %v3634 = vunpack.c.l.b16 %v3594
  %v3635 = vunpack.c.l.b16 %v3595
  %v3636 = vunpack.c.l.b16 %v3596
  %v3637 = vunpack.c.l.b16 %v3597
  %v3638 = vunpack.c.l.b16 %v3598
  %v3639 = vunpack.c.l.b16 %v3599
  %v3640 = vunpack.c.l.b16 %v3600
  %v3641 = vpack.c.b16 %v3626, %v3625
  %v3642 = vpack.c.b16 %v3628, %v3627
  %v3643 = vpack.c.b16 %v3630, %v3629
  %v3644 = vpack.c.b16 %v3632, %v3631
  %v3645 = vpack.c.b16 %v3634, %v3633
  %v3646 = vpack.c.b16 %v3636, %v3635
  %v3647 = vpack.c.b16 %v3638, %v3637
  %v3648 = vpack.c.b16 %v3640, %v3639
  %3657 = vmatprep.subr.bf16.mxu0 0
  %3658 = vmatpush1.bf16.msra.mxu0 %v3641
  %3659 = vmatprep.subr.bf16.mxu0 0
  %3660 = vmatpush1.bf16.msra.mxu0 %v3642
  %3661 = vmatprep.subr.bf16.mxu0 0
  %3662 = vmatpush1.bf16.msra.mxu0 %v3643
  %3663 = vmatprep.subr.bf16.mxu0 0
  %3664 = vmatpush1.bf16.msra.mxu0 %v3644
  %3665 = vmatprep.subr.bf16.mxu0 0
  %3666 = vmatpush1.bf16.msra.mxu0 %v3645
  %3667 = vmatprep.subr.bf16.mxu0 0
  %3668 = vmatpush1.bf16.msra.mxu0 %v3646
  %3669 = vmatprep.subr.bf16.mxu0 0
  %3670 = vmatpush1.bf16.msra.mxu0 %v3647
  %3671 = vmatprep.subr.bf16.mxu0 0
  %3672 = vmatpush1.bf16.msra.mxu0 %v3648
  %3673 = vmatprep.subr.bf16.mxu0 0
  %3674 = vmatpush1.bf16.msra.mxu0 0
  %3675 = vmatprep.subr.bf16.mxu0 0
  %3676 = vmatpush1.bf16.msra.mxu0 0
  %3677 = vmatprep.subr.bf16.mxu0 0
  %3678 = vmatpush1.bf16.msra.mxu0 0
  %3679 = vmatprep.subr.bf16.mxu0 0
  %3680 = vmatpush1.bf16.msra.mxu0 0
  %3681 = vmatprep.subr.bf16.mxu0 0
  %3682 = vmatpush1.bf16.msra.mxu0 0
  %3683 = vmatprep.subr.bf16.mxu0 0
  %3684 = vmatpush1.bf16.msra.mxu0 0
  %3685 = vmatprep.subr.bf16.mxu0 0
  %3686 = vmatpush1.bf16.msra.mxu0 0
  %3687 = vmatprep.subr.bf16.mxu0 0
  %3688 = vmatpush1.bf16.msra.mxu0 0
  %3689 = vmatprep.mubr.bf16.mxu0 0
  %3690 = vmatmul.mubr.bf16.gmra.mrb[0].mxu0 %v3462
  %v3691 = vpop.f32.mrb[0].mxu0
  %v3692 = vadd.f32 %v3607, %v3691
  %v3693 = vpop.f32.mrb[0].mxu0
  %v3694 = vpop.f32.mrb[0].mxu0
  %v3695 = vadd.f32 %v3607, %v3694
  %v3696 = vpop.f32.mrb[0].mxu0
  %3697 = vmatprep.mubr.bf16.mxu0 0
  %3698 = vmatmul.mubr.bf16.gmra.mrb[0].mxu0 %v3463
  %v3699 = vpop.f32.mrb[0].mxu0
  %v3700 = vadd.f32 %v3607, %v3699
  %v3701 = vpop.f32.mrb[0].mxu0
  %v3702 = vpop.f32.mrb[0].mxu0
  %v3703 = vadd.f32 %v3607, %v3702
  %v3704 = vpop.f32.mrb[0].mxu0
  %3705 = vdwg.mxu0
  %s3706 = scalar_lea.vmem %s16, 128
  %v3707 = vld [vmem:[%s3706] sm:$0xf]
  %v3708 = vld [vmem:[%s3706 + $0x4] sm:$0xf]
  %v3709 = vld [vmem:[%s3706 + $0x8] sm:$0xf]
  %v3710 = vld [vmem:[%s3706 + $0xc] sm:$0xf]
  %v3711 = vld [vmem:[%s3706 + $0x10] sm:$0xf]
  %v3712 = vld [vmem:[%s3706 + $0x14] sm:$0xf]
  %v3713 = vld [vmem:[%s3706 + $0x18] sm:$0xf]
  %v3714 = vld [vmem:[%s3706 + $0x1c] sm:$0xf]
  %v3715 = vld [vmem:[%s3706 + $0x20] sm:$0xf]
  %v3716 = vld [vmem:[%s3706 + $0x24] sm:$0xf]
  %v3717 = vld [vmem:[%s3706 + $0x28] sm:$0xf]
  %v3718 = vld [vmem:[%s3706 + $0x2c] sm:$0xf]
  %v3719 = vld [vmem:[%s3706 + $0x30] sm:$0xf]
  %v3720 = vld [vmem:[%s3706 + $0x34] sm:$0xf]
  %v3721 = vld [vmem:[%s3706 + $0x38] sm:$0xf]
  %v3722 = vld [vmem:[%s3706 + $0x3c] sm:$0xf]
  %s3723 = scalar_lea.vmem %s17, 2
  %v3724 = vld [vmem:[%s3723] sm:$0x1]
  %v3726 = vlaneseq
  %v3727 = vshrl.u32 %v3726, 7
  %v3728 = vsub.s32 0, %v3727
  %v3729 = vrot.slane %v3724, %v3728
  %v3747 = vunpack.c.l.b16 %v3707
  %v3748 = vunpack.c.l.b16 %v3708
  %v3749 = vunpack.c.l.b16 %v3709
  %v3750 = vunpack.c.l.b16 %v3710
  %v3751 = vunpack.c.l.b16 %v3711
  %v3752 = vunpack.c.l.b16 %v3712
  %v3753 = vunpack.c.l.b16 %v3713
  %v3754 = vunpack.c.l.b16 %v3714
  %v3755 = vunpack.c.l.b16 %v3715
  %v3756 = vunpack.c.l.b16 %v3716
  %v3757 = vunpack.c.l.b16 %v3717
  %v3758 = vunpack.c.l.b16 %v3718
  %v3759 = vunpack.c.l.b16 %v3719
  %v3760 = vunpack.c.l.b16 %v3720
  %v3761 = vunpack.c.l.b16 %v3721
  %v3762 = vunpack.c.l.b16 %v3722
  %v3763 = vpack.c.b16 %v3748, %v3747
  %v3764 = vpack.c.b16 %v3750, %v3749
  %v3765 = vpack.c.b16 %v3752, %v3751
  %v3766 = vpack.c.b16 %v3754, %v3753
  %v3767 = vpack.c.b16 %v3756, %v3755
  %v3768 = vpack.c.b16 %v3758, %v3757
  %v3769 = vpack.c.b16 %v3760, %v3759
  %v3770 = vpack.c.b16 %v3762, %v3761
  %3779 = vmatprep.subr.bf16.mxu0 0
  %3780 = vmatpush1.bf16.msra.mxu0 %v3763
  %3781 = vmatprep.subr.bf16.mxu0 0
  %3782 = vmatpush1.bf16.msra.mxu0 %v3764
  %3783 = vmatprep.subr.bf16.mxu0 0
  %3784 = vmatpush1.bf16.msra.mxu0 %v3765
  %3785 = vmatprep.subr.bf16.mxu0 0
  %3786 = vmatpush1.bf16.msra.mxu0 %v3766
  %3787 = vmatprep.subr.bf16.mxu0 0
  %3788 = vmatpush1.bf16.msra.mxu0 %v3767
  %3789 = vmatprep.subr.bf16.mxu0 0
  %3790 = vmatpush1.bf16.msra.mxu0 %v3768
  %3791 = vmatprep.subr.bf16.mxu0 0
  %3792 = vmatpush1.bf16.msra.mxu0 %v3769
  %3793 = vmatprep.subr.bf16.mxu0 0
  %3794 = vmatpush1.bf16.msra.mxu0 %v3770
  %3795 = vmatprep.subr.bf16.mxu0 0
  %3796 = vmatpush1.bf16.msra.mxu0 0
  %3797 = vmatprep.subr.bf16.mxu0 0
  %3798 = vmatpush1.bf16.msra.mxu0 0
  %3799 = vmatprep.subr.bf16.mxu0 0
  %3800 = vmatpush1.bf16.msra.mxu0 0
  %3801 = vmatprep.subr.bf16.mxu0 0
  %3802 = vmatpush1.bf16.msra.mxu0 0
  %3803 = vmatprep.subr.bf16.mxu0 0
  %3804 = vmatpush1.bf16.msra.mxu0 0
  %3805 = vmatprep.subr.bf16.mxu0 0
  %3806 = vmatpush1.bf16.msra.mxu0 0
  %3807 = vmatprep.subr.bf16.mxu0 0
  %3808 = vmatpush1.bf16.msra.mxu0 0
  %3809 = vmatprep.subr.bf16.mxu0 0
  %3810 = vmatpush1.bf16.msra.mxu0 0
  %3811 = vmatprep.mubr.bf16.mxu0 0
  %3812 = vmatmul.mubr.bf16.gmra.mrb[0].mxu0 %v3462
  %v3813 = vpop.f32.mrb[0].mxu0
  %v3814 = vadd.f32 %v3729, %v3813
  %v3815 = vpop.f32.mrb[0].mxu0
  %v3816 = vpop.f32.mrb[0].mxu0
  %v3817 = vadd.f32 %v3729, %v3816
  %v3818 = vpop.f32.mrb[0].mxu0
  %3819 = vmatprep.mubr.bf16.mxu0 0
  %3820 = vmatmul.mubr.bf16.gmra.mrb[0].mxu0 %v3463
  %v3821 = vpop.f32.mrb[0].mxu0
  %v3822 = vadd.f32 %v3729, %v3821
  %v3823 = vpop.f32.mrb[0].mxu0
  %v3824 = vpop.f32.mrb[0].mxu0
  %v3825 = vadd.f32 %v3729, %v3824
  %v3826 = vpop.f32.mrb[0].mxu0
  %3827 = vdwg.mxu0
  %v3828 = vxor.u32 %v3692, 2147483648
  %v3829 = vxor.u32 %v3695, 2147483648
  %v3830 = vxor.u32 %v3700, 2147483648
  %v3831 = vxor.u32 %v3703, 2147483648
  %v3832 = vmul.f32 %v3828, 1.442695
  %v3833 = vpow.pop %v3832
  %v3834 = vmul.f32 %v3829, 1.442695
  %v3835 = vpow.pop %v3834
  %v3836 = vmul.f32 %v3830, 1.442695
  %v3837 = vpow.pop %v3836
  %v3838 = vmul.f32 %v3831, 1.442695
  %v3839 = vpow.pop %v3838
  %v3840 = vadd.f32 %v3833, 1.0
  %v3841 = vadd.f32 %v3835, 1.0
  %v3842 = vadd.f32 %v3837, 1.0
  %v3843 = vadd.f32 %v3839, 1.0
  %v3844 = vrcp.pop %v3840
  %v3845 = vmul.f32 1.0, %v3844
  %v3846 = vrcp.pop %v3841
  %v3847 = vmul.f32 1.0, %v3846
  %v3848 = vrcp.pop %v3842
  %v3849 = vmul.f32 1.0, %v3848
  %v3850 = vrcp.pop %v3843
  %v3851 = vmul.f32 1.0, %v3850
  %v3852 = vadd.f32 %v3570, %v3845
  %v3853 = vadd.f32 %v3573, %v3847
  %v3854 = vadd.f32 %v3578, %v3849
  %v3855 = vadd.f32 %v3581, %v3851
  %v3856 = vadd.f32 %v3852, %v3814
  %v3857 = vadd.f32 %v3853, %v3817
  %v3858 = vadd.f32 %v3854, %v3822
  %v3859 = vadd.f32 %v3855, %v3825
  %v3860 = vmax.f32 %v3856, 0.0
  %v3861 = vmax.f32 %v3857, 0.0
  %v3862 = vmax.f32 %v3858, 0.0
  %v3863 = vmax.f32 %v3859, 0.0
  %v3864 = vpack.c.bf16 %v3861, %v3860
  %v3865 = vpack.c.bf16 %v3863, %v3862
  %v3866 = vld [vmem:[%s18] sm:$0xf]
  %v3867 = vld [vmem:[%s18 + $0x4] sm:$0xf]
  %v3868 = vld [vmem:[%s18 + $0x8] sm:$0xf]
  %v3869 = vld [vmem:[%s18 + $0xc] sm:$0xf]
  %v3870 = vld [vmem:[%s18 + $0x10] sm:$0xf]
  %v3871 = vld [vmem:[%s18 + $0x14] sm:$0xf]
  %v3872 = vld [vmem:[%s18 + $0x18] sm:$0xf]
  %v3873 = vld [vmem:[%s18 + $0x1c] sm:$0xf]
  %v3874 = vld [vmem:[#allocation2] sm:$0x1]
  %v3876 = vlaneseq
  %v3877 = vshrl.u32 %v3876, 7
  %v3878 = vsub.s32 0, %v3877
  %v3879 = vrot.slane %v3874, %v3878
  %v3889 = vunpack.c.l.b16 %v3866
  %v3890 = vunpack.c.l.b16 %v3867
  %v3891 = vunpack.c.l.b16 %v3868
  %v3892 = vunpack.c.l.b16 %v3869
  %v3893 = vunpack.c.l.b16 %v3870
  %v3894 = vunpack.c.l.b16 %v3871
  %v3895 = vunpack.c.l.b16 %v3872
  %v3896 = vunpack.c.l.b16 %v3873
  %v3897 = vpack.c.b16 %v3890, %v3889
  %v3898 = vpack.c.b16 %v3892, %v3891
  %v3899 = vpack.c.b16 %v3894, %v3893
  %v3900 = vpack.c.b16 %v3896, %v3895
  %v3906 = vsel %vm1004, %v3864, 0
  %v3909 = vsel %vm1004, %v3865, 0
  %3911 = vmatprep.subr.bf16.mxu0 0
  %3912 = vmatpush1.bf16.msra.mxu0 %v3897
  %3913 = vmatprep.subr.bf16.mxu0 0
  %3914 = vmatpush1.bf16.msra.mxu0 %v3898
  %3915 = vmatprep.subr.bf16.mxu0 0
  %3916 = vmatpush1.bf16.msra.mxu0 %v3899
  %3917 = vmatprep.subr.bf16.mxu0 0
  %3918 = vmatpush1.bf16.msra.mxu0 %v3900
  %3919 = vmatprep.subr.bf16.mxu0 0
  %3920 = vmatpush1.bf16.msra.mxu0 0
  %3921 = vmatprep.subr.bf16.mxu0 0
  %3922 = vmatpush1.bf16.msra.mxu0 0
  %3923 = vmatprep.subr.bf16.mxu0 0
  %3924 = vmatpush1.bf16.msra.mxu0 0
  %3925 = vmatprep.subr.bf16.mxu0 0
  %3926 = vmatpush1.bf16.msra.mxu0 0
  %3927 = vmatprep.subr.bf16.mxu0 0
  %3928 = vmatpush1.bf16.msra.mxu0 0
  %3929 = vmatprep.subr.bf16.mxu0 0
  %3930 = vmatpush1.bf16.msra.mxu0 0
  %3931 = vmatprep.subr.bf16.mxu0 0
  %3932 = vmatpush1.bf16.msra.mxu0 0
  %3933 = vmatprep.subr.bf16.mxu0 0
  %3934 = vmatpush1.bf16.msra.mxu0 0
  %3935 = vmatprep.subr.bf16.mxu0 0
  %3936 = vmatpush1.bf16.msra.mxu0 0
  %3937 = vmatprep.subr.bf16.mxu0 0
  %3938 = vmatpush1.bf16.msra.mxu0 0
  %3939 = vmatprep.subr.bf16.mxu0 0
  %3940 = vmatpush1.bf16.msra.mxu0 0
  %3941 = vmatprep.subr.bf16.mxu0 0
  %3942 = vmatpush1.bf16.msra.mxu0 0
  %3943 = vmatprep.mubr.bf16.mxu0 0
  %3944 = vmatmul.mubr.bf16.gmra.mrb[0].mxu0 %v3906
  %v3945 = vpop.f32.mrb[0].mxu0
  %v3946 = vadd.f32 %v3879, %v3945
  %v3947 = vpop.f32.mrb[0].mxu0
  %v3948 = vpop.f32.mrb[0].mxu0
  %v3949 = vadd.f32 %v3879, %v3948
  %v3950 = vpop.f32.mrb[0].mxu0
  %3951 = vmatprep.mubr.bf16.mxu0 0
  %3952 = vmatmul.mubr.bf16.gmra.mrb[0].mxu0 %v3909
  %v3953 = vpop.f32.mrb[0].mxu0
  %v3954 = vadd.f32 %v3879, %v3953
  %v3955 = vpop.f32.mrb[0].mxu0
  %v3956 = vpop.f32.mrb[0].mxu0
  %v3957 = vadd.f32 %v3879, %v3956
  %v3958 = vpop.f32.mrb[0].mxu0
  %3959 = vdwg.mxu0
  %vm3960 = vcmask 7168
  %3961 = vst.msk [vmem:[%s20] sm:$0xff] %vm3960, %v3946
  %3962 = vst.msk [vmem:[%s20 + $0x8] sm:$0xff] %vm3960, %v3949
  %3963 = vst.msk [vmem:[%s20 + $0x10] sm:$0xff] %vm3960, %v3954
  %3964 = vst.msk [vmem:[%s20 + $0x18] sm:$0xff] %vm3960, %v3957
  // Predicated region
  $region82: #{stgcn_forward.1} parent=0 // pred_check
    _
  $region83: #{stgcn_forward.1} parent=0 // pred_check_branch
    %3966 = sbr.rel (0) target = $region85
  $region84: #{stgcn_forward.1} parent=0 // pred_region
    _
  $region85: #{stgcn_forward.1} parent=0 // pred_fallthru
    _
  // Predicated region
  $region86: #{stgcn_forward.1} parent=0 // pred_check
    _
  $region87: #{stgcn_forward.1} parent=0 // pred_check_branch
    %3968 = sbr.rel (0) target = $region89
  $region88: #{stgcn_forward.1} parent=0 // pred_region
    _
  $region89: #{stgcn_forward.1} parent=0 // pred_fallthru
    _

</llo_original>
